<compile_context>
chip_gen: v7x
topology: tpu7x:2x2x1
jax: 0.10.0
libtpu: 0.0.40
codegen_flags: <defaults>
</compile_context>

<pallas_src>
import math
from functools import partial

import jax
import jax.numpy as jnp
from jax.experimental import pallas as pl
from jax.experimental.pallas import tpu as pltpu

_MXU_DTYPE = jnp.bfloat16            # matmul input dtype (f32 accumulation)


# --------------------------- hardware-aware budgets ---------------------------

def _tpu_vmem_capacity():
    try:
        return int(pltpu.get_tpu_info().vmem_capacity_bytes)
    except Exception:
        return 64 * 1024 * 1024       # conservative fallback (v7x per-TC VMEM)


def _tpu_cores_per_chip():
    try:
        d = jax.devices()[0]
        n = getattr(d, "num_cores", None)
        if n:
            return int(n)
        kind = str(getattr(d, "device_kind", "")).lower()
        if any(t in kind for t in ("v4", "v5p", "v7")):
            return 2
    except Exception:
        pass
    return 1


_VMEM_CAP = _tpu_vmem_capacity()
_VMEM_BUDGET = int(_VMEM_CAP * 0.30)   # activation-tile budget used for tiling
_VMEM_LIMIT = int(_VMEM_CAP * 0.75)    # scoped limit handed to Mosaic
_CORES = _tpu_cores_per_chip()


def _cparams(sem):
    return pltpu.CompilerParams(dimension_semantics=sem,
                                vmem_limit_bytes=_VMEM_LIMIT)


# ------------------------------ small helpers --------------------------------

def _round_up(n, m):
    return ((n + m - 1) // m) * m


def _next_pow2(n):
    return 1 << max(n - 1, 1).bit_length() if n > 1 else 1


def _pick_row_tile(n_rows, row_io_bytes, row_tmp_bytes=0, const_bytes=0,
                   max_tile=1024):
    """Largest power-of-two row tile (>=8) such that double-buffered I/O tiles
    plus f32 intermediates plus resident weights fit the VMEM budget.  On
    2-TensorCore parts keep >=2 grid steps, but never shrink below 256 rows."""
    tr = max_tile
    while tr > 8 and (2 * tr * row_io_bytes + tr * row_tmp_bytes
                      + const_bytes) > _VMEM_BUDGET:
        tr //= 2
    tr = min(tr, max(8, _next_pow2(n_rows)))       # don't vastly over-pad tiny N
    if _CORES >= 2:
        while tr > 256 and _round_up(n_rows, tr) // tr < 2:
            tr //= 2
    return tr


def _pick_seq_tile(s, pref=256):
    for t in (pref, 128, 64, 32, 16, 8):
        if s % t == 0:
            return t
    return s                                        # full axis (allowed)


def _pad_rows(x2d, n_pad):
    n = x2d.shape[0]
    return x2d if n_pad == n else jnp.pad(x2d, ((0, n_pad - n), (0, 0)))


# ----------------------------- in-kernel helpers ------------------------------

def _layernorm(x, gamma, beta, eps=1e-5):
    mean = jnp.mean(x, axis=-1, keepdims=True)
    var = jnp.mean((x - mean) ** 2, axis=-1, keepdims=True)
    return (x - mean) * jax.lax.rsqrt(var + eps) * gamma + beta


def _gelu(x):
    # exact GELU (erf), matches torch.nn.GELU() default
    return 0.5 * x * (1.0 + jax.lax.erf(x * (1.0 / math.sqrt(2.0))))


def _mm(a, b):
    # MXU matmul: bf16 inputs, f32 accumulation.
    return jnp.dot(a.astype(_MXU_DTYPE), b.astype(_MXU_DTYPE),
                   preferred_element_type=jnp.float32)


# ------------------------------ FeedForward kernel ----------------------------
# out = x + scale * (GELU(LN(x) @ W1 + b1) @ W2 + b2)   [optionally + final LN]

def ffn_kernel(x_ref, g_ref, b_ref, w1_ref, b1_ref, w2_ref, b2_ref, *rest,
               scale, fuse_out_ln):
    x = x_ref[...]
    h = _layernorm(x, g_ref[...], b_ref[...])
    h = _gelu(_mm(h, w1_ref[...]) + b1_ref[...])
    h = _mm(h, w2_ref[...]) + b2_ref[...]
    y = scale * h + x
    if fuse_out_ln:
        og_ref, ob_ref, o_ref = rest
        y = _layernorm(y, og_ref[...], ob_ref[...])   # fused ConformerBlock LN
    else:
        (o_ref,) = rest
    o_ref[...] = y.astype(o_ref.dtype)


def ffn_residual(x2d, p, scale, out_ln=None):
    N, D = x2d.shape
    F = p["w1"].shape[1]
    const_bytes = 2 * D * F * 2 + 4 * (2 * F + 6 * D)       # bf16 weights + vectors
    TR = _pick_row_tile(N, row_io_bytes=8 * D, row_tmp_bytes=4 * F + 4 * D,
                        const_bytes=const_bytes)
    N_pad = _round_up(N, TR)
    xp = _pad_rows(x2d, N_pad)

    row_spec = pl.BlockSpec((TR, D), lambda i: (i, 0))
    const = lambda shape: pl.BlockSpec(shape, lambda i: (0, 0))

    in_specs = [row_spec,
                const((1, D)), const((1, D)),
                const((D, F)), const((1, F)),
                const((F, D)), const((1, D))]
    args = [xp, p["ln_g"], p["ln_b"], p["w1"], p["b1"], p["w2"], p["b2"]]
    if out_ln is not None:
        in_specs += [const((1, D)), const((1, D))]
        args += [out_ln["g"], out_ln["b"]]

    out = pl.pallas_call(
        partial(ffn_kernel, scale=scale, fuse_out_ln=out_ln is not None),
        out_shape=jax.ShapeDtypeStruct((N_pad, D), x2d.dtype),
        grid=(N_pad // TR,),
        in_specs=in_specs,
        out_specs=row_spec,
        input_output_aliases={0: 0},
        compiler_params=_cparams(("parallel",)),
    )(*args)
    return out if N_pad == N else out[:N]


# --------------------------- MHSA module kernels -------------------------------
# module(x) = x + Wout( softmax((LN(x)+pe)Wq . Kᵀ / sqrt(dh)) V ) + bout

def qkv_proj_kernel(x_ref, g_ref, b_ref, pe_ref, wqkv_ref, bqkv_ref, qkv_ref):
    h = _layernorm(x_ref[0], g_ref[...], b_ref[...]) + pe_ref[...]
    qkv_ref[0] = (_mm(h, wqkv_ref[...]) + bqkv_ref[...]).astype(qkv_ref.dtype)


def flash_mhsa_kernel(x_ref, q_ref, k_ref, v_ref, wout_ref, bout_ref, o_ref,
                      m_sc, l_sc, acc_sc, o_sc, *, num_heads, dim_heads, sm_scale):
    ki = pl.program_id(2)

    @pl.when(ki == 0)
    def _():
        m_sc[...] = jnp.full_like(m_sc, -jnp.inf)
        l_sc[...] = jnp.zeros_like(l_sc)
        acc_sc[...] = jnp.zeros_like(acc_sc)

    # TODO(synk): heads use a static (unrolled) loop with static 32-lane ref
    #   windows; a lax.fori_loop would bound vreg live ranges further but needs
    #   dynamic lane-offset slicing, which lowers poorly on the lane dim.
    for hh in range(num_heads):
        lo = hh * dim_heads
        qh = q_ref[0, :, lo:lo + dim_heads]            # (TQ, dh) bf16, from VMEM ref
        kh = k_ref[0, :, lo:lo + dim_heads]            # (TK, dh)
        vh = v_ref[0, :, lo:lo + dim_heads]            # (TK, dh)
        # q @ kᵀ via dot_general dimension numbers (no XLU transpose).
        s = jax.lax.dot_general(qh, kh, (((1,), (1,)), ((), ())),
                                preferred_element_type=jnp.float32) * sm_scale
        m_prev = m_sc[hh]                              # (TQ, 1)
        m_new = jnp.maximum(m_prev, jnp.max(s, axis=-1, keepdims=True))
        alpha = jnp.exp(m_prev - m_new)
        p = jnp.exp(s - m_new)
        l_sc[hh] = alpha * l_sc[hh] + jnp.sum(p, axis=-1, keepdims=True)
        acc_sc[hh] = alpha * acc_sc[hh] + jnp.dot(
            p.astype(_MXU_DTYPE), vh, preferred_element_type=jnp.float32)
        m_sc[hh] = m_new

    @pl.when(ki == pl.num_programs(2) - 1)
    def _():
        # Assemble (TQ, H*dh) once -> a single K=H*dh output-projection matmul.
        for hh in range(num_heads):
            lo = hh * dim_heads
            inv = pl.reciprocal(l_sc[hh], approx=True)
            o_sc[:, lo:lo + dim_heads] = acc_sc[hh] * inv
        out = x_ref[0] + bout_ref[...] + _mm(o_sc[...], wout_ref[...])
        o_ref[0] = out.astype(o_ref.dtype)


def mhsa_residual(x, p, pe, num_heads, dim_heads):
    B, S, D = x.shape
    di = num_heads * dim_heads
    TS = _pick_seq_tile(S)           # projection row tile
    TQ = _pick_seq_tile(S)           # query tile
    TK = _pick_seq_tile(S)           # kv tile

    cst2 = lambda shape: pl.BlockSpec(shape, lambda b, i: (0,) * len(shape))
    qkv = pl.pallas_call(
        qkv_proj_kernel,
        out_shape=jax.ShapeDtypeStruct((B, S, 3 * di), _MXU_DTYPE),
        grid=(B, S // TS),
        in_specs=[
            pl.BlockSpec((1, TS, D), lambda b, i: (b, i, 0)),
            cst2((1, D)), cst2((1, D)),
            pl.BlockSpec((TS, D), lambda b, i: (i, 0)),
            cst2((D, 3 * di)), cst2((1, 3 * di)),
        ],
        out_specs=pl.BlockSpec((1, TS, 3 * di), lambda b, i: (b, i, 0)),
        compiler_params=_cparams(("parallel", "parallel")),
    )(x, p["ln_g"], p["ln_b"], pe, p["w_qkv"], p["b_qkv"])

    cst3 = lambda shape: pl.BlockSpec(shape, lambda b, qi, ki: (0,) * len(shape))
    out = pl.pallas_call(
        partial(flash_mhsa_kernel, num_heads=num_heads, dim_heads=dim_heads,
                sm_scale=dim_heads ** (-0.5)),
        out_shape=jax.ShapeDtypeStruct((B, S, D), x.dtype),
        grid=(B, S // TQ, S // TK),
        in_specs=[
            pl.BlockSpec((1, TQ, D), lambda b, qi, ki: (b, qi, 0)),    # residual x
            pl.BlockSpec((1, TQ, di), lambda b, qi, ki: (b, qi, 0)),   # q chunk
            pl.BlockSpec((1, TK, di), lambda b, qi, ki: (b, ki, 1)),   # k chunk
            pl.BlockSpec((1, TK, di), lambda b, qi, ki: (b, ki, 2)),   # v chunk
            cst3((di, D)), cst3((1, D)),
        ],
        out_specs=pl.BlockSpec((1, TQ, D), lambda b, qi, ki: (b, qi, 0)),
        scratch_shapes=[
            pltpu.VMEM((num_heads, TQ, 1), jnp.float32),          # running max
            pltpu.VMEM((num_heads, TQ, 1), jnp.float32),          # running denom
            pltpu.VMEM((num_heads, TQ, dim_heads), jnp.float32),  # per-head acc
            pltpu.VMEM((TQ, di), jnp.float32),                    # assembled heads
        ],
        input_output_aliases={0: 0},
        compiler_params=_cparams(("parallel", "parallel", "arbitrary")),
    )(x, qkv, qkv, qkv, p["w_out"], p["b_out"])
    return out


# ------------------------------ ConvModule kernels -----------------------------
# LN -> 1x1 conv (matmul) -> GELU -> depthwise 1x1 (per-channel affine)
#   -> BatchNorm (batch stats, two tiled passes) -> GELU -> 1x1 conv -> + x

def _conv_pre(x, lng, lnb, w1, b1, dww, dwb):
    h = _layernorm(x, lng, lnb)
    h = _gelu(_mm(h, w1) + b1)
    return h * dww + dwb                 # depthwise k=1 conv == per-channel affine


def conv_stats_kernel(x_ref, lng_ref, lnb_ref, w1_ref, b1_ref, dww_ref, dwb_ref,
                      sum_ref, ssq_ref, *, n_valid, tr, steps, mask_rows):
    s = pl.program_id(0)
    i = pl.program_id(1)

    @pl.when(i == 0)
    def _():
        sum_ref[...] = jnp.zeros_like(sum_ref)
        ssq_ref[...] = jnp.zeros_like(ssq_ref)

    h = _conv_pre(x_ref[...], lng_ref[...], lnb_ref[...],
                  w1_ref[...], b1_ref[...], dww_ref[...], dwb_ref[...])
    if mask_rows:                        # keep padded rows out of the batch stats
        row0 = (s * steps + i) * tr
        rows = row0 + jax.lax.broadcasted_iota(jnp.int32, h.shape, 0)
        h = jnp.where(rows < n_valid, h, 0.0)
    sum_ref[...] += jnp.sum(h, axis=0, keepdims=True)[None]
    ssq_ref[...] += jnp.sum(h * h, axis=0, keepdims=True)[None]


def conv_apply_kernel(x_ref, lng_ref, lnb_ref, w1_ref, b1_ref, dww_ref, dwb_ref,
                      sum_ref, ssq_ref, bng_ref, bnb_ref, w2_ref, b2_ref, o_ref,
                      *, n_valid):
    x = x_ref[...]
    h = _conv_pre(x, lng_ref[...], lnb_ref[...],
                  w1_ref[...], b1_ref[...], dww_ref[...], dwb_ref[...])
    inv_n = 1.0 / float(n_valid)
    mean = sum_ref[...] * inv_n                                   # biased stats
    var = jnp.maximum(ssq_ref[...] * inv_n - mean * mean, 0.0)
    h = (h - mean) * jax.lax.rsqrt(var + 1e-5) * bng_ref[...] + bnb_ref[...]
    h = _gelu(h)
    h = _mm(h, w2_ref[...]) + b2_ref[...]
    o_ref[...] = (h + x).astype(o_ref.dtype)                      # residual, scale 1


def conv_residual(x2d, p):
    N, D = x2d.shape
    C = p["w1"].shape[1]
    const_bytes = 2 * D * C * 2 + 4 * (6 * C + 4 * D)
    TR = _pick_row_tile(N, row_io_bytes=8 * D, row_tmp_bytes=4 * C + 4 * D,
                        const_bytes=const_bytes)
    tiles = _round_up(N, TR) // TR
    n_split = 2 if (_CORES >= 2 and tiles >= 2) else 1            # v7x: use both TCs
    N_pad = _round_up(N, TR * n_split)
    xp = _pad_rows(x2d, N_pad)
    steps = N_pad // (TR * n_split)

    const1 = lambda shape: pl.BlockSpec(shape, lambda i: (0, 0))
    const2 = lambda shape: pl.BlockSpec(shape, lambda s, i: (0, 0))

    # pass 1: per-channel sum / sum-of-squares, row grid split across cores
    stats_specs = [pl.BlockSpec((TR, D), lambda s, i: (s * steps + i, 0)),
                   const2((1, D)), const2((1, D)),
                   const2((D, C)), const2((1, C)), const2((1, C)), const2((1, C))]
    pre_args = [xp, p["ln_g"], p["ln_b"], p["w1"], p["b1"], p["dw_w"], p["dw_b"]]
    part_sum, part_ssq = pl.pallas_call(
        partial(conv_stats_kernel, n_valid=N, tr=TR, steps=steps,
                mask_rows=(N_pad != N)),
        out_shape=(jax.ShapeDtypeStruct((n_split, 1, C), jnp.float32),
                   jax.ShapeDtypeStruct((n_split, 1, C), jnp.float32)),
        grid=(n_split, steps),
        in_specs=stats_specs,
        out_specs=(pl.BlockSpec((1, 1, C), lambda s, i: (s, 0, 0)),
                   pl.BlockSpec((1, 1, C), lambda s, i: (s, 0, 0))),
        compiler_params=_cparams(("parallel", "arbitrary")),
    )(*pre_args)
    sums = jnp.sum(part_sum, axis=0)                              # (1, C)
    ssqs = jnp.sum(part_ssq, axis=0)

    # pass 2: recompute, normalize, project back, residual (row-tiled, pipelined)
    apply_specs = [pl.BlockSpec((TR, D), lambda i: (i, 0)),
                   const1((1, D)), const1((1, D)),
                   const1((D, C)), const1((1, C)), const1((1, C)), const1((1, C)),
                   const1((1, C)), const1((1, C)), const1((1, C)), const1((1, C)),
                   const1((C, D)), const1((1, D))]
    out = pl.pallas_call(
        partial(conv_apply_kernel, n_valid=N),
        out_shape=jax.ShapeDtypeStruct((N_pad, D), x2d.dtype),
        grid=(N_pad // TR,),
        in_specs=apply_specs,
        out_specs=pl.BlockSpec((TR, D), lambda i: (i, 0)),
        input_output_aliases={0: 0},
        compiler_params=_cparams(("parallel",)),
    )(*pre_args, sums, ssqs, p["bn_g"], p["bn_b"], p["w2"], p["b2"])
    return out if N_pad == N else out[:N]


# --------------------------- parameter construction ----------------------------

def sinusoidal_pe(seq_len, dim):
    pos = jnp.arange(seq_len, dtype=jnp.float32)[:, None]
    div = jnp.exp(jnp.arange(0, dim, 2, dtype=jnp.float32)
                  * (-math.log(10000.0) / dim))
    pe = jnp.zeros((seq_len, dim), dtype=jnp.float32)
    pe = pe.at[:, 0::2].set(jnp.sin(pos * div))
    pe = pe.at[:, 1::2].set(jnp.cos(pos * div))
    return pe


def init_params(key, D, F, C, H, DH):
    di = H * DH
    ks = iter(jax.random.split(key, 40))
    n = lambda shape, s=0.02: s * jax.random.normal(next(ks), shape, jnp.float32)
    w = lambda shape: n(shape).astype(_MXU_DTYPE)          # matmul weights in bf16
    ln = lambda: {"ln_g": 1.0 + n((1, D), 0.05), "ln_b": n((1, D), 0.05)}

    def ffn_p():
        p = ln()
        p.update(w1=w((D, F)), b1=n((1, F)), w2=w((F, D)), b2=n((1, D)))
        return p

    mhsa_p = ln()
    mhsa_p.update(w_qkv=w((D, 3 * di)), b_qkv=n((1, 3 * di)),
                  w_out=w((di, D)), b_out=n((1, D)))

    conv_p = ln()
    conv_p.update(w1=w((D, C)), b1=n((1, C)),
                  dw_w=1.0 + n((1, C), 0.05), dw_b=n((1, C), 0.05),
                  bn_g=1.0 + n((1, C), 0.05), bn_b=n((1, C), 0.05),
                  w2=w((C, D)), b2=n((1, D)))

    out_ln = {"g": 1.0 + n((1, D), 0.05), "b": n((1, D), 0.05)}
    return {"ffn1": ffn_p(), "mhsa": mhsa_p, "conv": conv_p,
            "ffn2": ffn_p(), "ln_out": out_ln}


# ------------------------------- full block ------------------------------------

@partial(jax.jit, static_argnums=(3, 4))
def conformer_block(x, params, pe, num_heads, dim_heads):
    B, S, D = x.shape
    x2 = ffn_residual(x.reshape(B * S, D), params["ffn1"], 0.5)   # x + 0.5*FFN
    x3 = mhsa_residual(x2.reshape(B, S, D), params["mhsa"], pe,
                       num_heads, dim_heads)                      # x + MHSA module
    x2 = conv_residual(x3.reshape(B * S, D), params["conv"])      # x + ConvModule
    x2 = ffn_residual(x2, params["ffn2"], 0.5,
                      out_ln=params["ln_out"])                    # x + 0.5*FFN + final LN
    return x2.reshape(B, S, D)


# ----------------------------------- main ---------------------------------------

if __name__ == "__main__":
    B, S, D = 2, 8, 128          # batch, seq_len, dim_model
    F, C = 256, 256              # dim_ffn, dim_conv
    H, DH = 4, 32                # num_heads, dim_heads (H*DH == D)

    key = jax.random.PRNGKey(0)
    kx, kp = jax.random.split(key)
    x = jax.random.normal(kx, (B, S, D), jnp.float32)
    params = init_params(kp, D, F, C, H, DH)
    pe = sinusoidal_pe(S, D)

    y = conformer_block(x, params, pe, H, DH)
    y = jax.block_until_ready(y)
    assert y.shape == (B, S, D) and y.dtype == jnp.float32
    assert bool(jnp.all(jnp.isfinite(y)))
    print("KERNEL_OK")
</pallas_src>

<mosaic_0001>
module attributes {stable_mosaic.version = 11 : i64} {
  func.func @conv_stats_kernel(%arg0: i32, %arg1: i32, %arg2: memref<16x128xf32, #tpu.memory_space<vmem>>, %arg3: memref<1x128xf32, #tpu.memory_space<vmem>>, %arg4: memref<1x128xf32, #tpu.memory_space<vmem>>, %arg5: memref<128x256xbf16, #tpu.memory_space<vmem>>, %arg6: memref<1x256xf32, #tpu.memory_space<vmem>>, %arg7: memref<1x256xf32, #tpu.memory_space<vmem>>, %arg8: memref<1x256xf32, #tpu.memory_space<vmem>>, %arg9: memref<1x1x256xf32, #tpu.memory_space<vmem>>, %arg10: memref<1x1x256xf32, #tpu.memory_space<vmem>>) attributes {dimension_semantics = [#tpu.dimension_semantics<parallel>, #tpu.dimension_semantics<arbitrary>], iteration_bounds = array<i64: 1, 1>, scalar_prefetch = 0 : i64, scratch_operands = 0 : i64, tpu.core_type = #tpu.core_type<tc>, window_params = [{transform_indices = @transform_0, window_bounds = array<i64: 16, 128>}, {pipeline_mode = #tpu.pipeline_mode<synchronous>, transform_indices = @transform_1, window_bounds = array<i64: 1, 128>}, {pipeline_mode = #tpu.pipeline_mode<synchronous>, transform_indices = @transform_2, window_bounds = array<i64: 1, 128>}, {pipeline_mode = #tpu.pipeline_mode<synchronous>, transform_indices = @transform_3, window_bounds = array<i64: 128, 256>}, {pipeline_mode = #tpu.pipeline_mode<synchronous>, transform_indices = @transform_4, window_bounds = array<i64: 1, 256>}, {pipeline_mode = #tpu.pipeline_mode<synchronous>, transform_indices = @transform_5, window_bounds = array<i64: 1, 256>}, {pipeline_mode = #tpu.pipeline_mode<synchronous>, transform_indices = @transform_6, window_bounds = array<i64: 1, 256>}, {transform_indices = @transform_7, window_bounds = array<i64: 1, 1, 256>}, {transform_indices = @transform_8, window_bounds = array<i64: 1, 1, 256>}]} {
    %c0_i32 = arith.constant 0 : i32
    %0 = arith.cmpi eq, %arg1, %c0_i32 : i32
    %1 = arith.extui %0 : i1 to i32
    %c0_i32_0 = arith.constant 0 : i32
    %2 = arith.cmpi ne, %1, %c0_i32_0 : i32
    scf.if %2 {
      %cst_36 = arith.constant 0.000000e+00 : f32
      %61 = vector.broadcast %cst_36 : f32 to vector<1x1x256xf32>
      %c0_37 = arith.constant 0 : index
      %c0_38 = arith.constant 0 : index
      %c0_39 = arith.constant 0 : index
      %62 = vector.load %arg9[%c0_37, %c0_38, %c0_39] : memref<1x1x256xf32, #tpu.memory_space<vmem>>, vector<1x1x256xf32>
      tpu.vector_store %arg9[%c0_37, %c0_38, %c0_39], %61 {strides = array<i32>} : memref<1x1x256xf32, #tpu.memory_space<vmem>>, vector<1x1x256xf32>,
      %cst_40 = arith.constant 0.000000e+00 : f32
      %63 = vector.broadcast %cst_40 : f32 to vector<1x1x256xf32>
      %c0_41 = arith.constant 0 : index
      %c0_42 = arith.constant 0 : index
      %c0_43 = arith.constant 0 : index
      %64 = vector.load %arg10[%c0_41, %c0_42, %c0_43] : memref<1x1x256xf32, #tpu.memory_space<vmem>>, vector<1x1x256xf32>
      tpu.vector_store %arg10[%c0_41, %c0_42, %c0_43], %63 {strides = array<i32>} : memref<1x1x256xf32, #tpu.memory_space<vmem>>, vector<1x1x256xf32>,
    } else {
    }
    %c0 = arith.constant 0 : index
    %c0_1 = arith.constant 0 : index
    %3 = vector.load %arg2[%c0, %c0_1] : memref<16x128xf32, #tpu.memory_space<vmem>>, vector<16x128xf32>
    %c0_2 = arith.constant 0 : index
    %c0_3 = arith.constant 0 : index
    %4 = vector.load %arg3[%c0_2, %c0_3] : memref<1x128xf32, #tpu.memory_space<vmem>>, vector<1x128xf32>
    %c0_4 = arith.constant 0 : index
    %c0_5 = arith.constant 0 : index
    %5 = vector.load %arg4[%c0_4, %c0_5] : memref<1x128xf32, #tpu.memory_space<vmem>>, vector<1x128xf32>
    %c0_6 = arith.constant 0 : index
    %c0_7 = arith.constant 0 : index
    %6 = vector.load %arg5[%c0_6, %c0_7] : memref<128x256xbf16, #tpu.memory_space<vmem>>, vector<128x256xbf16>
    %c0_8 = arith.constant 0 : index
    %c0_9 = arith.constant 0 : index
    %7 = vector.load %arg6[%c0_8, %c0_9] : memref<1x256xf32, #tpu.memory_space<vmem>>, vector<1x256xf32>
    %c0_10 = arith.constant 0 : index
    %c0_11 = arith.constant 0 : index
    %8 = vector.load %arg7[%c0_10, %c0_11] : memref<1x256xf32, #tpu.memory_space<vmem>>, vector<1x256xf32>
    %c0_12 = arith.constant 0 : index
    %c0_13 = arith.constant 0 : index
    %9 = vector.load %arg8[%c0_12, %c0_13] : memref<1x256xf32, #tpu.memory_space<vmem>>, vector<1x256xf32>
    %cst = arith.constant dense<0.000000e+00> : vector<16xf32>
    %10 = vector.multi_reduction <add>, %3, %cst [1] : vector<16x128xf32> to vector<16xf32>
    %11 = vector.shape_cast %10 : vector<16xf32> to vector<16x1xf32>
    %cst_14 = arith.constant 1.280000e+02 : f32
    %12 = vector.broadcast %cst_14 : f32 to vector<16x1xf32>
    %13 = arith.divf %11, %12 : vector<16x1xf32>
    %14 = vector.broadcast %13 : vector<16x1xf32> to vector<16x128xf32>
    %15 = arith.subf %3, %14 : vector<16x128xf32>
    %16 = arith.mulf %15, %15 : vector<16x128xf32>
    %cst_15 = arith.constant dense<0.000000e+00> : vector<16xf32>
    %17 = vector.multi_reduction <add>, %16, %cst_15 [1] : vector<16x128xf32> to vector<16xf32>
    %18 = vector.shape_cast %17 : vector<16xf32> to vector<16x1xf32>
    %cst_16 = arith.constant 1.280000e+02 : f32
    %19 = vector.broadcast %cst_16 : f32 to vector<16x1xf32>
    %20 = arith.divf %18, %19 : vector<16x1xf32>
    %21 = vector.broadcast %13 : vector<16x1xf32> to vector<16x128xf32>
    %22 = arith.subf %3, %21 : vector<16x128xf32>
    %cst_17 = arith.constant 9.99999974E-6 : f32
    %23 = vector.broadcast %cst_17 : f32 to vector<16x1xf32>
    %24 = arith.addf %20, %23 : vector<16x1xf32>
    %25 = math.rsqrt %24 : vector<16x1xf32>
    %26 = vector.broadcast %25 : vector<16x1xf32> to vector<16x128xf32>
    %27 = arith.mulf %22, %26 : vector<16x128xf32>
    %28 = vector.broadcast %4 : vector<1x128xf32> to vector<16x128xf32>
    %29 = arith.mulf %27, %28 : vector<16x128xf32>
    %30 = vector.broadcast %5 : vector<1x128xf32> to vector<16x128xf32>
    %31 = arith.addf %29, %30 : vector<16x128xf32>
    %32 = arith.truncf %31 : vector<16x128xf32> to vector<16x128xbf16>
    %cst_18 = arith.constant dense<0.000000e+00> : vector<16x256xf32>
    %33 = tpu.matmul %32, %6, %cst_18 {dimension_numbers = #tpu.dot_dimension_numbers<[1], [0], [0], [1], [0, 0, 1, 1], [], []>} : vector<16x128xbf16>, vector<128x256xbf16>, vector<16x256xf32> -> vector<16x256xf32>
    %34 = vector.broadcast %7 : vector<1x256xf32> to vector<16x256xf32>
    %35 = arith.addf %33, %34 : vector<16x256xf32>
    %cst_19 = arith.constant 5.000000e-01 : f32
    %36 = vector.broadcast %cst_19 : f32 to vector<16x256xf32>
    %37 = arith.mulf %36, %35 : vector<16x256xf32>
    %cst_20 = arith.constant 0.707106769 : f32
    %38 = vector.broadcast %cst_20 : f32 to vector<16x256xf32>
    %39 = arith.mulf %35, %38 : vector<16x256xf32>
    %40 = math.erf %39 : vector<16x256xf32>
    %cst_21 = arith.constant 1.000000e+00 : f32
    %41 = vector.broadcast %cst_21 : f32 to vector<16x256xf32>
    %42 = arith.addf %41, %40 : vector<16x256xf32>
    %43 = arith.mulf %37, %42 : vector<16x256xf32>
    %44 = vector.broadcast %8 : vector<1x256xf32> to vector<16x256xf32>
    %45 = arith.mulf %43, %44 : vector<16x256xf32>
    %46 = vector.broadcast %9 : vector<1x256xf32> to vector<16x256xf32>
    %47 = arith.addf %45, %46 : vector<16x256xf32>
    %c0_22 = arith.constant 0 : index
    %c0_23 = arith.constant 0 : index
    %c0_24 = arith.constant 0 : index
    %48 = vector.load %arg9[%c0_22, %c0_23, %c0_24] : memref<1x1x256xf32, #tpu.memory_space<vmem>>, vector<1x1x256xf32>
    %cst_25 = arith.constant dense<0.000000e+00> : vector<256xf32>
    %49 = vector.multi_reduction <add>, %47, %cst_25 [0] : vector<16x256xf32> to vector<256xf32>
    %50 = vector.shape_cast %49 : vector<256xf32> to vector<1x256xf32>
    %51 = vector.shape_cast %50 : vector<1x256xf32> to vector<1x1x256xf32>
    %52 = arith.addf %48, %51 : vector<1x1x256xf32>
    %c0_26 = arith.constant 0 : index
    %c0_27 = arith.constant 0 : index
    %c0_28 = arith.constant 0 : index
    %53 = vector.load %arg9[%c0_26, %c0_27, %c0_28] : memref<1x1x256xf32, #tpu.memory_space<vmem>>, vector<1x1x256xf32>
    tpu.vector_store %arg9[%c0_26, %c0_27, %c0_28], %52 {strides = array<i32>} : memref<1x1x256xf32, #tpu.memory_space<vmem>>, vector<1x1x256xf32>,
    %c0_29 = arith.constant 0 : index
    %c0_30 = arith.constant 0 : index
    %c0_31 = arith.constant 0 : index
    %54 = vector.load %arg10[%c0_29, %c0_30, %c0_31] : memref<1x1x256xf32, #tpu.memory_space<vmem>>, vector<1x1x256xf32>
    %55 = arith.mulf %47, %47 : vector<16x256xf32>
    %cst_32 = arith.constant dense<0.000000e+00> : vector<256xf32>
    %56 = vector.multi_reduction <add>, %55, %cst_32 [0] : vector<16x256xf32> to vector<256xf32>
    %57 = vector.shape_cast %56 : vector<256xf32> to vector<1x256xf32>
    %58 = vector.shape_cast %57 : vector<1x256xf32> to vector<1x1x256xf32>
    %59 = arith.addf %54, %58 : vector<1x1x256xf32>
    %c0_33 = arith.constant 0 : index
    %c0_34 = arith.constant 0 : index
    %c0_35 = arith.constant 0 : index
    %60 = vector.load %arg10[%c0_33, %c0_34, %c0_35] : memref<1x1x256xf32, #tpu.memory_space<vmem>>, vector<1x1x256xf32>
    tpu.vector_store %arg10[%c0_33, %c0_34, %c0_35], %59 {strides = array<i32>} : memref<1x1x256xf32, #tpu.memory_space<vmem>>, vector<1x1x256xf32>,
    return
  }
  func.func @transform_0(%arg0: i32, %arg1: i32) -> (i32, i32) {
    %c1_i32 = arith.constant 1 : i32
    %0 = arith.muli %arg0, %c1_i32 : i32
    %1 = arith.addi %0, %arg1 : i32
    %c0_i32 = arith.constant 0 : i32
    %c0_i32_0 = arith.constant 0 : i32
    return %1, %c0_i32 : i32, i32
  }
  func.func @transform_1(%arg0: i32, %arg1: i32) -> (i32, i32) {
    %c0_i32 = arith.constant 0 : i32
    %c0_i32_0 = arith.constant 0 : i32
    %c0_i32_1 = arith.constant 0 : i32
    return %c0_i32, %c0_i32_0 : i32, i32
  }
  func.func @transform_2(%arg0: i32, %arg1: i32) -> (i32, i32) {
    %c0_i32 = arith.constant 0 : i32
    %c0_i32_0 = arith.constant 0 : i32
    %c0_i32_1 = arith.constant 0 : i32
    return %c0_i32, %c0_i32_0 : i32, i32
  }
  func.func @transform_3(%arg0: i32, %arg1: i32) -> (i32, i32) {
    %c0_i32 = arith.constant 0 : i32
    %c0_i32_0 = arith.constant 0 : i32
    %c0_i32_1 = arith.constant 0 : i32
    return %c0_i32, %c0_i32_0 : i32, i32
  }
  func.func @transform_4(%arg0: i32, %arg1: i32) -> (i32, i32) {
    %c0_i32 = arith.constant 0 : i32
    %c0_i32_0 = arith.constant 0 : i32
    %c0_i32_1 = arith.constant 0 : i32
    return %c0_i32, %c0_i32_0 : i32, i32
  }
  func.func @transform_5(%arg0: i32, %arg1: i32) -> (i32, i32) {
    %c0_i32 = arith.constant 0 : i32
    %c0_i32_0 = arith.constant 0 : i32
    %c0_i32_1 = arith.constant 0 : i32
    return %c0_i32, %c0_i32_0 : i32, i32
  }
  func.func @transform_6(%arg0: i32, %arg1: i32) -> (i32, i32) {
    %c0_i32 = arith.constant 0 : i32
    %c0_i32_0 = arith.constant 0 : i32
    %c0_i32_1 = arith.constant 0 : i32
    return %c0_i32, %c0_i32_0 : i32, i32
  }
  func.func @transform_7(%arg0: i32, %arg1: i32) -> (i32, i32, i32) {
    %c0_i32 = arith.constant 0 : i32
    %c0_i32_0 = arith.constant 0 : i32
    %c0_i32_1 = arith.constant 0 : i32
    return %arg0, %c0_i32, %c0_i32_0 : i32, i32, i32
  }
  func.func @transform_8(%arg0: i32, %arg1: i32) -> (i32, i32, i32) {
    %c0_i32 = arith.constant 0 : i32
    %c0_i32_0 = arith.constant 0 : i32
    %c0_i32_1 = arith.constant 0 : i32
    return %arg0, %c0_i32, %c0_i32_0 : i32, i32, i32
  }
}

module attributes {stable_mosaic.version = 11 : i64} {
  func.func @qkv_proj_kernel(%arg0: i32, %arg1: i32, %arg2: memref<1x8x128xf32, #tpu.memory_space<vmem>>, %arg3: memref<1x128xf32, #tpu.memory_space<vmem>>, %arg4: memref<1x128xf32, #tpu.memory_space<vmem>>, %arg5: memref<8x128xf32, #tpu.memory_space<vmem>>, %arg6: memref<128x384xbf16, #tpu.memory_space<vmem>>, %arg7: memref<1x384xf32, #tpu.memory_space<vmem>>, %arg8: memref<1x8x384xbf16, #tpu.memory_space<vmem>>) attributes {dimension_semantics = [#tpu.dimension_semantics<parallel>, #tpu.dimension_semantics<parallel>], iteration_bounds = array<i64: 2, 1>, scalar_prefetch = 0 : i64, scratch_operands = 0 : i64, tpu.core_type = #tpu.core_type<tc>, window_params = [{transform_indices = @transform_0, window_bounds = array<i64: 1, 8, 128>}, {pipeline_mode = #tpu.pipeline_mode<synchronous>, transform_indices = @transform_1, window_bounds = array<i64: 1, 128>}, {pipeline_mode = #tpu.pipeline_mode<synchronous>, transform_indices = @transform_2, window_bounds = array<i64: 1, 128>}, {transform_indices = @transform_3, window_bounds = array<i64: 8, 128>}, {pipeline_mode = #tpu.pipeline_mode<synchronous>, transform_indices = @transform_4, window_bounds = array<i64: 128, 384>}, {pipeline_mode = #tpu.pipeline_mode<synchronous>, transform_indices = @transform_5, window_bounds = array<i64: 1, 384>}, {transform_indices = @transform_6, window_bounds = array<i64: 1, 8, 384>}]} {
    %c0 = arith.constant 0 : index
    %c0_0 = arith.constant 0 : index
    %c0_1 = arith.constant 0 : index
    %0 = vector.load %arg2[%c0, %c0_0, %c0_1] : memref<1x8x128xf32, #tpu.memory_space<vmem>>, vector<1x8x128xf32>
    %1 = vector.shape_cast %0 : vector<1x8x128xf32> to vector<8x128xf32>
    %c0_2 = arith.constant 0 : index
    %c0_3 = arith.constant 0 : index
    %2 = vector.load %arg3[%c0_2, %c0_3] : memref<1x128xf32, #tpu.memory_space<vmem>>, vector<1x128xf32>
    %c0_4 = arith.constant 0 : index
    %c0_5 = arith.constant 0 : index
    %3 = vector.load %arg4[%c0_4, %c0_5] : memref<1x128xf32, #tpu.memory_space<vmem>>, vector<1x128xf32>
    %cst = arith.constant dense<0.000000e+00> : vector<8xf32>
    %4 = vector.multi_reduction <add>, %1, %cst [1] : vector<8x128xf32> to vector<8xf32>
    %5 = vector.shape_cast %4 : vector<8xf32> to vector<8x1xf32>
    %cst_6 = arith.constant 1.280000e+02 : f32
    %6 = vector.broadcast %cst_6 : f32 to vector<8x1xf32>
    %7 = arith.divf %5, %6 : vector<8x1xf32>
    %8 = vector.broadcast %7 : vector<8x1xf32> to vector<8x128xf32>
    %9 = arith.subf %1, %8 : vector<8x128xf32>
    %10 = arith.mulf %9, %9 : vector<8x128xf32>
    %cst_7 = arith.constant dense<0.000000e+00> : vector<8xf32>
    %11 = vector.multi_reduction <add>, %10, %cst_7 [1] : vector<8x128xf32> to vector<8xf32>
    %12 = vector.shape_cast %11 : vector<8xf32> to vector<8x1xf32>
    %cst_8 = arith.constant 1.280000e+02 : f32
    %13 = vector.broadcast %cst_8 : f32 to vector<8x1xf32>
    %14 = arith.divf %12, %13 : vector<8x1xf32>
    %15 = vector.broadcast %7 : vector<8x1xf32> to vector<8x128xf32>
    %16 = arith.subf %1, %15 : vector<8x128xf32>
    %cst_9 = arith.constant 9.99999974E-6 : f32
    %17 = vector.broadcast %cst_9 : f32 to vector<8x1xf32>
    %18 = arith.addf %14, %17 : vector<8x1xf32>
    %19 = math.rsqrt %18 : vector<8x1xf32>
    %20 = vector.broadcast %19 : vector<8x1xf32> to vector<8x128xf32>
    %21 = arith.mulf %16, %20 : vector<8x128xf32>
    %22 = vector.broadcast %2 : vector<1x128xf32> to vector<8x128xf32>
    %23 = arith.mulf %21, %22 : vector<8x128xf32>
    %24 = vector.broadcast %3 : vector<1x128xf32> to vector<8x128xf32>
    %25 = arith.addf %23, %24 : vector<8x128xf32>
    %c0_10 = arith.constant 0 : index
    %c0_11 = arith.constant 0 : index
    %26 = vector.load %arg5[%c0_10, %c0_11] : memref<8x128xf32, #tpu.memory_space<vmem>>, vector<8x128xf32>
    %27 = arith.addf %25, %26 : vector<8x128xf32>
    %c0_12 = arith.constant 0 : index
    %c0_13 = arith.constant 0 : index
    %28 = vector.load %arg6[%c0_12, %c0_13] : memref<128x384xbf16, #tpu.memory_space<vmem>>, vector<128x384xbf16>
    %29 = arith.truncf %27 : vector<8x128xf32> to vector<8x128xbf16>
    %cst_14 = arith.constant dense<0.000000e+00> : vector<8x384xf32>
    %30 = tpu.matmul %29, %28, %cst_14 {dimension_numbers = #tpu.dot_dimension_numbers<[1], [0], [0], [1], [0, 0, 1, 1], [], []>} : vector<8x128xbf16>, vector<128x384xbf16>, vector<8x384xf32> -> vector<8x384xf32>
    %c0_15 = arith.constant 0 : index
    %c0_16 = arith.constant 0 : index
    %31 = vector.load %arg7[%c0_15, %c0_16] : memref<1x384xf32, #tpu.memory_space<vmem>>, vector<1x384xf32>
    %32 = vector.broadcast %31 : vector<1x384xf32> to vector<8x384xf32>
    %33 = arith.addf %30, %32 : vector<8x384xf32>
    %34 = arith.truncf %33 : vector<8x384xf32> to vector<8x384xbf16>
    %c0_17 = arith.constant 0 : index
    %c0_18 = arith.constant 0 : index
    %c0_19 = arith.constant 0 : index
    %35 = vector.load %arg8[%c0_17, %c0_18, %c0_19] : memref<1x8x384xbf16, #tpu.memory_space<vmem>>, vector<1x8x384xbf16>
    %36 = vector.shape_cast %35 : vector<1x8x384xbf16> to vector<8x384xbf16>
    %37 = vector.shape_cast %34 : vector<8x384xbf16> to vector<1x8x384xbf16>
    tpu.vector_store %arg8[%c0_17, %c0_18, %c0_19], %37 {strides = array<i32>} : memref<1x8x384xbf16, #tpu.memory_space<vmem>>, vector<1x8x384xbf16>,
    return
  }
  func.func @transform_0(%arg0: i32, %arg1: i32) -> (i32, i32, i32) {
    %c0_i32 = arith.constant 0 : i32
    %c0_i32_0 = arith.constant 0 : i32
    return %arg0, %arg1, %c0_i32 : i32, i32, i32
  }
  func.func @transform_1(%arg0: i32, %arg1: i32) -> (i32, i32) {
    %c0_i32 = arith.constant 0 : i32
    %c0_i32_0 = arith.constant 0 : i32
    %c0_i32_1 = arith.constant 0 : i32
    return %c0_i32, %c0_i32_0 : i32, i32
  }
  func.func @transform_2(%arg0: i32, %arg1: i32) -> (i32, i32) {
    %c0_i32 = arith.constant 0 : i32
    %c0_i32_0 = arith.constant 0 : i32
    %c0_i32_1 = arith.constant 0 : i32
    return %c0_i32, %c0_i32_0 : i32, i32
  }
  func.func @transform_3(%arg0: i32, %arg1: i32) -> (i32, i32) {
    %c0_i32 = arith.constant 0 : i32
    %c0_i32_0 = arith.constant 0 : i32
    return %arg1, %c0_i32 : i32, i32
  }
  func.func @transform_4(%arg0: i32, %arg1: i32) -> (i32, i32) {
    %c0_i32 = arith.constant 0 : i32
    %c0_i32_0 = arith.constant 0 : i32
    %c0_i32_1 = arith.constant 0 : i32
    return %c0_i32, %c0_i32_0 : i32, i32
  }
  func.func @transform_5(%arg0: i32, %arg1: i32) -> (i32, i32) {
    %c0_i32 = arith.constant 0 : i32
    %c0_i32_0 = arith.constant 0 : i32
    %c0_i32_1 = arith.constant 0 : i32
    return %c0_i32, %c0_i32_0 : i32, i32
  }
  func.func @transform_6(%arg0: i32, %arg1: i32) -> (i32, i32, i32) {
    %c0_i32 = arith.constant 0 : i32
    %c0_i32_0 = arith.constant 0 : i32
    return %arg0, %arg1, %c0_i32 : i32, i32, i32
  }
}

module attributes {stable_mosaic.version = 11 : i64} {
  func.func @ffn_kernel(%arg0: i32, %arg1: memref<16x128xf32, #tpu.memory_space<vmem>>, %arg2: memref<1x128xf32, #tpu.memory_space<vmem>>, %arg3: memref<1x128xf32, #tpu.memory_space<vmem>>, %arg4: memref<128x256xbf16, #tpu.memory_space<vmem>>, %arg5: memref<1x256xf32, #tpu.memory_space<vmem>>, %arg6: memref<256x128xbf16, #tpu.memory_space<vmem>>, %arg7: memref<1x128xf32, #tpu.memory_space<vmem>>, %arg8: memref<16x128xf32, #tpu.memory_space<vmem>>) attributes {dimension_semantics = [#tpu.dimension_semantics<parallel>], iteration_bounds = array<i64: 1>, scalar_prefetch = 0 : i64, scratch_operands = 0 : i64, tpu.core_type = #tpu.core_type<tc>, window_params = [{transform_indices = @transform_0, window_bounds = array<i64: 16, 128>}, {pipeline_mode = #tpu.pipeline_mode<synchronous>, transform_indices = @transform_1, window_bounds = array<i64: 1, 128>}, {pipeline_mode = #tpu.pipeline_mode<synchronous>, transform_indices = @transform_2, window_bounds = array<i64: 1, 128>}, {pipeline_mode = #tpu.pipeline_mode<synchronous>, transform_indices = @transform_3, window_bounds = array<i64: 128, 256>}, {pipeline_mode = #tpu.pipeline_mode<synchronous>, transform_indices = @transform_4, window_bounds = array<i64: 1, 256>}, {pipeline_mode = #tpu.pipeline_mode<synchronous>, transform_indices = @transform_5, window_bounds = array<i64: 256, 128>}, {pipeline_mode = #tpu.pipeline_mode<synchronous>, transform_indices = @transform_6, window_bounds = array<i64: 1, 128>}, {transform_indices = @transform_7, window_bounds = array<i64: 16, 128>}]} {
    %c0 = arith.constant 0 : index
    %c0_0 = arith.constant 0 : index
    %0 = vector.load %arg1[%c0, %c0_0] : memref<16x128xf32, #tpu.memory_space<vmem>>, vector<16x128xf32>
    %c0_1 = arith.constant 0 : index
    %c0_2 = arith.constant 0 : index
    %1 = vector.load %arg2[%c0_1, %c0_2] : memref<1x128xf32, #tpu.memory_space<vmem>>, vector<1x128xf32>
    %c0_3 = arith.constant 0 : index
    %c0_4 = arith.constant 0 : index
    %2 = vector.load %arg3[%c0_3, %c0_4] : memref<1x128xf32, #tpu.memory_space<vmem>>, vector<1x128xf32>
    %cst = arith.constant dense<0.000000e+00> : vector<16xf32>
    %3 = vector.multi_reduction <add>, %0, %cst [1] : vector<16x128xf32> to vector<16xf32>
    %4 = vector.shape_cast %3 : vector<16xf32> to vector<16x1xf32>
    %cst_5 = arith.constant 1.280000e+02 : f32
    %5 = vector.broadcast %cst_5 : f32 to vector<16x1xf32>
    %6 = arith.divf %4, %5 : vector<16x1xf32>
    %7 = vector.broadcast %6 : vector<16x1xf32> to vector<16x128xf32>
    %8 = arith.subf %0, %7 : vector<16x128xf32>
    %9 = arith.mulf %8, %8 : vector<16x128xf32>
    %cst_6 = arith.constant dense<0.000000e+00> : vector<16xf32>
    %10 = vector.multi_reduction <add>, %9, %cst_6 [1] : vector<16x128xf32> to vector<16xf32>
    %11 = vector.shape_cast %10 : vector<16xf32> to vector<16x1xf32>
    %cst_7 = arith.constant 1.280000e+02 : f32
    %12 = vector.broadcast %cst_7 : f32 to vector<16x1xf32>
    %13 = arith.divf %11, %12 : vector<16x1xf32>
    %14 = vector.broadcast %6 : vector<16x1xf32> to vector<16x128xf32>
    %15 = arith.subf %0, %14 : vector<16x128xf32>
    %cst_8 = arith.constant 9.99999974E-6 : f32
    %16 = vector.broadcast %cst_8 : f32 to vector<16x1xf32>
    %17 = arith.addf %13, %16 : vector<16x1xf32>
    %18 = math.rsqrt %17 : vector<16x1xf32>
    %19 = vector.broadcast %18 : vector<16x1xf32> to vector<16x128xf32>
    %20 = arith.mulf %15, %19 : vector<16x128xf32>
    %21 = vector.broadcast %1 : vector<1x128xf32> to vector<16x128xf32>
    %22 = arith.mulf %20, %21 : vector<16x128xf32>
    %23 = vector.broadcast %2 : vector<1x128xf32> to vector<16x128xf32>
    %24 = arith.addf %22, %23 : vector<16x128xf32>
    %c0_9 = arith.constant 0 : index
    %c0_10 = arith.constant 0 : index
    %25 = vector.load %arg4[%c0_9, %c0_10] : memref<128x256xbf16, #tpu.memory_space<vmem>>, vector<128x256xbf16>
    %26 = arith.truncf %24 : vector<16x128xf32> to vector<16x128xbf16>
    %cst_11 = arith.constant dense<0.000000e+00> : vector<16x256xf32>
    %27 = tpu.matmul %26, %25, %cst_11 {dimension_numbers = #tpu.dot_dimension_numbers<[1], [0], [0], [1], [0, 0, 1, 1], [], []>} : vector<16x128xbf16>, vector<128x256xbf16>, vector<16x256xf32> -> vector<16x256xf32>
    %c0_12 = arith.constant 0 : index
    %c0_13 = arith.constant 0 : index
    %28 = vector.load %arg5[%c0_12, %c0_13] : memref<1x256xf32, #tpu.memory_space<vmem>>, vector<1x256xf32>
    %29 = vector.broadcast %28 : vector<1x256xf32> to vector<16x256xf32>
    %30 = arith.addf %27, %29 : vector<16x256xf32>
    %cst_14 = arith.constant 5.000000e-01 : f32
    %31 = vector.broadcast %cst_14 : f32 to vector<16x256xf32>
    %32 = arith.mulf %31, %30 : vector<16x256xf32>
    %cst_15 = arith.constant 0.707106769 : f32
    %33 = vector.broadcast %cst_15 : f32 to vector<16x256xf32>
    %34 = arith.mulf %30, %33 : vector<16x256xf32>
    %35 = math.erf %34 : vector<16x256xf32>
    %cst_16 = arith.constant 1.000000e+00 : f32
    %36 = vector.broadcast %cst_16 : f32 to vector<16x256xf32>
    %37 = arith.addf %36, %35 : vector<16x256xf32>
    %38 = arith.mulf %32, %37 : vector<16x256xf32>
    %c0_17 = arith.constant 0 : index
    %c0_18 = arith.constant 0 : index
    %39 = vector.load %arg6[%c0_17, %c0_18] : memref<256x128xbf16, #tpu.memory_space<vmem>>, vector<256x128xbf16>
    %40 = arith.truncf %38 : vector<16x256xf32> to vector<16x256xbf16>
    %cst_19 = arith.constant dense<0.000000e+00> : vector<16x128xf32>
    %41 = tpu.matmul %40, %39, %cst_19 {dimension_numbers = #tpu.dot_dimension_numbers<[1], [0], [0], [1], [0, 0, 1, 1], [], []>} : vector<16x256xbf16>, vector<256x128xbf16>, vector<16x128xf32> -> vector<16x128xf32>
    %c0_20 = arith.constant 0 : index
    %c0_21 = arith.constant 0 : index
    %42 = vector.load %arg7[%c0_20, %c0_21] : memref<1x128xf32, #tpu.memory_space<vmem>>, vector<1x128xf32>
    %43 = vector.broadcast %42 : vector<1x128xf32> to vector<16x128xf32>
    %44 = arith.addf %41, %43 : vector<16x128xf32>
    %cst_22 = arith.constant 5.000000e-01 : f32
    %45 = vector.broadcast %cst_22 : f32 to vector<16x128xf32>
    %46 = arith.mulf %45, %44 : vector<16x128xf32>
    %47 = arith.addf %46, %0 : vector<16x128xf32>
    %c0_23 = arith.constant 0 : index
    %c0_24 = arith.constant 0 : index
    %48 = vector.load %arg8[%c0_23, %c0_24] : memref<16x128xf32, #tpu.memory_space<vmem>>, vector<16x128xf32>
    tpu.vector_store %arg8[%c0_23, %c0_24], %47 {strides = array<i32>} : memref<16x128xf32, #tpu.memory_space<vmem>>, vector<16x128xf32>,
    return
  }
  func.func @transform_0(%arg0: i32) -> (i32, i32) {
    %c0_i32 = arith.constant 0 : i32
    %c0_i32_0 = arith.constant 0 : i32
    return %arg0, %c0_i32 : i32, i32
  }
  func.func @transform_1(%arg0: i32) -> (i32, i32) {
    %c0_i32 = arith.constant 0 : i32
    %c0_i32_0 = arith.constant 0 : i32
    %c0_i32_1 = arith.constant 0 : i32
    return %c0_i32, %c0_i32_0 : i32, i32
  }
  func.func @transform_2(%arg0: i32) -> (i32, i32) {
    %c0_i32 = arith.constant 0 : i32
    %c0_i32_0 = arith.constant 0 : i32
    %c0_i32_1 = arith.constant 0 : i32
    return %c0_i32, %c0_i32_0 : i32, i32
  }
  func.func @transform_3(%arg0: i32) -> (i32, i32) {
    %c0_i32 = arith.constant 0 : i32
    %c0_i32_0 = arith.constant 0 : i32
    %c0_i32_1 = arith.constant 0 : i32
    return %c0_i32, %c0_i32_0 : i32, i32
  }
  func.func @transform_4(%arg0: i32) -> (i32, i32) {
    %c0_i32 = arith.constant 0 : i32
    %c0_i32_0 = arith.constant 0 : i32
    %c0_i32_1 = arith.constant 0 : i32
    return %c0_i32, %c0_i32_0 : i32, i32
  }
  func.func @transform_5(%arg0: i32) -> (i32, i32) {
    %c0_i32 = arith.constant 0 : i32
    %c0_i32_0 = arith.constant 0 : i32
    %c0_i32_1 = arith.constant 0 : i32
    return %c0_i32, %c0_i32_0 : i32, i32
  }
  func.func @transform_6(%arg0: i32) -> (i32, i32) {
    %c0_i32 = arith.constant 0 : i32
    %c0_i32_0 = arith.constant 0 : i32
    %c0_i32_1 = arith.constant 0 : i32
    return %c0_i32, %c0_i32_0 : i32, i32
  }
  func.func @transform_7(%arg0: i32) -> (i32, i32) {
    %c0_i32 = arith.constant 0 : i32
    %c0_i32_0 = arith.constant 0 : i32
    return %arg0, %c0_i32 : i32, i32
  }
}

module attributes {stable_mosaic.version = 11 : i64} {
  func.func @flash_mhsa_kernel(%arg0: i32, %arg1: i32, %arg2: i32, %arg3: memref<1x8x128xf32, #tpu.memory_space<vmem>>, %arg4: memref<1x8x128xbf16, #tpu.memory_space<vmem>>, %arg5: memref<1x8x128xbf16, #tpu.memory_space<vmem>>, %arg6: memref<1x8x128xbf16, #tpu.memory_space<vmem>>, %arg7: memref<128x128xbf16, #tpu.memory_space<vmem>>, %arg8: memref<1x128xf32, #tpu.memory_space<vmem>>, %arg9: memref<1x8x128xf32, #tpu.memory_space<vmem>>, %arg10: memref<4x8x1xf32, #tpu.memory_space<vmem>>, %arg11: memref<4x8x1xf32, #tpu.memory_space<vmem>>, %arg12: memref<4x8x32xf32, #tpu.memory_space<vmem>>, %arg13: memref<8x128xf32, #tpu.memory_space<vmem>>) attributes {dimension_semantics = [#tpu.dimension_semantics<parallel>, #tpu.dimension_semantics<parallel>, #tpu.dimension_semantics<arbitrary>], iteration_bounds = array<i64: 2, 1, 1>, scalar_prefetch = 0 : i64, scratch_operands = 4 : i64, tpu.core_type = #tpu.core_type<tc>, window_params = [{transform_indices = @transform_0, window_bounds = array<i64: 1, 8, 128>}, {transform_indices = @transform_1, window_bounds = array<i64: 1, 8, 128>}, {transform_indices = @transform_2, window_bounds = array<i64: 1, 8, 128>}, {transform_indices = @transform_3, window_bounds = array<i64: 1, 8, 128>}, {pipeline_mode = #tpu.pipeline_mode<synchronous>, transform_indices = @transform_4, window_bounds = array<i64: 128, 128>}, {pipeline_mode = #tpu.pipeline_mode<synchronous>, transform_indices = @transform_5, window_bounds = array<i64: 1, 128>}, {transform_indices = @transform_6, window_bounds = array<i64: 1, 8, 128>}]} {
    %c0_i32 = arith.constant 0 : i32
    %0 = arith.cmpi eq, %arg2, %c0_i32 : i32
    %1 = arith.extui %0 : i1 to i32
    %c0_i32_0 = arith.constant 0 : i32
    %2 = arith.cmpi ne, %1, %c0_i32_0 : i32
    scf.if %2 {
      %cst_123 = arith.constant 0xFF800000 : f32
      %170 = vector.broadcast %cst_123 : f32 to vector<4x8x1xf32>
      %c0_124 = arith.constant 0 : index
      %c0_125 = arith.constant 0 : index
      %c0_126 = arith.constant 0 : index
      %171 = vector.load %arg10[%c0_124, %c0_125, %c0_126] : memref<4x8x1xf32, #tpu.memory_space<vmem>>, vector<4x8x1xf32>
      tpu.vector_store %arg10[%c0_124, %c0_125, %c0_126], %170 {strides = array<i32>} : memref<4x8x1xf32, #tpu.memory_space<vmem>>, vector<4x8x1xf32>,
      %cst_127 = arith.constant 0.000000e+00 : f32
      %172 = vector.broadcast %cst_127 : f32 to vector<4x8x1xf32>
      %c0_128 = arith.constant 0 : index
      %c0_129 = arith.constant 0 : index
      %c0_130 = arith.constant 0 : index
      %173 = vector.load %arg11[%c0_128, %c0_129, %c0_130] : memref<4x8x1xf32, #tpu.memory_space<vmem>>, vector<4x8x1xf32>
      tpu.vector_store %arg11[%c0_128, %c0_129, %c0_130], %172 {strides = array<i32>} : memref<4x8x1xf32, #tpu.memory_space<vmem>>, vector<4x8x1xf32>,
      %cst_131 = arith.constant 0.000000e+00 : f32
      %174 = vector.broadcast %cst_131 : f32 to vector<4x8x32xf32>
      %c0_132 = arith.constant 0 : index
      %c0_133 = arith.constant 0 : index
      %c0_134 = arith.constant 0 : index
      %175 = vector.load %arg12[%c0_132, %c0_133, %c0_134] : memref<4x8x32xf32, #tpu.memory_space<vmem>>, vector<4x8x32xf32>
      tpu.vector_store %arg12[%c0_132, %c0_133, %c0_134], %174 {strides = array<i32>} : memref<4x8x32xf32, #tpu.memory_space<vmem>>, vector<4x8x32xf32>,
    } else {
    }
    %c0 = arith.constant 0 : index
    %c0_1 = arith.constant 0 : index
    %c0_2 = arith.constant 0 : index
    %3 = vector.load %arg4[%c0, %c0_1, %c0_2] : memref<1x8x128xbf16, #tpu.memory_space<vmem>>, vector<1x8x32xbf16>
    %4 = vector.shape_cast %3 : vector<1x8x32xbf16> to vector<8x32xbf16>
    %c0_3 = arith.constant 0 : index
    %c0_4 = arith.constant 0 : index
    %c0_5 = arith.constant 0 : index
    %5 = vector.load %arg5[%c0_3, %c0_4, %c0_5] : memref<1x8x128xbf16, #tpu.memory_space<vmem>>, vector<1x8x32xbf16>
    %6 = vector.shape_cast %5 : vector<1x8x32xbf16> to vector<8x32xbf16>
    %c0_6 = arith.constant 0 : index
    %c0_7 = arith.constant 0 : index
    %c0_8 = arith.constant 0 : index
    %7 = vector.load %arg6[%c0_6, %c0_7, %c0_8] : memref<1x8x128xbf16, #tpu.memory_space<vmem>>, vector<1x8x32xbf16>
    %8 = vector.shape_cast %7 : vector<1x8x32xbf16> to vector<8x32xbf16>
    %cst = arith.constant dense<0.000000e+00> : vector<8x8xf32>
    %9 = tpu.matmul %4, %6, %cst {dimension_numbers = #tpu.dot_dimension_numbers<[1], [1], [0], [0], [0, 0, 1, 0], [], []>} : vector<8x32xbf16>, vector<8x32xbf16>, vector<8x8xf32> -> vector<8x8xf32>
    %cst_9 = arith.constant 0.176776692 : f32
    %10 = vector.broadcast %cst_9 : f32 to vector<8x8xf32>
    %11 = arith.mulf %9, %10 : vector<8x8xf32>
    %c0_10 = arith.constant 0 : index
    %c0_11 = arith.constant 0 : index
    %c0_12 = arith.constant 0 : index
    %12 = vector.load %arg10[%c0_10, %c0_11, %c0_12] : memref<4x8x1xf32, #tpu.memory_space<vmem>>, vector<1x8x1xf32>
    %13 = vector.shape_cast %12 : vector<1x8x1xf32> to vector<8x1xf32>
    %cst_13 = arith.constant dense<0xFF800000> : vector<8xf32>
    %14 = vector.multi_reduction <maximumf>, %11, %cst_13 [1] : vector<8x8xf32> to vector<8xf32>
    %15 = vector.shape_cast %14 : vector<8xf32> to vector<8x1xf32>
    %16 = arith.maximumf %13, %15 : vector<8x1xf32>
    %17 = arith.subf %13, %16 : vector<8x1xf32>
    %18 = math.exp %17 : vector<8x1xf32>
    %19 = vector.broadcast %16 : vector<8x1xf32> to vector<8x8xf32>
    %20 = arith.subf %11, %19 : vector<8x8xf32>
    %21 = math.exp %20 : vector<8x8xf32>
    %c0_14 = arith.constant 0 : index
    %c0_15 = arith.constant 0 : index
    %c0_16 = arith.constant 0 : index
    %22 = vector.load %arg11[%c0_14, %c0_15, %c0_16] : memref<4x8x1xf32, #tpu.memory_space<vmem>>, vector<1x8x1xf32>
    %23 = vector.shape_cast %22 : vector<1x8x1xf32> to vector<8x1xf32>
    %24 = arith.mulf %18, %23 : vector<8x1xf32>
    %cst_17 = arith.constant dense<0.000000e+00> : vector<8xf32>
    %25 = vector.multi_reduction <add>, %21, %cst_17 [1] : vector<8x8xf32> to vector<8xf32>
    %26 = vector.shape_cast %25 : vector<8xf32> to vector<8x1xf32>
    %27 = arith.addf %24, %26 : vector<8x1xf32>
    %c0_18 = arith.constant 0 : index
    %c0_19 = arith.constant 0 : index
    %c0_20 = arith.constant 0 : index
    %28 = vector.load %arg11[%c0_18, %c0_19, %c0_20] : memref<4x8x1xf32, #tpu.memory_space<vmem>>, vector<1x8x1xf32>
    %29 = vector.shape_cast %28 : vector<1x8x1xf32> to vector<8x1xf32>
    %30 = vector.shape_cast %27 : vector<8x1xf32> to vector<1x8x1xf32>
    tpu.vector_store %arg11[%c0_18, %c0_19, %c0_20], %30 {strides = array<i32>} : memref<4x8x1xf32, #tpu.memory_space<vmem>>, vector<1x8x1xf32>,
    %c0_21 = arith.constant 0 : index
    %c0_22 = arith.constant 0 : index
    %c0_23 = arith.constant 0 : index
    %31 = vector.load %arg12[%c0_21, %c0_22, %c0_23] : memref<4x8x32xf32, #tpu.memory_space<vmem>>, vector<1x8x32xf32>
    %32 = vector.shape_cast %31 : vector<1x8x32xf32> to vector<8x32xf32>
    %33 = vector.broadcast %18 : vector<8x1xf32> to vector<8x32xf32>
    %34 = arith.mulf %33, %32 : vector<8x32xf32>
    %35 = arith.truncf %21 : vector<8x8xf32> to vector<8x8xbf16>
    %cst_24 = arith.constant dense<0.000000e+00> : vector<8x32xf32>
    %36 = tpu.matmul %35, %8, %cst_24 {dimension_numbers = #tpu.dot_dimension_numbers<[1], [0], [0], [1], [0, 0, 1, 1], [], []>} : vector<8x8xbf16>, vector<8x32xbf16>, vector<8x32xf32> -> vector<8x32xf32>
    %37 = arith.addf %34, %36 : vector<8x32xf32>
    %c0_25 = arith.constant 0 : index
    %c0_26 = arith.constant 0 : index
    %c0_27 = arith.constant 0 : index
    %38 = vector.load %arg12[%c0_25, %c0_26, %c0_27] : memref<4x8x32xf32, #tpu.memory_space<vmem>>, vector<1x8x32xf32>
    %39 = vector.shape_cast %38 : vector<1x8x32xf32> to vector<8x32xf32>
    %40 = vector.shape_cast %37 : vector<8x32xf32> to vector<1x8x32xf32>
    tpu.vector_store %arg12[%c0_25, %c0_26, %c0_27], %40 {strides = array<i32>} : memref<4x8x32xf32, #tpu.memory_space<vmem>>, vector<1x8x32xf32>,
    %c0_28 = arith.constant 0 : index
    %c0_29 = arith.constant 0 : index
    %c0_30 = arith.constant 0 : index
    %41 = vector.load %arg10[%c0_28, %c0_29, %c0_30] : memref<4x8x1xf32, #tpu.memory_space<vmem>>, vector<1x8x1xf32>
    %42 = vector.shape_cast %41 : vector<1x8x1xf32> to vector<8x1xf32>
    %43 = vector.shape_cast %16 : vector<8x1xf32> to vector<1x8x1xf32>
    tpu.vector_store %arg10[%c0_28, %c0_29, %c0_30], %43 {strides = array<i32>} : memref<4x8x1xf32, #tpu.memory_space<vmem>>, vector<1x8x1xf32>,
    %c0_31 = arith.constant 0 : index
    %c0_32 = arith.constant 0 : index
    %c32 = arith.constant 32 : index
    %44 = vector.load %arg4[%c0_31, %c0_32, %c32] : memref<1x8x128xbf16, #tpu.memory_space<vmem>>, vector<1x8x32xbf16>
    %45 = vector.shape_cast %44 : vector<1x8x32xbf16> to vector<8x32xbf16>
    %c0_33 = arith.constant 0 : index
    %c0_34 = arith.constant 0 : index
    %c32_35 = arith.constant 32 : index
    %46 = vector.load %arg5[%c0_33, %c0_34, %c32_35] : memref<1x8x128xbf16, #tpu.memory_space<vmem>>, vector<1x8x32xbf16>
    %47 = vector.shape_cast %46 : vector<1x8x32xbf16> to vector<8x32xbf16>
    %c0_36 = arith.constant 0 : index
    %c0_37 = arith.constant 0 : index
    %c32_38 = arith.constant 32 : index
    %48 = vector.load %arg6[%c0_36, %c0_37, %c32_38] : memref<1x8x128xbf16, #tpu.memory_space<vmem>>, vector<1x8x32xbf16>
    %49 = vector.shape_cast %48 : vector<1x8x32xbf16> to vector<8x32xbf16>
    %cst_39 = arith.constant dense<0.000000e+00> : vector<8x8xf32>
    %50 = tpu.matmul %45, %47, %cst_39 {dimension_numbers = #tpu.dot_dimension_numbers<[1], [1], [0], [0], [0, 0, 1, 0], [], []>} : vector<8x32xbf16>, vector<8x32xbf16>, vector<8x8xf32> -> vector<8x8xf32>
    %cst_40 = arith.constant 0.176776692 : f32
    %51 = vector.broadcast %cst_40 : f32 to vector<8x8xf32>
    %52 = arith.mulf %50, %51 : vector<8x8xf32>
    %c1 = arith.constant 1 : index
    %c0_41 = arith.constant 0 : index
    %c0_42 = arith.constant 0 : index
    %53 = vector.load %arg10[%c1, %c0_41, %c0_42] : memref<4x8x1xf32, #tpu.memory_space<vmem>>, vector<1x8x1xf32>
    %54 = vector.shape_cast %53 : vector<1x8x1xf32> to vector<8x1xf32>
    %cst_43 = arith.constant dense<0xFF800000> : vector<8xf32>
    %55 = vector.multi_reduction <maximumf>, %52, %cst_43 [1] : vector<8x8xf32> to vector<8xf32>
    %56 = vector.shape_cast %55 : vector<8xf32> to vector<8x1xf32>
    %57 = arith.maximumf %54, %56 : vector<8x1xf32>
    %58 = arith.subf %54, %57 : vector<8x1xf32>
    %59 = math.exp %58 : vector<8x1xf32>
    %60 = vector.broadcast %57 : vector<8x1xf32> to vector<8x8xf32>
    %61 = arith.subf %52, %60 : vector<8x8xf32>
    %62 = math.exp %61 : vector<8x8xf32>
    %c1_44 = arith.constant 1 : index
    %c0_45 = arith.constant 0 : index
    %c0_46 = arith.constant 0 : index
    %63 = vector.load %arg11[%c1_44, %c0_45, %c0_46] : memref<4x8x1xf32, #tpu.memory_space<vmem>>, vector<1x8x1xf32>
    %64 = vector.shape_cast %63 : vector<1x8x1xf32> to vector<8x1xf32>
    %65 = arith.mulf %59, %64 : vector<8x1xf32>
    %cst_47 = arith.constant dense<0.000000e+00> : vector<8xf32>
    %66 = vector.multi_reduction <add>, %62, %cst_47 [1] : vector<8x8xf32> to vector<8xf32>
    %67 = vector.shape_cast %66 : vector<8xf32> to vector<8x1xf32>
    %68 = arith.addf %65, %67 : vector<8x1xf32>
    %c1_48 = arith.constant 1 : index
    %c0_49 = arith.constant 0 : index
    %c0_50 = arith.constant 0 : index
    %69 = vector.load %arg11[%c1_48, %c0_49, %c0_50] : memref<4x8x1xf32, #tpu.memory_space<vmem>>, vector<1x8x1xf32>
    %70 = vector.shape_cast %69 : vector<1x8x1xf32> to vector<8x1xf32>
    %71 = vector.shape_cast %68 : vector<8x1xf32> to vector<1x8x1xf32>
    tpu.vector_store %arg11[%c1_48, %c0_49, %c0_50], %71 {strides = array<i32>} : memref<4x8x1xf32, #tpu.memory_space<vmem>>, vector<1x8x1xf32>,
    %c1_51 = arith.constant 1 : index
    %c0_52 = arith.constant 0 : index
    %c0_53 = arith.constant 0 : index
    %72 = vector.load %arg12[%c1_51, %c0_52, %c0_53] : memref<4x8x32xf32, #tpu.memory_space<vmem>>, vector<1x8x32xf32>
    %73 = vector.shape_cast %72 : vector<1x8x32xf32> to vector<8x32xf32>
    %74 = vector.broadcast %59 : vector<8x1xf32> to vector<8x32xf32>
    %75 = arith.mulf %74, %73 : vector<8x32xf32>
    %76 = arith.truncf %62 : vector<8x8xf32> to vector<8x8xbf16>
    %cst_54 = arith.constant dense<0.000000e+00> : vector<8x32xf32>
    %77 = tpu.matmul %76, %49, %cst_54 {dimension_numbers = #tpu.dot_dimension_numbers<[1], [0], [0], [1], [0, 0, 1, 1], [], []>} : vector<8x8xbf16>, vector<8x32xbf16>, vector<8x32xf32> -> vector<8x32xf32>
    %78 = arith.addf %75, %77 : vector<8x32xf32>
    %c1_55 = arith.constant 1 : index
    %c0_56 = arith.constant 0 : index
    %c0_57 = arith.constant 0 : index
    %79 = vector.load %arg12[%c1_55, %c0_56, %c0_57] : memref<4x8x32xf32, #tpu.memory_space<vmem>>, vector<1x8x32xf32>
    %80 = vector.shape_cast %79 : vector<1x8x32xf32> to vector<8x32xf32>
    %81 = vector.shape_cast %78 : vector<8x32xf32> to vector<1x8x32xf32>
    tpu.vector_store %arg12[%c1_55, %c0_56, %c0_57], %81 {strides = array<i32>} : memref<4x8x32xf32, #tpu.memory_space<vmem>>, vector<1x8x32xf32>,
    %c1_58 = arith.constant 1 : index
    %c0_59 = arith.constant 0 : index
    %c0_60 = arith.constant 0 : index
    %82 = vector.load %arg10[%c1_58, %c0_59, %c0_60] : memref<4x8x1xf32, #tpu.memory_space<vmem>>, vector<1x8x1xf32>
    %83 = vector.shape_cast %82 : vector<1x8x1xf32> to vector<8x1xf32>
    %84 = vector.shape_cast %57 : vector<8x1xf32> to vector<1x8x1xf32>
    tpu.vector_store %arg10[%c1_58, %c0_59, %c0_60], %84 {strides = array<i32>} : memref<4x8x1xf32, #tpu.memory_space<vmem>>, vector<1x8x1xf32>,
    %c0_61 = arith.constant 0 : index
    %c0_62 = arith.constant 0 : index
    %c64 = arith.constant 64 : index
    %85 = vector.load %arg4[%c0_61, %c0_62, %c64] : memref<1x8x128xbf16, #tpu.memory_space<vmem>>, vector<1x8x32xbf16>
    %86 = vector.shape_cast %85 : vector<1x8x32xbf16> to vector<8x32xbf16>
    %c0_63 = arith.constant 0 : index
    %c0_64 = arith.constant 0 : index
    %c64_65 = arith.constant 64 : index
    %87 = vector.load %arg5[%c0_63, %c0_64, %c64_65] : memref<1x8x128xbf16, #tpu.memory_space<vmem>>, vector<1x8x32xbf16>
    %88 = vector.shape_cast %87 : vector<1x8x32xbf16> to vector<8x32xbf16>
    %c0_66 = arith.constant 0 : index
    %c0_67 = arith.constant 0 : index
    %c64_68 = arith.constant 64 : index
    %89 = vector.load %arg6[%c0_66, %c0_67, %c64_68] : memref<1x8x128xbf16, #tpu.memory_space<vmem>>, vector<1x8x32xbf16>
    %90 = vector.shape_cast %89 : vector<1x8x32xbf16> to vector<8x32xbf16>
    %cst_69 = arith.constant dense<0.000000e+00> : vector<8x8xf32>
    %91 = tpu.matmul %86, %88, %cst_69 {dimension_numbers = #tpu.dot_dimension_numbers<[1], [1], [0], [0], [0, 0, 1, 0], [], []>} : vector<8x32xbf16>, vector<8x32xbf16>, vector<8x8xf32> -> vector<8x8xf32>
    %cst_70 = arith.constant 0.176776692 : f32
    %92 = vector.broadcast %cst_70 : f32 to vector<8x8xf32>
    %93 = arith.mulf %91, %92 : vector<8x8xf32>
    %c2 = arith.constant 2 : index
    %c0_71 = arith.constant 0 : index
    %c0_72 = arith.constant 0 : index
    %94 = vector.load %arg10[%c2, %c0_71, %c0_72] : memref<4x8x1xf32, #tpu.memory_space<vmem>>, vector<1x8x1xf32>
    %95 = vector.shape_cast %94 : vector<1x8x1xf32> to vector<8x1xf32>
    %cst_73 = arith.constant dense<0xFF800000> : vector<8xf32>
    %96 = vector.multi_reduction <maximumf>, %93, %cst_73 [1] : vector<8x8xf32> to vector<8xf32>
    %97 = vector.shape_cast %96 : vector<8xf32> to vector<8x1xf32>
    %98 = arith.maximumf %95, %97 : vector<8x1xf32>
    %99 = arith.subf %95, %98 : vector<8x1xf32>
    %100 = math.exp %99 : vector<8x1xf32>
    %101 = vector.broadcast %98 : vector<8x1xf32> to vector<8x8xf32>
    %102 = arith.subf %93, %101 : vector<8x8xf32>
    %103 = math.exp %102 : vector<8x8xf32>
    %c2_74 = arith.constant 2 : index
    %c0_75 = arith.constant 0 : index
    %c0_76 = arith.constant 0 : index
    %104 = vector.load %arg11[%c2_74, %c0_75, %c0_76] : memref<4x8x1xf32, #tpu.memory_space<vmem>>, vector<1x8x1xf32>
    %105 = vector.shape_cast %104 : vector<1x8x1xf32> to vector<8x1xf32>
    %106 = arith.mulf %100, %105 : vector<8x1xf32>
    %cst_77 = arith.constant dense<0.000000e+00> : vector<8xf32>
    %107 = vector.multi_reduction <add>, %103, %cst_77 [1] : vector<8x8xf32> to vector<8xf32>
    %108 = vector.shape_cast %107 : vector<8xf32> to vector<8x1xf32>
    %109 = arith.addf %106, %108 : vector<8x1xf32>
    %c2_78 = arith.constant 2 : index
    %c0_79 = arith.constant 0 : index
    %c0_80 = arith.constant 0 : index
    %110 = vector.load %arg11[%c2_78, %c0_79, %c0_80] : memref<4x8x1xf32, #tpu.memory_space<vmem>>, vector<1x8x1xf32>
    %111 = vector.shape_cast %110 : vector<1x8x1xf32> to vector<8x1xf32>
    %112 = vector.shape_cast %109 : vector<8x1xf32> to vector<1x8x1xf32>
    tpu.vector_store %arg11[%c2_78, %c0_79, %c0_80], %112 {strides = array<i32>} : memref<4x8x1xf32, #tpu.memory_space<vmem>>, vector<1x8x1xf32>,
    %c2_81 = arith.constant 2 : index
    %c0_82 = arith.constant 0 : index
    %c0_83 = arith.constant 0 : index
    %113 = vector.load %arg12[%c2_81, %c0_82, %c0_83] : memref<4x8x32xf32, #tpu.memory_space<vmem>>, vector<1x8x32xf32>
    %114 = vector.shape_cast %113 : vector<1x8x32xf32> to vector<8x32xf32>
    %115 = vector.broadcast %100 : vector<8x1xf32> to vector<8x32xf32>
    %116 = arith.mulf %115, %114 : vector<8x32xf32>
    %117 = arith.truncf %103 : vector<8x8xf32> to vector<8x8xbf16>
    %cst_84 = arith.constant dense<0.000000e+00> : vector<8x32xf32>
    %118 = tpu.matmul %117, %90, %cst_84 {dimension_numbers = #tpu.dot_dimension_numbers<[1], [0], [0], [1], [0, 0, 1, 1], [], []>} : vector<8x8xbf16>, vector<8x32xbf16>, vector<8x32xf32> -> vector<8x32xf32>
    %119 = arith.addf %116, %118 : vector<8x32xf32>
    %c2_85 = arith.constant 2 : index
    %c0_86 = arith.constant 0 : index
    %c0_87 = arith.constant 0 : index
    %120 = vector.load %arg12[%c2_85, %c0_86, %c0_87] : memref<4x8x32xf32, #tpu.memory_space<vmem>>, vector<1x8x32xf32>
    %121 = vector.shape_cast %120 : vector<1x8x32xf32> to vector<8x32xf32>
    %122 = vector.shape_cast %119 : vector<8x32xf32> to vector<1x8x32xf32>
    tpu.vector_store %arg12[%c2_85, %c0_86, %c0_87], %122 {strides = array<i32>} : memref<4x8x32xf32, #tpu.memory_space<vmem>>, vector<1x8x32xf32>,
    %c2_88 = arith.constant 2 : index
    %c0_89 = arith.constant 0 : index
    %c0_90 = arith.constant 0 : index
    %123 = vector.load %arg10[%c2_88, %c0_89, %c0_90] : memref<4x8x1xf32, #tpu.memory_space<vmem>>, vector<1x8x1xf32>
    %124 = vector.shape_cast %123 : vector<1x8x1xf32> to vector<8x1xf32>
    %125 = vector.shape_cast %98 : vector<8x1xf32> to vector<1x8x1xf32>
    tpu.vector_store %arg10[%c2_88, %c0_89, %c0_90], %125 {strides = array<i32>} : memref<4x8x1xf32, #tpu.memory_space<vmem>>, vector<1x8x1xf32>,
    %c0_91 = arith.constant 0 : index
    %c0_92 = arith.constant 0 : index
    %c96 = arith.constant 96 : index
    %126 = vector.load %arg4[%c0_91, %c0_92, %c96] : memref<1x8x128xbf16, #tpu.memory_space<vmem>>, vector<1x8x32xbf16>
    %127 = vector.shape_cast %126 : vector<1x8x32xbf16> to vector<8x32xbf16>
    %c0_93 = arith.constant 0 : index
    %c0_94 = arith.constant 0 : index
    %c96_95 = arith.constant 96 : index
    %128 = vector.load %arg5[%c0_93, %c0_94, %c96_95] : memref<1x8x128xbf16, #tpu.memory_space<vmem>>, vector<1x8x32xbf16>
    %129 = vector.shape_cast %128 : vector<1x8x32xbf16> to vector<8x32xbf16>
    %c0_96 = arith.constant 0 : index
    %c0_97 = arith.constant 0 : index
    %c96_98 = arith.constant 96 : index
    %130 = vector.load %arg6[%c0_96, %c0_97, %c96_98] : memref<1x8x128xbf16, #tpu.memory_space<vmem>>, vector<1x8x32xbf16>
    %131 = vector.shape_cast %130 : vector<1x8x32xbf16> to vector<8x32xbf16>
    %cst_99 = arith.constant dense<0.000000e+00> : vector<8x8xf32>
    %132 = tpu.matmul %127, %129, %cst_99 {dimension_numbers = #tpu.dot_dimension_numbers<[1], [1], [0], [0], [0, 0, 1, 0], [], []>} : vector<8x32xbf16>, vector<8x32xbf16>, vector<8x8xf32> -> vector<8x8xf32>
    %cst_100 = arith.constant 0.176776692 : f32
    %133 = vector.broadcast %cst_100 : f32 to vector<8x8xf32>
    %134 = arith.mulf %132, %133 : vector<8x8xf32>
    %c3 = arith.constant 3 : index
    %c0_101 = arith.constant 0 : index
    %c0_102 = arith.constant 0 : index
    %135 = vector.load %arg10[%c3, %c0_101, %c0_102] : memref<4x8x1xf32, #tpu.memory_space<vmem>>, vector<1x8x1xf32>
    %136 = vector.shape_cast %135 : vector<1x8x1xf32> to vector<8x1xf32>
    %cst_103 = arith.constant dense<0xFF800000> : vector<8xf32>
    %137 = vector.multi_reduction <maximumf>, %134, %cst_103 [1] : vector<8x8xf32> to vector<8xf32>
    %138 = vector.shape_cast %137 : vector<8xf32> to vector<8x1xf32>
    %139 = arith.maximumf %136, %138 : vector<8x1xf32>
    %140 = arith.subf %136, %139 : vector<8x1xf32>
    %141 = math.exp %140 : vector<8x1xf32>
    %142 = vector.broadcast %139 : vector<8x1xf32> to vector<8x8xf32>
    %143 = arith.subf %134, %142 : vector<8x8xf32>
    %144 = math.exp %143 : vector<8x8xf32>
    %c3_104 = arith.constant 3 : index
    %c0_105 = arith.constant 0 : index
    %c0_106 = arith.constant 0 : index
    %145 = vector.load %arg11[%c3_104, %c0_105, %c0_106] : memref<4x8x1xf32, #tpu.memory_space<vmem>>, vector<1x8x1xf32>
    %146 = vector.shape_cast %145 : vector<1x8x1xf32> to vector<8x1xf32>
    %147 = arith.mulf %141, %146 : vector<8x1xf32>
    %cst_107 = arith.constant dense<0.000000e+00> : vector<8xf32>
    %148 = vector.multi_reduction <add>, %144, %cst_107 [1] : vector<8x8xf32> to vector<8xf32>
    %149 = vector.shape_cast %148 : vector<8xf32> to vector<8x1xf32>
    %150 = arith.addf %147, %149 : vector<8x1xf32>
    %c3_108 = arith.constant 3 : index
    %c0_109 = arith.constant 0 : index
    %c0_110 = arith.constant 0 : index
    %151 = vector.load %arg11[%c3_108, %c0_109, %c0_110] : memref<4x8x1xf32, #tpu.memory_space<vmem>>, vector<1x8x1xf32>
    %152 = vector.shape_cast %151 : vector<1x8x1xf32> to vector<8x1xf32>
    %153 = vector.shape_cast %150 : vector<8x1xf32> to vector<1x8x1xf32>
    tpu.vector_store %arg11[%c3_108, %c0_109, %c0_110], %153 {strides = array<i32>} : memref<4x8x1xf32, #tpu.memory_space<vmem>>, vector<1x8x1xf32>,
    %c3_111 = arith.constant 3 : index
    %c0_112 = arith.constant 0 : index
    %c0_113 = arith.constant 0 : index
    %154 = vector.load %arg12[%c3_111, %c0_112, %c0_113] : memref<4x8x32xf32, #tpu.memory_space<vmem>>, vector<1x8x32xf32>
    %155 = vector.shape_cast %154 : vector<1x8x32xf32> to vector<8x32xf32>
    %156 = vector.broadcast %141 : vector<8x1xf32> to vector<8x32xf32>
    %157 = arith.mulf %156, %155 : vector<8x32xf32>
    %158 = arith.truncf %144 : vector<8x8xf32> to vector<8x8xbf16>
    %cst_114 = arith.constant dense<0.000000e+00> : vector<8x32xf32>
    %159 = tpu.matmul %158, %131, %cst_114 {dimension_numbers = #tpu.dot_dimension_numbers<[1], [0], [0], [1], [0, 0, 1, 1], [], []>} : vector<8x8xbf16>, vector<8x32xbf16>, vector<8x32xf32> -> vector<8x32xf32>
    %160 = arith.addf %157, %159 : vector<8x32xf32>
    %c3_115 = arith.constant 3 : index
    %c0_116 = arith.constant 0 : index
    %c0_117 = arith.constant 0 : index
    %161 = vector.load %arg12[%c3_115, %c0_116, %c0_117] : memref<4x8x32xf32, #tpu.memory_space<vmem>>, vector<1x8x32xf32>
    %162 = vector.shape_cast %161 : vector<1x8x32xf32> to vector<8x32xf32>
    %163 = vector.shape_cast %160 : vector<8x32xf32> to vector<1x8x32xf32>
    tpu.vector_store %arg12[%c3_115, %c0_116, %c0_117], %163 {strides = array<i32>} : memref<4x8x32xf32, #tpu.memory_space<vmem>>, vector<1x8x32xf32>,
    %c3_118 = arith.constant 3 : index
    %c0_119 = arith.constant 0 : index
    %c0_120 = arith.constant 0 : index
    %164 = vector.load %arg10[%c3_118, %c0_119, %c0_120] : memref<4x8x1xf32, #tpu.memory_space<vmem>>, vector<1x8x1xf32>
    %165 = vector.shape_cast %164 : vector<1x8x1xf32> to vector<8x1xf32>
    %166 = vector.shape_cast %139 : vector<8x1xf32> to vector<1x8x1xf32>
    tpu.vector_store %arg10[%c3_118, %c0_119, %c0_120], %166 {strides = array<i32>} : memref<4x8x1xf32, #tpu.memory_space<vmem>>, vector<1x8x1xf32>,
    %c0_i32_121 = arith.constant 0 : i32
    %167 = arith.cmpi eq, %arg2, %c0_i32_121 : i32
    %168 = arith.extui %167 : i1 to i32
    %c0_i32_122 = arith.constant 0 : i32
    %169 = arith.cmpi ne, %168, %c0_i32_122 : i32
    scf.if %169 {
      %c0_123 = arith.constant 0 : index
      %c0_124 = arith.constant 0 : index
      %c0_125 = arith.constant 0 : index
      %170 = vector.load %arg11[%c0_123, %c0_124, %c0_125] : memref<4x8x1xf32, #tpu.memory_space<vmem>>, vector<1x8x1xf32>
      %171 = vector.shape_cast %170 : vector<1x8x1xf32> to vector<8x1xf32>
      %172 = tpu.reciprocal %171 {approx = true} : vector<8x1xf32> -> vector<8x1xf32>
      %c0_126 = arith.constant 0 : index
      %c0_127 = arith.constant 0 : index
      %c0_128 = arith.constant 0 : index
      %173 = vector.load %arg12[%c0_126, %c0_127, %c0_128] : memref<4x8x32xf32, #tpu.memory_space<vmem>>, vector<1x8x32xf32>
      %174 = vector.shape_cast %173 : vector<1x8x32xf32> to vector<8x32xf32>
      %175 = vector.broadcast %172 : vector<8x1xf32> to vector<8x32xf32>
      %176 = arith.mulf %174, %175 : vector<8x32xf32>
      %c0_129 = arith.constant 0 : index
      %c0_130 = arith.constant 0 : index
      %177 = vector.load %arg13[%c0_129, %c0_130] : memref<8x128xf32, #tpu.memory_space<vmem>>, vector<8x32xf32>
      tpu.vector_store %arg13[%c0_129, %c0_130], %176 {strides = array<i32>} : memref<8x128xf32, #tpu.memory_space<vmem>>, vector<8x32xf32>,
      %c1_131 = arith.constant 1 : index
      %c0_132 = arith.constant 0 : index
      %c0_133 = arith.constant 0 : index
      %178 = vector.load %arg11[%c1_131, %c0_132, %c0_133] : memref<4x8x1xf32, #tpu.memory_space<vmem>>, vector<1x8x1xf32>
      %179 = vector.shape_cast %178 : vector<1x8x1xf32> to vector<8x1xf32>
      %180 = tpu.reciprocal %179 {approx = true} : vector<8x1xf32> -> vector<8x1xf32>
      %c1_134 = arith.constant 1 : index
      %c0_135 = arith.constant 0 : index
      %c0_136 = arith.constant 0 : index
      %181 = vector.load %arg12[%c1_134, %c0_135, %c0_136] : memref<4x8x32xf32, #tpu.memory_space<vmem>>, vector<1x8x32xf32>
      %182 = vector.shape_cast %181 : vector<1x8x32xf32> to vector<8x32xf32>
      %183 = vector.broadcast %180 : vector<8x1xf32> to vector<8x32xf32>
      %184 = arith.mulf %182, %183 : vector<8x32xf32>
      %c0_137 = arith.constant 0 : index
      %c32_138 = arith.constant 32 : index
      %185 = vector.load %arg13[%c0_137, %c32_138] : memref<8x128xf32, #tpu.memory_space<vmem>>, vector<8x32xf32>
      tpu.vector_store %arg13[%c0_137, %c32_138], %184 {strides = array<i32>} : memref<8x128xf32, #tpu.memory_space<vmem>>, vector<8x32xf32>,
      %c2_139 = arith.constant 2 : index
      %c0_140 = arith.constant 0 : index
      %c0_141 = arith.constant 0 : index
      %186 = vector.load %arg11[%c2_139, %c0_140, %c0_141] : memref<4x8x1xf32, #tpu.memory_space<vmem>>, vector<1x8x1xf32>
      %187 = vector.shape_cast %186 : vector<1x8x1xf32> to vector<8x1xf32>
      %188 = tpu.reciprocal %187 {approx = true} : vector<8x1xf32> -> vector<8x1xf32>
      %c2_142 = arith.constant 2 : index
      %c0_143 = arith.constant 0 : index
      %c0_144 = arith.constant 0 : index
      %189 = vector.load %arg12[%c2_142, %c0_143, %c0_144] : memref<4x8x32xf32, #tpu.memory_space<vmem>>, vector<1x8x32xf32>
      %190 = vector.shape_cast %189 : vector<1x8x32xf32> to vector<8x32xf32>
      %191 = vector.broadcast %188 : vector<8x1xf32> to vector<8x32xf32>
      %192 = arith.mulf %190, %191 : vector<8x32xf32>
      %c0_145 = arith.constant 0 : index
      %c64_146 = arith.constant 64 : index
      %193 = vector.load %arg13[%c0_145, %c64_146] : memref<8x128xf32, #tpu.memory_space<vmem>>, vector<8x32xf32>
      tpu.vector_store %arg13[%c0_145, %c64_146], %192 {strides = array<i32>} : memref<8x128xf32, #tpu.memory_space<vmem>>, vector<8x32xf32>,
      %c3_147 = arith.constant 3 : index
      %c0_148 = arith.constant 0 : index
      %c0_149 = arith.constant 0 : index
      %194 = vector.load %arg11[%c3_147, %c0_148, %c0_149] : memref<4x8x1xf32, #tpu.memory_space<vmem>>, vector<1x8x1xf32>
      %195 = vector.shape_cast %194 : vector<1x8x1xf32> to vector<8x1xf32>
      %196 = tpu.reciprocal %195 {approx = true} : vector<8x1xf32> -> vector<8x1xf32>
      %c3_150 = arith.constant 3 : index
      %c0_151 = arith.constant 0 : index
      %c0_152 = arith.constant 0 : index
      %197 = vector.load %arg12[%c3_150, %c0_151, %c0_152] : memref<4x8x32xf32, #tpu.memory_space<vmem>>, vector<1x8x32xf32>
      %198 = vector.shape_cast %197 : vector<1x8x32xf32> to vector<8x32xf32>
      %199 = vector.broadcast %196 : vector<8x1xf32> to vector<8x32xf32>
      %200 = arith.mulf %198, %199 : vector<8x32xf32>
      %c0_153 = arith.constant 0 : index
      %c96_154 = arith.constant 96 : index
      %201 = vector.load %arg13[%c0_153, %c96_154] : memref<8x128xf32, #tpu.memory_space<vmem>>, vector<8x32xf32>
      tpu.vector_store %arg13[%c0_153, %c96_154], %200 {strides = array<i32>} : memref<8x128xf32, #tpu.memory_space<vmem>>, vector<8x32xf32>,
      %c0_155 = arith.constant 0 : index
      %c0_156 = arith.constant 0 : index
      %c0_157 = arith.constant 0 : index
      %202 = vector.load %arg3[%c0_155, %c0_156, %c0_157] : memref<1x8x128xf32, #tpu.memory_space<vmem>>, vector<1x8x128xf32>
      %203 = vector.shape_cast %202 : vector<1x8x128xf32> to vector<8x128xf32>
      %c0_158 = arith.constant 0 : index
      %c0_159 = arith.constant 0 : index
      %204 = vector.load %arg8[%c0_158, %c0_159] : memref<1x128xf32, #tpu.memory_space<vmem>>, vector<1x128xf32>
      %205 = vector.broadcast %204 : vector<1x128xf32> to vector<8x128xf32>
      %206 = arith.addf %203, %205 : vector<8x128xf32>
      %c0_160 = arith.constant 0 : index
      %c0_161 = arith.constant 0 : index
      %207 = vector.load %arg13[%c0_160, %c0_161] : memref<8x128xf32, #tpu.memory_space<vmem>>, vector<8x128xf32>
      %c0_162 = arith.constant 0 : index
      %c0_163 = arith.constant 0 : index
      %208 = vector.load %arg7[%c0_162, %c0_163] : memref<128x128xbf16, #tpu.memory_space<vmem>>, vector<128x128xbf16>
      %209 = arith.truncf %207 : vector<8x128xf32> to vector<8x128xbf16>
      %cst_164 = arith.constant dense<0.000000e+00> : vector<8x128xf32>
      %210 = tpu.matmul %209, %208, %cst_164 {dimension_numbers = #tpu.dot_dimension_numbers<[1], [0], [0], [1], [0, 0, 1, 1], [], []>} : vector<8x128xbf16>, vector<128x128xbf16>, vector<8x128xf32> -> vector<8x128xf32>
      %211 = arith.addf %206, %210 : vector<8x128xf32>
      %c0_165 = arith.constant 0 : index
      %c0_166 = arith.constant 0 : index
      %c0_167 = arith.constant 0 : index
      %212 = vector.load %arg9[%c0_165, %c0_166, %c0_167] : memref<1x8x128xf32, #tpu.memory_space<vmem>>, vector<1x8x128xf32>
      %213 = vector.shape_cast %212 : vector<1x8x128xf32> to vector<8x128xf32>
      %214 = vector.shape_cast %211 : vector<8x128xf32> to vector<1x8x128xf32>
      tpu.vector_store %arg9[%c0_165, %c0_166, %c0_167], %214 {strides = array<i32>} : memref<1x8x128xf32, #tpu.memory_space<vmem>>, vector<1x8x128xf32>,
    } else {
    }
    return
  }
  func.func @transform_0(%arg0: i32, %arg1: i32, %arg2: i32) -> (i32, i32, i32) {
    %c0_i32 = arith.constant 0 : i32
    %c0_i32_0 = arith.constant 0 : i32
    return %arg0, %arg1, %c0_i32 : i32, i32, i32
  }
  func.func @transform_1(%arg0: i32, %arg1: i32, %arg2: i32) -> (i32, i32, i32) {
    %c0_i32 = arith.constant 0 : i32
    %c0_i32_0 = arith.constant 0 : i32
    return %arg0, %arg1, %c0_i32 : i32, i32, i32
  }
  func.func @transform_2(%arg0: i32, %arg1: i32, %arg2: i32) -> (i32, i32, i32) {
    %c1_i32 = arith.constant 1 : i32
    %c0_i32 = arith.constant 0 : i32
    return %arg0, %arg2, %c1_i32 : i32, i32, i32
  }
  func.func @transform_3(%arg0: i32, %arg1: i32, %arg2: i32) -> (i32, i32, i32) {
    %c2_i32 = arith.constant 2 : i32
    %c0_i32 = arith.constant 0 : i32
    return %arg0, %arg2, %c2_i32 : i32, i32, i32
  }
  func.func @transform_4(%arg0: i32, %arg1: i32, %arg2: i32) -> (i32, i32) {
    %c0_i32 = arith.constant 0 : i32
    %c0_i32_0 = arith.constant 0 : i32
    %c0_i32_1 = arith.constant 0 : i32
    return %c0_i32, %c0_i32_0 : i32, i32
  }
  func.func @transform_5(%arg0: i32, %arg1: i32, %arg2: i32) -> (i32, i32) {
    %c0_i32 = arith.constant 0 : i32
    %c0_i32_0 = arith.constant 0 : i32
    %c0_i32_1 = arith.constant 0 : i32
    return %c0_i32, %c0_i32_0 : i32, i32
  }
  func.func @transform_6(%arg0: i32, %arg1: i32, %arg2: i32) -> (i32, i32, i32) {
    %c0_i32 = arith.constant 0 : i32
    %c0_i32_0 = arith.constant 0 : i32
    return %arg0, %arg1, %c0_i32 : i32, i32, i32
  }
}

module attributes {stable_mosaic.version = 11 : i64} {
  func.func @conv_apply_kernel(%arg0: i32, %arg1: memref<16x128xf32, #tpu.memory_space<vmem>>, %arg2: memref<1x128xf32, #tpu.memory_space<vmem>>, %arg3: memref<1x128xf32, #tpu.memory_space<vmem>>, %arg4: memref<128x256xbf16, #tpu.memory_space<vmem>>, %arg5: memref<1x256xf32, #tpu.memory_space<vmem>>, %arg6: memref<1x256xf32, #tpu.memory_space<vmem>>, %arg7: memref<1x256xf32, #tpu.memory_space<vmem>>, %arg8: memref<1x256xf32, #tpu.memory_space<vmem>>, %arg9: memref<1x256xf32, #tpu.memory_space<vmem>>, %arg10: memref<1x256xf32, #tpu.memory_space<vmem>>, %arg11: memref<1x256xf32, #tpu.memory_space<vmem>>, %arg12: memref<256x128xbf16, #tpu.memory_space<vmem>>, %arg13: memref<1x128xf32, #tpu.memory_space<vmem>>, %arg14: memref<16x128xf32, #tpu.memory_space<vmem>>) attributes {dimension_semantics = [#tpu.dimension_semantics<parallel>], iteration_bounds = array<i64: 1>, scalar_prefetch = 0 : i64, scratch_operands = 0 : i64, tpu.core_type = #tpu.core_type<tc>, window_params = [{transform_indices = @transform_0, window_bounds = array<i64: 16, 128>}, {pipeline_mode = #tpu.pipeline_mode<synchronous>, transform_indices = @transform_1, window_bounds = array<i64: 1, 128>}, {pipeline_mode = #tpu.pipeline_mode<synchronous>, transform_indices = @transform_2, window_bounds = array<i64: 1, 128>}, {pipeline_mode = #tpu.pipeline_mode<synchronous>, transform_indices = @transform_3, window_bounds = array<i64: 128, 256>}, {pipeline_mode = #tpu.pipeline_mode<synchronous>, transform_indices = @transform_4, window_bounds = array<i64: 1, 256>}, {pipeline_mode = #tpu.pipeline_mode<synchronous>, transform_indices = @transform_5, window_bounds = array<i64: 1, 256>}, {pipeline_mode = #tpu.pipeline_mode<synchronous>, transform_indices = @transform_6, window_bounds = array<i64: 1, 256>}, {pipeline_mode = #tpu.pipeline_mode<synchronous>, transform_indices = @transform_7, window_bounds = array<i64: 1, 256>}, {pipeline_mode = #tpu.pipeline_mode<synchronous>, transform_indices = @transform_8, window_bounds = array<i64: 1, 256>}, {pipeline_mode = #tpu.pipeline_mode<synchronous>, transform_indices = @transform_9, window_bounds = array<i64: 1, 256>}, {pipeline_mode = #tpu.pipeline_mode<synchronous>, transform_indices = @transform_10, window_bounds = array<i64: 1, 256>}, {pipeline_mode = #tpu.pipeline_mode<synchronous>, transform_indices = @transform_11, window_bounds = array<i64: 256, 128>}, {pipeline_mode = #tpu.pipeline_mode<synchronous>, transform_indices = @transform_12, window_bounds = array<i64: 1, 128>}, {transform_indices = @transform_13, window_bounds = array<i64: 16, 128>}]} {
    %c0 = arith.constant 0 : index
    %c0_0 = arith.constant 0 : index
    %0 = vector.load %arg1[%c0, %c0_0] : memref<16x128xf32, #tpu.memory_space<vmem>>, vector<16x128xf32>
    %c0_1 = arith.constant 0 : index
    %c0_2 = arith.constant 0 : index
    %1 = vector.load %arg2[%c0_1, %c0_2] : memref<1x128xf32, #tpu.memory_space<vmem>>, vector<1x128xf32>
    %c0_3 = arith.constant 0 : index
    %c0_4 = arith.constant 0 : index
    %2 = vector.load %arg3[%c0_3, %c0_4] : memref<1x128xf32, #tpu.memory_space<vmem>>, vector<1x128xf32>
    %c0_5 = arith.constant 0 : index
    %c0_6 = arith.constant 0 : index
    %3 = vector.load %arg4[%c0_5, %c0_6] : memref<128x256xbf16, #tpu.memory_space<vmem>>, vector<128x256xbf16>
    %c0_7 = arith.constant 0 : index
    %c0_8 = arith.constant 0 : index
    %4 = vector.load %arg5[%c0_7, %c0_8] : memref<1x256xf32, #tpu.memory_space<vmem>>, vector<1x256xf32>
    %c0_9 = arith.constant 0 : index
    %c0_10 = arith.constant 0 : index
    %5 = vector.load %arg6[%c0_9, %c0_10] : memref<1x256xf32, #tpu.memory_space<vmem>>, vector<1x256xf32>
    %c0_11 = arith.constant 0 : index
    %c0_12 = arith.constant 0 : index
    %6 = vector.load %arg7[%c0_11, %c0_12] : memref<1x256xf32, #tpu.memory_space<vmem>>, vector<1x256xf32>
    %cst = arith.constant dense<0.000000e+00> : vector<16xf32>
    %7 = vector.multi_reduction <add>, %0, %cst [1] : vector<16x128xf32> to vector<16xf32>
    %8 = vector.shape_cast %7 : vector<16xf32> to vector<16x1xf32>
    %cst_13 = arith.constant 1.280000e+02 : f32
    %9 = vector.broadcast %cst_13 : f32 to vector<16x1xf32>
    %10 = arith.divf %8, %9 : vector<16x1xf32>
    %11 = vector.broadcast %10 : vector<16x1xf32> to vector<16x128xf32>
    %12 = arith.subf %0, %11 : vector<16x128xf32>
    %13 = arith.mulf %12, %12 : vector<16x128xf32>
    %cst_14 = arith.constant dense<0.000000e+00> : vector<16xf32>
    %14 = vector.multi_reduction <add>, %13, %cst_14 [1] : vector<16x128xf32> to vector<16xf32>
    %15 = vector.shape_cast %14 : vector<16xf32> to vector<16x1xf32>
    %cst_15 = arith.constant 1.280000e+02 : f32
    %16 = vector.broadcast %cst_15 : f32 to vector<16x1xf32>
    %17 = arith.divf %15, %16 : vector<16x1xf32>
    %18 = vector.broadcast %10 : vector<16x1xf32> to vector<16x128xf32>
    %19 = arith.subf %0, %18 : vector<16x128xf32>
    %cst_16 = arith.constant 9.99999974E-6 : f32
    %20 = vector.broadcast %cst_16 : f32 to vector<16x1xf32>
    %21 = arith.addf %17, %20 : vector<16x1xf32>
    %22 = math.rsqrt %21 : vector<16x1xf32>
    %23 = vector.broadcast %22 : vector<16x1xf32> to vector<16x128xf32>
    %24 = arith.mulf %19, %23 : vector<16x128xf32>
    %25 = vector.broadcast %1 : vector<1x128xf32> to vector<16x128xf32>
    %26 = arith.mulf %24, %25 : vector<16x128xf32>
    %27 = vector.broadcast %2 : vector<1x128xf32> to vector<16x128xf32>
    %28 = arith.addf %26, %27 : vector<16x128xf32>
    %29 = arith.truncf %28 : vector<16x128xf32> to vector<16x128xbf16>
    %cst_17 = arith.constant dense<0.000000e+00> : vector<16x256xf32>
    %30 = tpu.matmul %29, %3, %cst_17 {dimension_numbers = #tpu.dot_dimension_numbers<[1], [0], [0], [1], [0, 0, 1, 1], [], []>} : vector<16x128xbf16>, vector<128x256xbf16>, vector<16x256xf32> -> vector<16x256xf32>
    %31 = vector.broadcast %4 : vector<1x256xf32> to vector<16x256xf32>
    %32 = arith.addf %30, %31 : vector<16x256xf32>
    %cst_18 = arith.constant 5.000000e-01 : f32
    %33 = vector.broadcast %cst_18 : f32 to vector<16x256xf32>
    %34 = arith.mulf %33, %32 : vector<16x256xf32>
    %cst_19 = arith.constant 0.707106769 : f32
    %35 = vector.broadcast %cst_19 : f32 to vector<16x256xf32>
    %36 = arith.mulf %32, %35 : vector<16x256xf32>
    %37 = math.erf %36 : vector<16x256xf32>
    %cst_20 = arith.constant 1.000000e+00 : f32
    %38 = vector.broadcast %cst_20 : f32 to vector<16x256xf32>
    %39 = arith.addf %38, %37 : vector<16x256xf32>
    %40 = arith.mulf %34, %39 : vector<16x256xf32>
    %41 = vector.broadcast %5 : vector<1x256xf32> to vector<16x256xf32>
    %42 = arith.mulf %40, %41 : vector<16x256xf32>
    %43 = vector.broadcast %6 : vector<1x256xf32> to vector<16x256xf32>
    %44 = arith.addf %42, %43 : vector<16x256xf32>
    %c0_21 = arith.constant 0 : index
    %c0_22 = arith.constant 0 : index
    %45 = vector.load %arg8[%c0_21, %c0_22] : memref<1x256xf32, #tpu.memory_space<vmem>>, vector<1x256xf32>
    %cst_23 = arith.constant 6.250000e-02 : f32
    %46 = vector.broadcast %cst_23 : f32 to vector<1x256xf32>
    %47 = arith.mulf %45, %46 : vector<1x256xf32>
    %c0_24 = arith.constant 0 : index
    %c0_25 = arith.constant 0 : index
    %48 = vector.load %arg9[%c0_24, %c0_25] : memref<1x256xf32, #tpu.memory_space<vmem>>, vector<1x256xf32>
    %cst_26 = arith.constant 6.250000e-02 : f32
    %49 = vector.broadcast %cst_26 : f32 to vector<1x256xf32>
    %50 = arith.mulf %48, %49 : vector<1x256xf32>
    %51 = arith.mulf %47, %47 : vector<1x256xf32>
    %52 = arith.subf %50, %51 : vector<1x256xf32>
    %cst_27 = arith.constant 0.000000e+00 : f32
    %53 = vector.broadcast %cst_27 : f32 to vector<1x256xf32>
    %54 = arith.maximumf %52, %53 : vector<1x256xf32>
    %55 = vector.broadcast %47 : vector<1x256xf32> to vector<16x256xf32>
    %56 = arith.subf %44, %55 : vector<16x256xf32>
    %cst_28 = arith.constant 9.99999974E-6 : f32
    %57 = vector.broadcast %cst_28 : f32 to vector<1x256xf32>
    %58 = arith.addf %54, %57 : vector<1x256xf32>
    %59 = math.rsqrt %58 : vector<1x256xf32>
    %60 = vector.broadcast %59 : vector<1x256xf32> to vector<16x256xf32>
    %61 = arith.mulf %56, %60 : vector<16x256xf32>
    %c0_29 = arith.constant 0 : index
    %c0_30 = arith.constant 0 : index
    %62 = vector.load %arg10[%c0_29, %c0_30] : memref<1x256xf32, #tpu.memory_space<vmem>>, vector<1x256xf32>
    %63 = vector.broadcast %62 : vector<1x256xf32> to vector<16x256xf32>
    %64 = arith.mulf %61, %63 : vector<16x256xf32>
    %c0_31 = arith.constant 0 : index
    %c0_32 = arith.constant 0 : index
    %65 = vector.load %arg11[%c0_31, %c0_32] : memref<1x256xf32, #tpu.memory_space<vmem>>, vector<1x256xf32>
    %66 = vector.broadcast %65 : vector<1x256xf32> to vector<16x256xf32>
    %67 = arith.addf %64, %66 : vector<16x256xf32>
    %cst_33 = arith.constant 5.000000e-01 : f32
    %68 = vector.broadcast %cst_33 : f32 to vector<16x256xf32>
    %69 = arith.mulf %68, %67 : vector<16x256xf32>
    %cst_34 = arith.constant 0.707106769 : f32
    %70 = vector.broadcast %cst_34 : f32 to vector<16x256xf32>
    %71 = arith.mulf %67, %70 : vector<16x256xf32>
    %72 = math.erf %71 : vector<16x256xf32>
    %cst_35 = arith.constant 1.000000e+00 : f32
    %73 = vector.broadcast %cst_35 : f32 to vector<16x256xf32>
    %74 = arith.addf %73, %72 : vector<16x256xf32>
    %75 = arith.mulf %69, %74 : vector<16x256xf32>
    %c0_36 = arith.constant 0 : index
    %c0_37 = arith.constant 0 : index
    %76 = vector.load %arg12[%c0_36, %c0_37] : memref<256x128xbf16, #tpu.memory_space<vmem>>, vector<256x128xbf16>
    %77 = arith.truncf %75 : vector<16x256xf32> to vector<16x256xbf16>
    %cst_38 = arith.constant dense<0.000000e+00> : vector<16x128xf32>
    %78 = tpu.matmul %77, %76, %cst_38 {dimension_numbers = #tpu.dot_dimension_numbers<[1], [0], [0], [1], [0, 0, 1, 1], [], []>} : vector<16x256xbf16>, vector<256x128xbf16>, vector<16x128xf32> -> vector<16x128xf32>
    %c0_39 = arith.constant 0 : index
    %c0_40 = arith.constant 0 : index
    %79 = vector.load %arg13[%c0_39, %c0_40] : memref<1x128xf32, #tpu.memory_space<vmem>>, vector<1x128xf32>
    %80 = vector.broadcast %79 : vector<1x128xf32> to vector<16x128xf32>
    %81 = arith.addf %78, %80 : vector<16x128xf32>
    %82 = arith.addf %81, %0 : vector<16x128xf32>
    %c0_41 = arith.constant 0 : index
    %c0_42 = arith.constant 0 : index
    %83 = vector.load %arg14[%c0_41, %c0_42] : memref<16x128xf32, #tpu.memory_space<vmem>>, vector<16x128xf32>
    tpu.vector_store %arg14[%c0_41, %c0_42], %82 {strides = array<i32>} : memref<16x128xf32, #tpu.memory_space<vmem>>, vector<16x128xf32>,
    return
  }
  func.func @transform_0(%arg0: i32) -> (i32, i32) {
    %c0_i32 = arith.constant 0 : i32
    %c0_i32_0 = arith.constant 0 : i32
    return %arg0, %c0_i32 : i32, i32
  }
  func.func @transform_1(%arg0: i32) -> (i32, i32) {
    %c0_i32 = arith.constant 0 : i32
    %c0_i32_0 = arith.constant 0 : i32
    %c0_i32_1 = arith.constant 0 : i32
    return %c0_i32, %c0_i32_0 : i32, i32
  }
  func.func @transform_2(%arg0: i32) -> (i32, i32) {
    %c0_i32 = arith.constant 0 : i32
    %c0_i32_0 = arith.constant 0 : i32
    %c0_i32_1 = arith.constant 0 : i32
    return %c0_i32, %c0_i32_0 : i32, i32
  }
  func.func @transform_3(%arg0: i32) -> (i32, i32) {
    %c0_i32 = arith.constant 0 : i32
    %c0_i32_0 = arith.constant 0 : i32
    %c0_i32_1 = arith.constant 0 : i32
    return %c0_i32, %c0_i32_0 : i32, i32
  }
  func.func @transform_4(%arg0: i32) -> (i32, i32) {
    %c0_i32 = arith.constant 0 : i32
    %c0_i32_0 = arith.constant 0 : i32
    %c0_i32_1 = arith.constant 0 : i32
    return %c0_i32, %c0_i32_0 : i32, i32
  }
  func.func @transform_5(%arg0: i32) -> (i32, i32) {
    %c0_i32 = arith.constant 0 : i32
    %c0_i32_0 = arith.constant 0 : i32
    %c0_i32_1 = arith.constant 0 : i32
    return %c0_i32, %c0_i32_0 : i32, i32
  }
  func.func @transform_6(%arg0: i32) -> (i32, i32) {
    %c0_i32 = arith.constant 0 : i32
    %c0_i32_0 = arith.constant 0 : i32
    %c0_i32_1 = arith.constant 0 : i32
    return %c0_i32, %c0_i32_0 : i32, i32
  }
  func.func @transform_7(%arg0: i32) -> (i32, i32) {
    %c0_i32 = arith.constant 0 : i32
    %c0_i32_0 = arith.constant 0 : i32
    %c0_i32_1 = arith.constant 0 : i32
    return %c0_i32, %c0_i32_0 : i32, i32
  }
  func.func @transform_8(%arg0: i32) -> (i32, i32) {
    %c0_i32 = arith.constant 0 : i32
    %c0_i32_0 = arith.constant 0 : i32
    %c0_i32_1 = arith.constant 0 : i32
    return %c0_i32, %c0_i32_0 : i32, i32
  }
  func.func @transform_9(%arg0: i32) -> (i32, i32) {
    %c0_i32 = arith.constant 0 : i32
    %c0_i32_0 = arith.constant 0 : i32
    %c0_i32_1 = arith.constant 0 : i32
    return %c0_i32, %c0_i32_0 : i32, i32
  }
  func.func @transform_10(%arg0: i32) -> (i32, i32) {
    %c0_i32 = arith.constant 0 : i32
    %c0_i32_0 = arith.constant 0 : i32
    %c0_i32_1 = arith.constant 0 : i32
    return %c0_i32, %c0_i32_0 : i32, i32
  }
  func.func @transform_11(%arg0: i32) -> (i32, i32) {
    %c0_i32 = arith.constant 0 : i32
    %c0_i32_0 = arith.constant 0 : i32
    %c0_i32_1 = arith.constant 0 : i32
    return %c0_i32, %c0_i32_0 : i32, i32
  }
  func.func @transform_12(%arg0: i32) -> (i32, i32) {
    %c0_i32 = arith.constant 0 : i32
    %c0_i32_0 = arith.constant 0 : i32
    %c0_i32_1 = arith.constant 0 : i32
    return %c0_i32, %c0_i32_0 : i32, i32
  }
  func.func @transform_13(%arg0: i32) -> (i32, i32) {
    %c0_i32 = arith.constant 0 : i32
    %c0_i32_0 = arith.constant 0 : i32
    return %arg0, %c0_i32 : i32, i32
  }
}

module attributes {stable_mosaic.version = 11 : i64} {
  func.func @ffn_kernel(%arg0: i32, %arg1: memref<16x128xf32, #tpu.memory_space<vmem>>, %arg2: memref<1x128xf32, #tpu.memory_space<vmem>>, %arg3: memref<1x128xf32, #tpu.memory_space<vmem>>, %arg4: memref<128x256xbf16, #tpu.memory_space<vmem>>, %arg5: memref<1x256xf32, #tpu.memory_space<vmem>>, %arg6: memref<256x128xbf16, #tpu.memory_space<vmem>>, %arg7: memref<1x128xf32, #tpu.memory_space<vmem>>, %arg8: memref<1x128xf32, #tpu.memory_space<vmem>>, %arg9: memref<1x128xf32, #tpu.memory_space<vmem>>, %arg10: memref<16x128xf32, #tpu.memory_space<vmem>>) attributes {dimension_semantics = [#tpu.dimension_semantics<parallel>], iteration_bounds = array<i64: 1>, scalar_prefetch = 0 : i64, scratch_operands = 0 : i64, tpu.core_type = #tpu.core_type<tc>, window_params = [{transform_indices = @transform_0, window_bounds = array<i64: 16, 128>}, {pipeline_mode = #tpu.pipeline_mode<synchronous>, transform_indices = @transform_1, window_bounds = array<i64: 1, 128>}, {pipeline_mode = #tpu.pipeline_mode<synchronous>, transform_indices = @transform_2, window_bounds = array<i64: 1, 128>}, {pipeline_mode = #tpu.pipeline_mode<synchronous>, transform_indices = @transform_3, window_bounds = array<i64: 128, 256>}, {pipeline_mode = #tpu.pipeline_mode<synchronous>, transform_indices = @transform_4, window_bounds = array<i64: 1, 256>}, {pipeline_mode = #tpu.pipeline_mode<synchronous>, transform_indices = @transform_5, window_bounds = array<i64: 256, 128>}, {pipeline_mode = #tpu.pipeline_mode<synchronous>, transform_indices = @transform_6, window_bounds = array<i64: 1, 128>}, {pipeline_mode = #tpu.pipeline_mode<synchronous>, transform_indices = @transform_7, window_bounds = array<i64: 1, 128>}, {pipeline_mode = #tpu.pipeline_mode<synchronous>, transform_indices = @transform_8, window_bounds = array<i64: 1, 128>}, {transform_indices = @transform_9, window_bounds = array<i64: 16, 128>}]} {
    %c0 = arith.constant 0 : index
    %c0_0 = arith.constant 0 : index
    %0 = vector.load %arg1[%c0, %c0_0] : memref<16x128xf32, #tpu.memory_space<vmem>>, vector<16x128xf32>
    %c0_1 = arith.constant 0 : index
    %c0_2 = arith.constant 0 : index
    %1 = vector.load %arg2[%c0_1, %c0_2] : memref<1x128xf32, #tpu.memory_space<vmem>>, vector<1x128xf32>
    %c0_3 = arith.constant 0 : index
    %c0_4 = arith.constant 0 : index
    %2 = vector.load %arg3[%c0_3, %c0_4] : memref<1x128xf32, #tpu.memory_space<vmem>>, vector<1x128xf32>
    %cst = arith.constant dense<0.000000e+00> : vector<16xf32>
    %3 = vector.multi_reduction <add>, %0, %cst [1] : vector<16x128xf32> to vector<16xf32>
    %4 = vector.shape_cast %3 : vector<16xf32> to vector<16x1xf32>
    %cst_5 = arith.constant 1.280000e+02 : f32
    %5 = vector.broadcast %cst_5 : f32 to vector<16x1xf32>
    %6 = arith.divf %4, %5 : vector<16x1xf32>
    %7 = vector.broadcast %6 : vector<16x1xf32> to vector<16x128xf32>
    %8 = arith.subf %0, %7 : vector<16x128xf32>
    %9 = arith.mulf %8, %8 : vector<16x128xf32>
    %cst_6 = arith.constant dense<0.000000e+00> : vector<16xf32>
    %10 = vector.multi_reduction <add>, %9, %cst_6 [1] : vector<16x128xf32> to vector<16xf32>
    %11 = vector.shape_cast %10 : vector<16xf32> to vector<16x1xf32>
    %cst_7 = arith.constant 1.280000e+02 : f32
    %12 = vector.broadcast %cst_7 : f32 to vector<16x1xf32>
    %13 = arith.divf %11, %12 : vector<16x1xf32>
    %14 = vector.broadcast %6 : vector<16x1xf32> to vector<16x128xf32>
    %15 = arith.subf %0, %14 : vector<16x128xf32>
    %cst_8 = arith.constant 9.99999974E-6 : f32
    %16 = vector.broadcast %cst_8 : f32 to vector<16x1xf32>
    %17 = arith.addf %13, %16 : vector<16x1xf32>
    %18 = math.rsqrt %17 : vector<16x1xf32>
    %19 = vector.broadcast %18 : vector<16x1xf32> to vector<16x128xf32>
    %20 = arith.mulf %15, %19 : vector<16x128xf32>
    %21 = vector.broadcast %1 : vector<1x128xf32> to vector<16x128xf32>
    %22 = arith.mulf %20, %21 : vector<16x128xf32>
    %23 = vector.broadcast %2 : vector<1x128xf32> to vector<16x128xf32>
    %24 = arith.addf %22, %23 : vector<16x128xf32>
    %c0_9 = arith.constant 0 : index
    %c0_10 = arith.constant 0 : index
    %25 = vector.load %arg4[%c0_9, %c0_10] : memref<128x256xbf16, #tpu.memory_space<vmem>>, vector<128x256xbf16>
    %26 = arith.truncf %24 : vector<16x128xf32> to vector<16x128xbf16>
    %cst_11 = arith.constant dense<0.000000e+00> : vector<16x256xf32>
    %27 = tpu.matmul %26, %25, %cst_11 {dimension_numbers = #tpu.dot_dimension_numbers<[1], [0], [0], [1], [0, 0, 1, 1], [], []>} : vector<16x128xbf16>, vector<128x256xbf16>, vector<16x256xf32> -> vector<16x256xf32>
    %c0_12 = arith.constant 0 : index
    %c0_13 = arith.constant 0 : index
    %28 = vector.load %arg5[%c0_12, %c0_13] : memref<1x256xf32, #tpu.memory_space<vmem>>, vector<1x256xf32>
    %29 = vector.broadcast %28 : vector<1x256xf32> to vector<16x256xf32>
    %30 = arith.addf %27, %29 : vector<16x256xf32>
    %cst_14 = arith.constant 5.000000e-01 : f32
    %31 = vector.broadcast %cst_14 : f32 to vector<16x256xf32>
    %32 = arith.mulf %31, %30 : vector<16x256xf32>
    %cst_15 = arith.constant 0.707106769 : f32
    %33 = vector.broadcast %cst_15 : f32 to vector<16x256xf32>
    %34 = arith.mulf %30, %33 : vector<16x256xf32>
    %35 = math.erf %34 : vector<16x256xf32>
    %cst_16 = arith.constant 1.000000e+00 : f32
    %36 = vector.broadcast %cst_16 : f32 to vector<16x256xf32>
    %37 = arith.addf %36, %35 : vector<16x256xf32>
    %38 = arith.mulf %32, %37 : vector<16x256xf32>
    %c0_17 = arith.constant 0 : index
    %c0_18 = arith.constant 0 : index
    %39 = vector.load %arg6[%c0_17, %c0_18] : memref<256x128xbf16, #tpu.memory_space<vmem>>, vector<256x128xbf16>
    %40 = arith.truncf %38 : vector<16x256xf32> to vector<16x256xbf16>
    %cst_19 = arith.constant dense<0.000000e+00> : vector<16x128xf32>
    %41 = tpu.matmul %40, %39, %cst_19 {dimension_numbers = #tpu.dot_dimension_numbers<[1], [0], [0], [1], [0, 0, 1, 1], [], []>} : vector<16x256xbf16>, vector<256x128xbf16>, vector<16x128xf32> -> vector<16x128xf32>
    %c0_20 = arith.constant 0 : index
    %c0_21 = arith.constant 0 : index
    %42 = vector.load %arg7[%c0_20, %c0_21] : memref<1x128xf32, #tpu.memory_space<vmem>>, vector<1x128xf32>
    %43 = vector.broadcast %42 : vector<1x128xf32> to vector<16x128xf32>
    %44 = arith.addf %41, %43 : vector<16x128xf32>
    %cst_22 = arith.constant 5.000000e-01 : f32
    %45 = vector.broadcast %cst_22 : f32 to vector<16x128xf32>
    %46 = arith.mulf %45, %44 : vector<16x128xf32>
    %47 = arith.addf %46, %0 : vector<16x128xf32>
    %c0_23 = arith.constant 0 : index
    %c0_24 = arith.constant 0 : index
    %48 = vector.load %arg8[%c0_23, %c0_24] : memref<1x128xf32, #tpu.memory_space<vmem>>, vector<1x128xf32>
    %c0_25 = arith.constant 0 : index
    %c0_26 = arith.constant 0 : index
    %49 = vector.load %arg9[%c0_25, %c0_26] : memref<1x128xf32, #tpu.memory_space<vmem>>, vector<1x128xf32>
    %cst_27 = arith.constant dense<0.000000e+00> : vector<16xf32>
    %50 = vector.multi_reduction <add>, %47, %cst_27 [1] : vector<16x128xf32> to vector<16xf32>
    %51 = vector.shape_cast %50 : vector<16xf32> to vector<16x1xf32>
    %cst_28 = arith.constant 1.280000e+02 : f32
    %52 = vector.broadcast %cst_28 : f32 to vector<16x1xf32>
    %53 = arith.divf %51, %52 : vector<16x1xf32>
    %54 = vector.broadcast %53 : vector<16x1xf32> to vector<16x128xf32>
    %55 = arith.subf %47, %54 : vector<16x128xf32>
    %56 = arith.mulf %55, %55 : vector<16x128xf32>
    %cst_29 = arith.constant dense<0.000000e+00> : vector<16xf32>
    %57 = vector.multi_reduction <add>, %56, %cst_29 [1] : vector<16x128xf32> to vector<16xf32>
    %58 = vector.shape_cast %57 : vector<16xf32> to vector<16x1xf32>
    %cst_30 = arith.constant 1.280000e+02 : f32
    %59 = vector.broadcast %cst_30 : f32 to vector<16x1xf32>
    %60 = arith.divf %58, %59 : vector<16x1xf32>
    %61 = vector.broadcast %53 : vector<16x1xf32> to vector<16x128xf32>
    %62 = arith.subf %47, %61 : vector<16x128xf32>
    %cst_31 = arith.constant 9.99999974E-6 : f32
    %63 = vector.broadcast %cst_31 : f32 to vector<16x1xf32>
    %64 = arith.addf %60, %63 : vector<16x1xf32>
    %65 = math.rsqrt %64 : vector<16x1xf32>
    %66 = vector.broadcast %65 : vector<16x1xf32> to vector<16x128xf32>
    %67 = arith.mulf %62, %66 : vector<16x128xf32>
    %68 = vector.broadcast %48 : vector<1x128xf32> to vector<16x128xf32>
    %69 = arith.mulf %67, %68 : vector<16x128xf32>
    %70 = vector.broadcast %49 : vector<1x128xf32> to vector<16x128xf32>
    %71 = arith.addf %69, %70 : vector<16x128xf32>
    %c0_32 = arith.constant 0 : index
    %c0_33 = arith.constant 0 : index
    %72 = vector.load %arg10[%c0_32, %c0_33] : memref<16x128xf32, #tpu.memory_space<vmem>>, vector<16x128xf32>
    tpu.vector_store %arg10[%c0_32, %c0_33], %71 {strides = array<i32>} : memref<16x128xf32, #tpu.memory_space<vmem>>, vector<16x128xf32>,
    return
  }
  func.func @transform_0(%arg0: i32) -> (i32, i32) {
    %c0_i32 = arith.constant 0 : i32
    %c0_i32_0 = arith.constant 0 : i32
    return %arg0, %c0_i32 : i32, i32
  }
  func.func @transform_1(%arg0: i32) -> (i32, i32) {
    %c0_i32 = arith.constant 0 : i32
    %c0_i32_0 = arith.constant 0 : i32
    %c0_i32_1 = arith.constant 0 : i32
    return %c0_i32, %c0_i32_0 : i32, i32
  }
  func.func @transform_2(%arg0: i32) -> (i32, i32) {
    %c0_i32 = arith.constant 0 : i32
    %c0_i32_0 = arith.constant 0 : i32
    %c0_i32_1 = arith.constant 0 : i32
    return %c0_i32, %c0_i32_0 : i32, i32
  }
  func.func @transform_3(%arg0: i32) -> (i32, i32) {
    %c0_i32 = arith.constant 0 : i32
    %c0_i32_0 = arith.constant 0 : i32
    %c0_i32_1 = arith.constant 0 : i32
    return %c0_i32, %c0_i32_0 : i32, i32
  }
  func.func @transform_4(%arg0: i32) -> (i32, i32) {
    %c0_i32 = arith.constant 0 : i32
    %c0_i32_0 = arith.constant 0 : i32
    %c0_i32_1 = arith.constant 0 : i32
    return %c0_i32, %c0_i32_0 : i32, i32
  }
  func.func @transform_5(%arg0: i32) -> (i32, i32) {
    %c0_i32 = arith.constant 0 : i32
    %c0_i32_0 = arith.constant 0 : i32
    %c0_i32_1 = arith.constant 0 : i32
    return %c0_i32, %c0_i32_0 : i32, i32
  }
  func.func @transform_6(%arg0: i32) -> (i32, i32) {
    %c0_i32 = arith.constant 0 : i32
    %c0_i32_0 = arith.constant 0 : i32
    %c0_i32_1 = arith.constant 0 : i32
    return %c0_i32, %c0_i32_0 : i32, i32
  }
  func.func @transform_7(%arg0: i32) -> (i32, i32) {
    %c0_i32 = arith.constant 0 : i32
    %c0_i32_0 = arith.constant 0 : i32
    %c0_i32_1 = arith.constant 0 : i32
    return %c0_i32, %c0_i32_0 : i32, i32
  }
  func.func @transform_8(%arg0: i32) -> (i32, i32) {
    %c0_i32 = arith.constant 0 : i32
    %c0_i32_0 = arith.constant 0 : i32
    %c0_i32_1 = arith.constant 0 : i32
    return %c0_i32, %c0_i32_0 : i32, i32
  }
  func.func @transform_9(%arg0: i32) -> (i32, i32) {
    %c0_i32 = arith.constant 0 : i32
    %c0_i32_0 = arith.constant 0 : i32
    return %arg0, %c0_i32 : i32, i32
  }
}

</mosaic_0001>

<llo_original>
// kernel: conformer_block.7
$region0: #{conformer_block.7}
  #allocation0 [shape = 'u32[]', space=smem, size = 0x4, offset = 0x4, fixed_abs, tag = 'smem constant byte address 0x4 - core index']
  #allocation1 [shape = 'u32[144,128]{1,0:T(1,128)}', space=vmem, size = 0x12000, scoped, tag = 'internal scratch']
  %s0 = inlined_call_operand.vmem [shape: f32[2,8,128], index: 0, kind: input, shape index: {}]
  %s1 = inlined_call_operand.vmem [shape: f32[1,128], index: 1, kind: input, shape index: {}]
  %s2 = inlined_call_operand.vmem [shape: f32[1,128], index: 2, kind: input, shape index: {}]
  %s3 = inlined_call_operand.vmem [shape: f32[8,128], index: 3, kind: input, shape index: {}]
  %s4 = inlined_call_operand.vmem [shape: bf16[128,384], index: 4, kind: input, shape index: {}]
  %s5 = inlined_call_operand.vmem [shape: f32[1,384], index: 5, kind: input, shape index: {}]
  %s6 = inlined_call_operand.vmem [shape: bf16[2,8,384], index: 6, kind: output, shape index: {}]
  %s7 = sld [smem:[#allocation0]]
  $region57: #{conformer_block.7} parent=0
    _
  %s9 = ssub.s32 1, %s7
  %s10 = scalar_select 0, %s9, %s7
  loop: start=0, step=1, limit=4
  $region2: #{conformer_block.7} parent=0 // loop_pre_header
    _
  $region3: #{conformer_block.7} parent=0 // loop_header
    %s12 = sphi 0, %s16
    %p13 = scmp.ge.s32.totalorder %s12, 4
    %s19 = sphi 0, %s31
    %s20 = sphi 0, %s27
    %s21 = sphi 0, %s19
    %s22 = sphi 0, %s20
    %s23 = sphi 0, %s21
    %s24 = sphi 0, %s22
    %s36 = sphi 0, %s38
    %s39 = sphi 0, %s36
    %s40 = sphi 0, %s39
    %s56 = sphi 0, %s40
    %s60 = sphi 0, %s60
    %s62 = sphi 0, %s60
    %s63 = sphi 0, %s62
    %s77 = sphi 0, %s63
    %s81 = sphi 0, %s81
    %s83 = sphi 0, %s81
    %s84 = sphi 0, %s83
    %s98 = sphi 0, %s84
    %s104 = sphi 0, %s106
    %s107 = sphi 0, %s104
    %s108 = sphi 0, %s107
    %s124 = sphi 0, %s108
    %s128 = sphi 0, %s128
    %s130 = sphi 0, %s128
    %s131 = sphi 0, %s130
    %s145 = sphi 0, %s131
    %s149 = sphi 0, %s149
    %s151 = sphi 0, %s149
    %s152 = sphi 0, %s151
    %s166 = sphi 0, %s152
    %s174 = sphi 0, %s176
    %s177 = sphi 0, %s174
    %s178 = sphi 0, %s177
    %s194 = sphi 0, %s178
  $region4: #{conformer_block.7} parent=0 // loop_header_branch
    %15 = sbr.rel (%p13) target = $region8
  $region5: #{conformer_block.7} parent=0 // loop_body
    %s17 = ssub.s32 %s12, 1
    %s18 = ssub.s32 %s12, 2
    %s25 = sadd.s32 1, %s20
    %p26 = scmp.ge.s32.totalorder %s25, 1
    %s27 = scalar_select %p26, 0, %s25
    %s28 = sadd.s32 1, %s19
    %s29 = scalar_select %p26, %s28, %s19
    %p30 = scmp.ge.s32.totalorder %s29, 2
    %s31 = scalar_select %p30, 0, %s29
    %s32 = ssub.s32 %s19, %s31
    %s33 = ssub.s32 %s20, %s27
    %s34 = sor.u32 %s32, %s33
    %p35 = scmp.eq.s32.totalorder %s34, 0
    %s37 = sadd.s32 %s36, 1
    %s38 = scalar_select %p35, %s36, %s37
    %p41 = pneg %p35
    %p42 = scmp.eq.s32.totalorder %s12, 1
    %p43 = por %p41, %p42
    %p44 = scmp.ne.s32.totalorder %s36, %s39
    %p45 = scmp.eq.s32.totalorder %s12, 0
    %p46 = por %p44, %p45
    %p47 = scmp.ne.s32.totalorder %s36, %s39
    %p48 = scmp.eq.s32.totalorder %s17, 1
    %p49 = por %p47, %p48
    %p50 = scmp.ne.s32.totalorder %s39, %s40
    %p51 = scmp.eq.s32.totalorder %s17, 0
    %p52 = por %p50, %p51
    %p53 = scmp.ne.s32.totalorder %s39, %s40
    %p54 = scmp.eq.s32.totalorder %s18, 1
    %p55 = por %p53, %p54
    %p57 = scmp.ne.s32.totalorder %s40, %s56
    %p58 = scmp.eq.s32.totalorder %s18, 0
    %p59 = por %p57, %p58
    %s61 = sadd.s32 %s60, 1
    %p64 = scmp.eq.s32.totalorder %s12, 1
    %p65 = scmp.ne.s32.totalorder %s60, %s62
    %p66 = scmp.eq.s32.totalorder %s12, 0
    %p67 = por %p65, %p66
    %p68 = scmp.ne.s32.totalorder %s60, %s62
    %p69 = scmp.eq.s32.totalorder %s17, 1
    %p70 = por %p68, %p69
    %p71 = scmp.ne.s32.totalorder %s62, %s63
    %p72 = scmp.eq.s32.totalorder %s17, 0
    %p73 = por %p71, %p72
    %p74 = scmp.ne.s32.totalorder %s62, %s63
    %p75 = scmp.eq.s32.totalorder %s18, 1
    %p76 = por %p74, %p75
    %p78 = scmp.ne.s32.totalorder %s63, %s77
    %p79 = scmp.eq.s32.totalorder %s18, 0
    %p80 = por %p78, %p79
    %s82 = sadd.s32 %s81, 1
    %p85 = scmp.eq.s32.totalorder %s12, 1
    %p86 = scmp.ne.s32.totalorder %s81, %s83
    %p87 = scmp.eq.s32.totalorder %s12, 0
    %p88 = por %p86, %p87
    %p89 = scmp.ne.s32.totalorder %s81, %s83
    %p90 = scmp.eq.s32.totalorder %s17, 1
    %p91 = por %p89, %p90
    %p92 = scmp.ne.s32.totalorder %s83, %s84
    %p93 = scmp.eq.s32.totalorder %s17, 0
    %p94 = por %p92, %p93
    %p95 = scmp.ne.s32.totalorder %s83, %s84
    %p96 = scmp.eq.s32.totalorder %s18, 1
    %p97 = por %p95, %p96
    %p99 = scmp.ne.s32.totalorder %s84, %s98
    %p100 = scmp.eq.s32.totalorder %s18, 0
    %p101 = por %p99, %p100
    %s102 = ssub.s32 %s20, %s27
    %p103 = scmp.eq.s32.totalorder %s102, 0
    %s105 = sadd.s32 %s104, 1
    %s106 = scalar_select %p103, %s104, %s105
    %p109 = pneg %p103
    %p110 = scmp.eq.s32.totalorder %s12, 1
    %p111 = por %p109, %p110
    %p112 = scmp.ne.s32.totalorder %s104, %s107
    %p113 = scmp.eq.s32.totalorder %s12, 0
    %p114 = por %p112, %p113
    %p115 = scmp.ne.s32.totalorder %s104, %s107
    %p116 = scmp.eq.s32.totalorder %s17, 1
    %p117 = por %p115, %p116
    %p118 = scmp.ne.s32.totalorder %s107, %s108
    %p119 = scmp.eq.s32.totalorder %s17, 0
    %p120 = por %p118, %p119
    %p121 = scmp.ne.s32.totalorder %s107, %s108
    %p122 = scmp.eq.s32.totalorder %s18, 1
    %p123 = por %p121, %p122
    %p125 = scmp.ne.s32.totalorder %s108, %s124
    %p126 = scmp.eq.s32.totalorder %s18, 0
    %p127 = por %p125, %p126
    %s129 = sadd.s32 %s128, 1
    %p132 = scmp.eq.s32.totalorder %s12, 1
    %p133 = scmp.ne.s32.totalorder %s128, %s130
    %p134 = scmp.eq.s32.totalorder %s12, 0
    %p135 = por %p133, %p134
    %p136 = scmp.ne.s32.totalorder %s128, %s130
    %p137 = scmp.eq.s32.totalorder %s17, 1
    %p138 = por %p136, %p137
    %p139 = scmp.ne.s32.totalorder %s130, %s131
    %p140 = scmp.eq.s32.totalorder %s17, 0
    %p141 = por %p139, %p140
    %p142 = scmp.ne.s32.totalorder %s130, %s131
    %p143 = scmp.eq.s32.totalorder %s18, 1
    %p144 = por %p142, %p143
    %p146 = scmp.ne.s32.totalorder %s131, %s145
    %p147 = scmp.eq.s32.totalorder %s18, 0
    %p148 = por %p146, %p147
    %s150 = sadd.s32 %s149, 1
    %p153 = scmp.eq.s32.totalorder %s12, 1
    %p154 = scmp.ne.s32.totalorder %s149, %s151
    %p155 = scmp.eq.s32.totalorder %s12, 0
    %p156 = por %p154, %p155
    %p157 = scmp.ne.s32.totalorder %s149, %s151
    %p158 = scmp.eq.s32.totalorder %s17, 1
    %p159 = por %p157, %p158
    %p160 = scmp.ne.s32.totalorder %s151, %s152
    %p161 = scmp.eq.s32.totalorder %s17, 0
    %p162 = por %p160, %p161
    %p163 = scmp.ne.s32.totalorder %s151, %s152
    %p164 = scmp.eq.s32.totalorder %s18, 1
    %p165 = por %p163, %p164
    %p167 = scmp.ne.s32.totalorder %s152, %s166
    %p168 = scmp.eq.s32.totalorder %s18, 0
    %p169 = por %p167, %p168
    %s170 = ssub.s32 %s19, %s31
    %s171 = ssub.s32 %s20, %s27
    %s172 = sor.u32 %s170, %s171
    %p173 = scmp.eq.s32.totalorder %s172, 0
    %s175 = sadd.s32 %s174, 1
    %s176 = scalar_select %p173, %s174, %s175
    %p179 = pneg %p173
    %p180 = scmp.eq.s32.totalorder %s12, 1
    %p181 = por %p179, %p180
    %p182 = scmp.ne.s32.totalorder %s174, %s177
    %p183 = scmp.eq.s32.totalorder %s12, 0
    %p184 = por %p182, %p183
    %p185 = scmp.ne.s32.totalorder %s174, %s177
    %p186 = scmp.eq.s32.totalorder %s17, 1
    %p187 = por %p185, %p186
    %p188 = scmp.ne.s32.totalorder %s177, %s178
    %p189 = scmp.eq.s32.totalorder %s17, 0
    %p190 = por %p188, %p189
    %p191 = scmp.ne.s32.totalorder %s177, %s178
    %p192 = scmp.eq.s32.totalorder %s18, 1
    %p193 = por %p191, %p192
    %p195 = scmp.ne.s32.totalorder %s178, %s194
    %p196 = scmp.eq.s32.totalorder %s18, 0
    %p197 = por %p195, %p196
    %p198 = scmp.le.s32.totalorder 1, %s12
    %p199 = scmp.lt.s32.totalorder %s12, 3
    %p200 = pnand %p198, %p199
    %p201 = pneg %p200
    // Predicated region
    $region9: #{conformer_block.7} parent=5 // pred_check
      _
    $region10: #{conformer_block.7} parent=5 // pred_check_branch
      %203 = sbr.rel (%p200) target = $region12
    $region11: #{conformer_block.7} parent=5 // pred_region
      %s204 = ssub.s32 %s12, 1
      // Predicated region
      $region13: #{conformer_block.7} parent=11 // pred_check
        %p205 = pneg %p73
      $region14: #{conformer_block.7} parent=11 // pred_check_branch
        %207 = sbr.rel (%p205) target = $region16
      $region15: #{conformer_block.7} parent=11 // pred_region
        _
      $region16: #{conformer_block.7} parent=11 // pred_fallthru
        _
      // Predicated region
      $region17: #{conformer_block.7} parent=11 // pred_check
        %p208 = pneg %p94
      $region18: #{conformer_block.7} parent=11 // pred_check_branch
        %210 = sbr.rel (%p208) target = $region20
      $region19: #{conformer_block.7} parent=11 // pred_region
        _
      $region20: #{conformer_block.7} parent=11 // pred_fallthru
        _
      // Predicated region
      $region21: #{conformer_block.7} parent=11 // pred_check
        %p211 = pneg %p120
      $region22: #{conformer_block.7} parent=11 // pred_check_branch
        %213 = sbr.rel (%p211) target = $region24
      $region23: #{conformer_block.7} parent=11 // pred_region
        %p214 = scmp.lt.s32.totalorder %s22, 0
        %s215 = scalar_select %p214, %s22, 0
        %s216 = smul.addr %s215, 8
        %s217 = scalar_lea.vmem %s3, %s216
      $region24: #{conformer_block.7} parent=11 // pred_fallthru
        _
      // Predicated region
      $region25: #{conformer_block.7} parent=11 // pred_check
        %p218 = pneg %p141
      $region26: #{conformer_block.7} parent=11 // pred_check_branch
        %220 = sbr.rel (%p218) target = $region28
      $region27: #{conformer_block.7} parent=11 // pred_region
        _
      $region28: #{conformer_block.7} parent=11 // pred_fallthru
        _
      // Predicated region
      $region29: #{conformer_block.7} parent=11 // pred_check
        %p221 = pneg %p162
      $region30: #{conformer_block.7} parent=11 // pred_check_branch
        %223 = sbr.rel (%p221) target = $region32
      $region31: #{conformer_block.7} parent=11 // pred_region
        _
      $region32: #{conformer_block.7} parent=11 // pred_fallthru
        _
    $region12: #{conformer_block.7} parent=5 // pred_fallthru
      _
    %p224 = scmp.lt.s32.totalorder %s12, 2
    // Predicated region
    $region33: #{conformer_block.7} parent=5 // pred_check
      %p225 = pneg %p224
    $region34: #{conformer_block.7} parent=5 // pred_check_branch
      %227 = sbr.rel (%p225) target = $region36
    $region35: #{conformer_block.7} parent=5 // pred_region
      // Predicated region
      $region37: #{conformer_block.7} parent=35 // pred_check
        %p228 = pneg %p46
      $region38: #{conformer_block.7} parent=35 // pred_check_branch
        %230 = sbr.rel (%p228) target = $region40
      $region39: #{conformer_block.7} parent=35 // pred_region
        %p231 = scmp.lt.s32.totalorder %s19, 1
        %s232 = scalar_select %p231, %s19, 1
        %p233 = scmp.lt.s32.totalorder %s20, 0
        %s234 = scalar_select %p233, %s20, 0
        %s235 = sadd.s32 %s234, %s232
        %s236 = smul.addr %s235, 8
        %s237 = scalar_lea.vmem %s0, %s236
      $region40: #{conformer_block.7} parent=35 // pred_fallthru
        _
    $region36: #{conformer_block.7} parent=5 // pred_fallthru
      _
    %p238 = scmp.le.s32.totalorder 1, %s12
    %p239 = scmp.lt.s32.totalorder %s12, 3
    %p240 = pnand %p238, %p239
    %p241 = pneg %p240
    // Predicated region
    $region41: #{conformer_block.7} parent=5 // pred_check
      _
    $region42: #{conformer_block.7} parent=5 // pred_check_branch
      %243 = sbr.rel (%p240) target = $region44
    $region43: #{conformer_block.7} parent=5 // pred_region
      %s244 = ssub.s32 %s12, 1
      %p245 = scmp.lt.s32.totalorder %s21, 1
      %s246 = scalar_select %p245, %s21, 1
      %p247 = scmp.lt.s32.totalorder %s22, 0
      %s248 = scalar_select %p247, %s22, 0
      %s249 = sadd.s32 %s248, %s246
      %s250 = smul.addr %s249, 8
      %s251 = scalar_lea.vmem %s0, %s250
      %p252 = pneg %p52
      %p253 = pneg %p49
      %p254 = pneg %p73
      %p255 = pneg %p70
      %p256 = pneg %p94
      %p257 = pneg %p91
      %p258 = scmp.lt.s32.totalorder %s22, 0
      %s259 = scalar_select %p258, %s22, 0
      %s260 = smul.addr %s259, 8
      %s261 = scalar_lea.vmem %s3, %s260
      %p262 = pneg %p120
      %p263 = pneg %p117
      %p264 = pneg %p141
      %p265 = pneg %p138
      %p266 = pneg %p162
      %p267 = pneg %p159
      %p268 = pneg %p190
      %p269 = pneg %p187
      %p270 = scmp.lt.s32.totalorder %s21, 1
      %s271 = scalar_select %p270, %s21, 1
      %p272 = scmp.lt.s32.totalorder %s22, 0
      %s273 = scalar_select %p272, %s22, 0
      %s274 = smul.addr %s273, 3
      %s275 = smul.addr %s271, 3
      %s276 = sadd.s32 %s274, %s275
      %s277 = smul.addr %s276, 4
      %s278 = scalar_lea.vmem %s6, %s277
      %p279 = scmp.lt.s32.totalorder %s21, 1
      %s280 = scalar_select %p279, %s21, 1
      %p281 = scmp.lt.s32.totalorder %s22, 0
      %s282 = scalar_select %p281, %s22, 0
      %s283 = sadd.s32 %s282, %s280
      %s284 = smul.addr %s283, 8
      %s285 = scalar_lea.vmem %s0, %s284
      %p286 = scmp.lt.s32.totalorder %s22, 0
      %s287 = scalar_select %p286, %s22, 0
      %s288 = smul.addr %s287, 8
      %s289 = scalar_lea.vmem %s3, %s288
      %p290 = scmp.lt.s32.totalorder %s21, 1
      %s291 = scalar_select %p290, %s21, 1
      %p292 = scmp.lt.s32.totalorder %s22, 0
      %s293 = scalar_select %p292, %s22, 0
      %s294 = smul.addr %s293, 3
      %s295 = smul.addr %s291, 3
      %s296 = sadd.s32 %s294, %s295
      %s297 = smul.addr %s296, 4
      %s298 = scalar_lea.vmem %s6, %s297
      %v300 = vld [vmem:[%s285] sm:$0xff]
      %v301 = vld [vmem:[%s1] sm:$0x1]
      %v302 = vld [vmem:[%s2] sm:$0x1]
      %303 = vadd.xlane.f32.xlu0 %v300
      %v304 = vpop.xlane.xlu0 %303
      %v305 = vrcp.pop 128.0
      %v306 = vmul.f32 %v304, %v305
      %v307 = vsub.f32 %v300, %v306
      %v308 = vmul.f32 %v307, %v307
      %309 = vadd.xlane.f32.xlu0 %v308
      %v310 = vpop.xlane.xlu0 %309
      %v311 = vmul.f32 %v310, %v305
      %v312 = vadd.f32 %v311, 1e-05
      %v313 = vrsqrt.pop %v312
      %v314 = vmul.f32 %v307, %v313
      %v316 = vlaneseq
      %v317 = vshrl.u32 %v316, 7
      %v318 = vsub.s32 0, %v317
      %v319 = vrot.slane %v301, %v318
      %v321 = vmul.f32 %v314, %v319
      %v323 = vlaneseq
      %v324 = vshrl.u32 %v323, 7
      %v325 = vsub.s32 0, %v324
      %v326 = vrot.slane %v302, %v325
      %v328 = vadd.f32 %v321, %v326
      %v329 = vld [vmem:[%s289] sm:$0xff]
      %v330 = vadd.f32 %v328, %v329
      %v331 = vld [vmem:[%s4] sm:$0xff]
      %v332 = vld [vmem:[%s4 + $0x8] sm:$0xf]
      %v333 = vld [vmem:[%s4 + $0xc] sm:$0xff]
      %v334 = vld [vmem:[%s4 + $0x14] sm:$0xf]
      %v335 = vld [vmem:[%s4 + $0x18] sm:$0xff]
      %v336 = vld [vmem:[%s4 + $0x20] sm:$0xf]
      %v337 = vld [vmem:[%s4 + $0x24] sm:$0xff]
      %v338 = vld [vmem:[%s4 + $0x2c] sm:$0xf]
      %v339 = vld [vmem:[%s4 + $0x30] sm:$0xff]
      %v340 = vld [vmem:[%s4 + $0x38] sm:$0xf]
      %v341 = vld [vmem:[%s4 + $0x3c] sm:$0xff]
      %v342 = vld [vmem:[%s4 + $0x44] sm:$0xf]
      %v343 = vld [vmem:[%s4 + $0x48] sm:$0xff]
      %v344 = vld [vmem:[%s4 + $0x50] sm:$0xf]
      %v345 = vld [vmem:[%s4 + $0x54] sm:$0xff]
      %v346 = vld [vmem:[%s4 + $0x5c] sm:$0xf]
      %v347 = vld [vmem:[%s4 + $0x60] sm:$0xff]
      %v348 = vld [vmem:[%s4 + $0x68] sm:$0xf]
      %v349 = vld [vmem:[%s4 + $0x6c] sm:$0xff]
      %v350 = vld [vmem:[%s4 + $0x74] sm:$0xf]
      %v351 = vld [vmem:[%s4 + $0x78] sm:$0xff]
      %v352 = vld [vmem:[%s4 + $0x80] sm:$0xf]
      %v353 = vld [vmem:[%s4 + $0x84] sm:$0xff]
      %v354 = vld [vmem:[%s4 + $0x8c] sm:$0xf]
      %v355 = vld [vmem:[%s4 + $0x90] sm:$0xff]
      %v356 = vld [vmem:[%s4 + $0x98] sm:$0xf]
      %v357 = vld [vmem:[%s4 + $0x9c] sm:$0xff]
      %v358 = vld [vmem:[%s4 + $0xa4] sm:$0xf]
      %v359 = vld [vmem:[%s4 + $0xa8] sm:$0xff]
      %v360 = vld [vmem:[%s4 + $0xb0] sm:$0xf]
      %v361 = vld [vmem:[%s4 + $0xb4] sm:$0xff]
      %v362 = vld [vmem:[%s4 + $0xbc] sm:$0xf]
      %v363 = vpack.c.bf16 %v330, %v330
      %v364 = vld [vmem:[%s5] sm:$0x7]
      %v366 = vlaneseq
      %v367 = vshrl.u32 %v366, 7
      %v368 = vsub.s32 0, %v367
      %v369 = vrot.slane %v364, %v368
      %v370 = vlaneseq
      %v371 = vshrl.u32 %v370, 7
      %v372 = vsub.s32 1, %v371
      %v373 = vrot.slane %v364, %v372
      %v374 = vlaneseq
      %v375 = vshrl.u32 %v374, 7
      %v376 = vsub.s32 2, %v375
      %v377 = vrot.slane %v364, %v376
      %v413 = vunpack.c.l.b16 %v331
      %v414 = vunpack.c.h.b16 %v331
      %v415 = vunpack.c.l.b16 %v332
      %v416 = vunpack.c.l.b16 %v333
      %v417 = vunpack.c.h.b16 %v333
      %v418 = vunpack.c.l.b16 %v334
      %v419 = vunpack.c.l.b16 %v335
      %v420 = vunpack.c.h.b16 %v335
      %v421 = vunpack.c.l.b16 %v336
      %v422 = vunpack.c.l.b16 %v337
      %v423 = vunpack.c.h.b16 %v337
      %v424 = vunpack.c.l.b16 %v338
      %v425 = vunpack.c.l.b16 %v339
      %v426 = vunpack.c.h.b16 %v339
      %v427 = vunpack.c.l.b16 %v340
      %v428 = vunpack.c.l.b16 %v341
      %v429 = vunpack.c.h.b16 %v341
      %v430 = vunpack.c.l.b16 %v342
      %v431 = vunpack.c.l.b16 %v343
      %v432 = vunpack.c.h.b16 %v343
      %v433 = vunpack.c.l.b16 %v344
      %v434 = vunpack.c.l.b16 %v345
      %v435 = vunpack.c.h.b16 %v345
      %v436 = vunpack.c.l.b16 %v346
      %v437 = vunpack.c.l.b16 %v347
      %v438 = vunpack.c.h.b16 %v347
      %v439 = vunpack.c.l.b16 %v348
      %v440 = vunpack.c.l.b16 %v349
      %v441 = vunpack.c.h.b16 %v349
      %v442 = vunpack.c.l.b16 %v350
      %v443 = vunpack.c.l.b16 %v351
      %v444 = vunpack.c.h.b16 %v351
      %v445 = vunpack.c.l.b16 %v352
      %v446 = vunpack.c.l.b16 %v353
      %v447 = vunpack.c.h.b16 %v353
      %v448 = vunpack.c.l.b16 %v354
      %v449 = vunpack.c.l.b16 %v355
      %v450 = vunpack.c.h.b16 %v355
      %v451 = vunpack.c.l.b16 %v356
      %v452 = vunpack.c.l.b16 %v357
      %v453 = vunpack.c.h.b16 %v357
      %v454 = vunpack.c.l.b16 %v358
      %v455 = vunpack.c.l.b16 %v359
      %v456 = vunpack.c.h.b16 %v359
      %v457 = vunpack.c.l.b16 %v360
      %v458 = vunpack.c.l.b16 %v361
      %v459 = vunpack.c.h.b16 %v361
      %v460 = vunpack.c.l.b16 %v362
      %v461 = vpack.c.b16 %v416, %v413
      %v462 = vpack.c.b16 %v417, %v414
      %v463 = vpack.c.b16 %v418, %v415
      %v464 = vpack.c.b16 %v422, %v419
      %v465 = vpack.c.b16 %v423, %v420
      %v466 = vpack.c.b16 %v424, %v421
      %v467 = vpack.c.b16 %v428, %v425
      %v468 = vpack.c.b16 %v429, %v426
      %v469 = vpack.c.b16 %v430, %v427
      %v470 = vpack.c.b16 %v434, %v431
      %v471 = vpack.c.b16 %v435, %v432
      %v472 = vpack.c.b16 %v436, %v433
      %v473 = vpack.c.b16 %v440, %v437
      %v474 = vpack.c.b16 %v441, %v438
      %v475 = vpack.c.b16 %v442, %v439
      %v476 = vpack.c.b16 %v446, %v443
      %v477 = vpack.c.b16 %v447, %v444
      %v478 = vpack.c.b16 %v448, %v445
      %v479 = vpack.c.b16 %v452, %v449
      %v480 = vpack.c.b16 %v453, %v450
      %v481 = vpack.c.b16 %v454, %v451
      %v482 = vpack.c.b16 %v458, %v455
      %v483 = vpack.c.b16 %v459, %v456
      %v484 = vpack.c.b16 %v460, %v457
      %509 = vmatprep.subr.bf16.mxu0 %v462
      %510 = vmatpush1.bf16.msra.mxu0 %v461
      %511 = vmatprep.subr.bf16.mxu0 %v465
      %512 = vmatpush1.bf16.msra.mxu0 %v464
      %513 = vmatprep.subr.bf16.mxu0 %v468
      %514 = vmatpush1.bf16.msra.mxu0 %v467
      %515 = vmatprep.subr.bf16.mxu0 %v471
      %516 = vmatpush1.bf16.msra.mxu0 %v470
      %517 = vmatprep.subr.bf16.mxu0 %v474
      %518 = vmatpush1.bf16.msra.mxu0 %v473
      %519 = vmatprep.subr.bf16.mxu0 %v477
      %520 = vmatpush1.bf16.msra.mxu0 %v476
      %521 = vmatprep.subr.bf16.mxu0 %v480
      %522 = vmatpush1.bf16.msra.mxu0 %v479
      %523 = vmatprep.subr.bf16.mxu0 %v483
      %524 = vmatpush1.bf16.msra.mxu0 %v482
      %525 = vmatprep.subr.bf16.mxu0 0
      %526 = vmatpush1.bf16.msra.mxu0 0
      %527 = vmatprep.subr.bf16.mxu0 0
      %528 = vmatpush1.bf16.msra.mxu0 0
      %529 = vmatprep.subr.bf16.mxu0 0
      %530 = vmatpush1.bf16.msra.mxu0 0
      %531 = vmatprep.subr.bf16.mxu0 0
      %532 = vmatpush1.bf16.msra.mxu0 0
      %533 = vmatprep.subr.bf16.mxu0 0
      %534 = vmatpush1.bf16.msra.mxu0 0
      %535 = vmatprep.subr.bf16.mxu0 0
      %536 = vmatpush1.bf16.msra.mxu0 0
      %537 = vmatprep.subr.bf16.mxu0 0
      %538 = vmatpush1.bf16.msra.mxu0 0
      %539 = vmatprep.subr.bf16.mxu0 0
      %540 = vmatpush1.bf16.msra.mxu0 0
      %541 = vmatprep.mubr.bf16.mxu0 0
      %542 = vmatmul.mubr.bf16.gmra.mrb[0].mxu0 %v363
      %v543 = vpop.f32.mrb[0].mxu0
      %v544 = vadd.f32 %v369, %v543
      %v545 = vpop.f32.mrb[0].mxu0
      %v546 = vadd.f32 %v373, %v545
      %v547 = vpop.f32.mrb[0].mxu0
      %v548 = vpop.f32.mrb[0].mxu0
      %549 = vdwg.mxu0
      %550 = vmatprep.subr.bf16.mxu0 0
      %551 = vmatpush1.bf16.msra.mxu0 %v463
      %552 = vmatprep.subr.bf16.mxu0 0
      %553 = vmatpush1.bf16.msra.mxu0 %v466
      %554 = vmatprep.subr.bf16.mxu0 0
      %555 = vmatpush1.bf16.msra.mxu0 %v469
      %556 = vmatprep.subr.bf16.mxu0 0
      %557 = vmatpush1.bf16.msra.mxu0 %v472
      %558 = vmatprep.subr.bf16.mxu0 0
      %559 = vmatpush1.bf16.msra.mxu0 %v475
      %560 = vmatprep.subr.bf16.mxu0 0
      %561 = vmatpush1.bf16.msra.mxu0 %v478
      %562 = vmatprep.subr.bf16.mxu0 0
      %563 = vmatpush1.bf16.msra.mxu0 %v481
      %564 = vmatprep.subr.bf16.mxu0 0
      %565 = vmatpush1.bf16.msra.mxu0 %v484
      %566 = vmatprep.subr.bf16.mxu0 0
      %567 = vmatpush1.bf16.msra.mxu0 0
      %568 = vmatprep.subr.bf16.mxu0 0
      %569 = vmatpush1.bf16.msra.mxu0 0
      %570 = vmatprep.subr.bf16.mxu0 0
      %571 = vmatpush1.bf16.msra.mxu0 0
      %572 = vmatprep.subr.bf16.mxu0 0
      %573 = vmatpush1.bf16.msra.mxu0 0
      %574 = vmatprep.subr.bf16.mxu0 0
      %575 = vmatpush1.bf16.msra.mxu0 0
      %576 = vmatprep.subr.bf16.mxu0 0
      %577 = vmatpush1.bf16.msra.mxu0 0
      %578 = vmatprep.subr.bf16.mxu0 0
      %579 = vmatpush1.bf16.msra.mxu0 0
      %580 = vmatprep.subr.bf16.mxu0 0
      %581 = vmatpush1.bf16.msra.mxu0 0
      %582 = vmatprep.mubr.bf16.mxu0 0
      %583 = vmatmul.mubr.bf16.gmra.mrb[0].mxu0 %v363
      %v584 = vpop.f32.mrb[0].mxu0
      %v585 = vadd.f32 %v377, %v584
      %v586 = vpop.f32.mrb[0].mxu0
      %v587 = vpop.f32.mrb[0].mxu0
      %v588 = vpop.f32.mrb[0].mxu0
      %589 = vdwg.mxu0
      %v590 = vpack.c.bf16 %v544, %v544
      %v591 = vpack.c.bf16 %v546, %v546
      %v592 = vpack.c.bf16 %v585, %v585
      %v596 = vunpack.c.l.b16 %v590
      %v597 = vunpack.c.l.b16 %v591
      %v598 = vunpack.c.l.b16 %v592
      %v599 = vpack.c.b16 %v597, %v596
      %v600 = vpack.c.b16 %v598, %v598
      %603 = vst [vmem:[%s298] sm:$0xff] %v599
      %604 = vst [vmem:[%s298 + $0x8] sm:$0xf] %v600
      %p605 = scmp.lt.s32.totalorder %s21, 1
      %s606 = scalar_select %p605, %s21, 1
      %p607 = scmp.lt.s32.totalorder %s22, 0
      %s608 = scalar_select %p607, %s22, 0
      %s609 = smul.addr %s608, 3
      %s610 = smul.addr %s606, 3
      %s611 = sadd.s32 %s609, %s610
      %s612 = smul.addr %s611, 4
      %s613 = scalar_lea.vmem %s6, %s612
      // Predicated region
      $region45: #{conformer_block.7} parent=43 // pred_check
        %p614 = pneg %p187
      $region46: #{conformer_block.7} parent=43 // pred_check_branch
        %616 = sbr.rel (%p614) target = $region48
      $region47: #{conformer_block.7} parent=43 // pred_region
        _
      $region48: #{conformer_block.7} parent=43 // pred_fallthru
        _
    $region44: #{conformer_block.7} parent=5 // pred_fallthru
      _
    %p617 = scmp.le.s32.totalorder 2, %s12
    // Predicated region
    $region49: #{conformer_block.7} parent=5 // pred_check
      %p618 = pneg %p617
    $region50: #{conformer_block.7} parent=5 // pred_check_branch
      %620 = sbr.rel (%p618) target = $region52
    $region51: #{conformer_block.7} parent=5 // pred_region
      %s621 = ssub.s32 %s12, 2
      // Predicated region
      $region53: #{conformer_block.7} parent=51 // pred_check
        %p622 = pneg %p193
      $region54: #{conformer_block.7} parent=51 // pred_check_branch
        %624 = sbr.rel (%p622) target = $region56
      $region55: #{conformer_block.7} parent=51 // pred_region
        %p625 = scmp.lt.s32.totalorder %s23, 1
        %s626 = scalar_select %p625, %s23, 1
        %p627 = scmp.lt.s32.totalorder %s24, 0
        %s628 = scalar_select %p627, %s24, 0
        %s629 = smul.addr %s628, 3
        %s630 = smul.addr %s626, 3
        %s631 = sadd.s32 %s629, %s630
        %s632 = smul.addr %s631, 4
        %s633 = scalar_lea.vmem %s6, %s632
      $region56: #{conformer_block.7} parent=51 // pred_fallthru
        _
    $region52: #{conformer_block.7} parent=5 // pred_fallthru
      _
  $region6: #{conformer_block.7} parent=0 // loop_footer
    %s16 = sadd.s32 1, %s12
  $region7: #{conformer_block.7} parent=0 // loop_footer_branch
    %11 = sbr.rel target = $region3
  $region8: #{conformer_block.7} parent=0 // loop_exit
    _

// kernel: conformer_block.6
$region0: #{conformer_block.6}
  #allocation0 [shape = 'u32[]', space=smem, size = 0x4, offset = 0x4, fixed_abs, tag = 'smem constant byte address 0x4 - core index']
  #allocation1 [shape = 'u32[144,128]{1,0:T(1,128)}', space=vmem, size = 0x12000, scoped, tag = 'internal scratch']
  %s0 = inlined_call_operand.vmem [shape: f32[16,128], index: 0, kind: input, shape index: {}, may-alias: {0,7}]
  %s1 = inlined_call_operand.vmem [shape: f32[1,128], index: 1, kind: input, shape index: {}]
  %s2 = inlined_call_operand.vmem [shape: f32[1,128], index: 2, kind: input, shape index: {}]
  %s3 = inlined_call_operand.hbm [shape: bf16[128,256], index: 3, kind: input, shape index: {}]
  %s4 = inlined_call_operand.vmem [shape: f32[1,256], index: 4, kind: input, shape index: {}]
  %s5 = inlined_call_operand.hbm [shape: bf16[256,128], index: 5, kind: input, shape index: {}]
  %s6 = inlined_call_operand.vmem [shape: f32[1,128], index: 6, kind: input, shape index: {}]
  %s7 = inlined_call_operand.vmem [shape: f32[16,128], index: 7, kind: output, shape index: {}, may-alias: {0,7}]
  %s8 = sld [smem:[#allocation0]]
  $region46: #{conformer_block.6} parent=0
    _
  %s10 = ssub.s32 1, %s8
  %s11 = scalar_select 0, %s10, %s8
  $region1: #{conformer_block.6} parent=0
    #allocation2 [shape = 'u8[65536]{0}', space=vmem, size = 0x10000, scoped, tag = 'input window, operand 3, single buffered']
    #allocation3 [shape = 's32[1]{0}', space=sflag, size = 0x4, scoped, tag = 'scoped memory for conformer_block.6']
    #allocation4 [shape = 'u8[65536]{0}', space=vmem, size = 0x10000, scoped, tag = 'input window, operand 5, single buffered']
    #allocation5 [shape = 's32[1]{0}', space=sflag, size = 0x4, scoped, tag = 'scoped memory for conformer_block.6']
    %12 = vsyncpa [#allocation3], 0
    %13 = vsyncpa [#allocation5], 0
    // Predicated region
    $region2: #{conformer_block.6} parent=1 // pred_check
      _
    $region3: #{conformer_block.6} parent=1 // pred_check_branch
      %15 = sbr.rel (0) target = $region5
    $region4: #{conformer_block.6} parent=1 // pred_region
      _
    $region5: #{conformer_block.6} parent=1 // pred_fallthru
      _
    // Predicated region
    $region6: #{conformer_block.6} parent=1 // pred_check
      _
    $region7: #{conformer_block.6} parent=1 // pred_check_branch
      %17 = sbr.rel (0) target = $region9
    $region8: #{conformer_block.6} parent=1 // pred_region
      _
    $region9: #{conformer_block.6} parent=1 // pred_fallthru
      _
    // Predicated region
    $region10: #{conformer_block.6} parent=1 // pred_check
      _
    $region11: #{conformer_block.6} parent=1 // pred_check_branch
      %19 = sbr.rel (0) target = $region13
    $region12: #{conformer_block.6} parent=1 // pred_region
      _
    $region13: #{conformer_block.6} parent=1 // pred_fallthru
      _
    // Predicated region
    $region14: #{conformer_block.6} parent=1 // pred_check
      _
    $region15: #{conformer_block.6} parent=1 // pred_check_branch
      %21 = sbr.rel (0) target = $region17
    $region16: #{conformer_block.6} parent=1 // pred_region
      %s23 = ssub.s32 2048, 2048
      %24 = vsyncadd [#allocation3], %s23
      %s25 = sshll.u32 [#allocation2], 4
      %s26 = int_to_ptr.vmem [resolvable:$true] %s25
      %31 = dma.hbm_to_vmem [thread:$0]  %s3, 2048, %s26, [#allocation3], 128, 128, 8
    $region17: #{conformer_block.6} parent=1 // pred_fallthru
      _
    // Predicated region
    $region18: #{conformer_block.6} parent=1 // pred_check
      _
    $region19: #{conformer_block.6} parent=1 // pred_check_branch
      %33 = sbr.rel (0) target = $region21
    $region20: #{conformer_block.6} parent=1 // pred_region
      _
    $region21: #{conformer_block.6} parent=1 // pred_fallthru
      _
    // Predicated region
    $region22: #{conformer_block.6} parent=1 // pred_check
      _
    $region23: #{conformer_block.6} parent=1 // pred_check_branch
      %35 = sbr.rel (0) target = $region25
    $region24: #{conformer_block.6} parent=1 // pred_region
      %s37 = ssub.s32 2048, 2048
      %38 = vsyncadd [#allocation5], %s37
      %s39 = sshll.u32 [#allocation4], 4
      %s40 = int_to_ptr.vmem [resolvable:$true] %s39
      %45 = dma.hbm_to_vmem [thread:$0]  %s5, 2048, %s40, [#allocation5], 64, 64, 4
    $region25: #{conformer_block.6} parent=1 // pred_fallthru
      _
    // Predicated region
    $region26: #{conformer_block.6} parent=1 // pred_check
      _
    $region27: #{conformer_block.6} parent=1 // pred_check_branch
      %47 = sbr.rel (0) target = $region29
    $region28: #{conformer_block.6} parent=1 // pred_region
      _
    $region29: #{conformer_block.6} parent=1 // pred_fallthru
      _
    // Predicated region
    $region30: #{conformer_block.6} parent=1 // pred_check
      _
    $region31: #{conformer_block.6} parent=1 // pred_check_branch
      %49 = sbr.rel (0) target = $region33
    $region32: #{conformer_block.6} parent=1 // pred_region
      %50 = dma.done [#allocation3], 2048
    $region33: #{conformer_block.6} parent=1 // pred_fallthru
      _
    // Predicated region
    $region34: #{conformer_block.6} parent=1 // pred_check
      _
    $region35: #{conformer_block.6} parent=1 // pred_check_branch
      %52 = sbr.rel (0) target = $region37
    $region36: #{conformer_block.6} parent=1 // pred_region
      %53 = dma.done [#allocation5], 2048
    $region37: #{conformer_block.6} parent=1 // pred_fallthru
      _
    %v55 = vld [vmem:[%s0] sm:$0xff]
    %v56 = vld [vmem:[%s0 + $0x8] sm:$0xff]
    %v57 = vld [vmem:[%s1] sm:$0x1]
    %v58 = vld [vmem:[%s2] sm:$0x1]
    %59 = vadd.xlane.f32.xlu0 %v55
    %v60 = vpop.xlane.xlu0 %59
    %61 = vadd.xlane.f32.xlu0 %v56
    %v62 = vpop.xlane.xlu0 %61
    %v63 = vrcp.pop 128.0
    %v64 = vmul.f32 %v60, %v63
    %v65 = vmul.f32 %v62, %v63
    %v66 = vsub.f32 %v55, %v64
    %v67 = vsub.f32 %v56, %v65
    %v68 = vmul.f32 %v66, %v66
    %v69 = vmul.f32 %v67, %v67
    %70 = vadd.xlane.f32.xlu0 %v68
    %v71 = vpop.xlane.xlu0 %70
    %72 = vadd.xlane.f32.xlu0 %v69
    %v73 = vpop.xlane.xlu0 %72
    %v74 = vmul.f32 %v71, %v63
    %v75 = vmul.f32 %v73, %v63
    %v76 = vadd.f32 %v74, 1e-05
    %v77 = vadd.f32 %v75, 1e-05
    %v78 = vrsqrt.pop %v76
    %v79 = vrsqrt.pop %v77
    %v80 = vmul.f32 %v66, %v78
    %v81 = vmul.f32 %v67, %v79
    %v83 = vlaneseq
    %v84 = vshrl.u32 %v83, 7
    %v85 = vsub.s32 0, %v84
    %v86 = vrot.slane %v57, %v85
    %v88 = vmul.f32 %v80, %v86
    %v89 = vmul.f32 %v81, %v86
    %v91 = vlaneseq
    %v92 = vshrl.u32 %v91, 7
    %v93 = vsub.s32 0, %v92
    %v94 = vrot.slane %v58, %v93
    %v96 = vadd.f32 %v88, %v94
    %v97 = vadd.f32 %v89, %v94
    %v98 = vld [vmem:[#allocation2] sm:$0xff]
    %v99 = vld [vmem:[#allocation2 + $0x8] sm:$0xff]
    %v100 = vld [vmem:[#allocation2 + $0x10] sm:$0xff]
    %v101 = vld [vmem:[#allocation2 + $0x18] sm:$0xff]
    %v102 = vld [vmem:[#allocation2 + $0x20] sm:$0xff]
    %v103 = vld [vmem:[#allocation2 + $0x28] sm:$0xff]
    %v104 = vld [vmem:[#allocation2 + $0x30] sm:$0xff]
    %v105 = vld [vmem:[#allocation2 + $0x38] sm:$0xff]
    %v106 = vld [vmem:[#allocation2 + $0x40] sm:$0xff]
    %v107 = vld [vmem:[#allocation2 + $0x48] sm:$0xff]
    %v108 = vld [vmem:[#allocation2 + $0x50] sm:$0xff]
    %v109 = vld [vmem:[#allocation2 + $0x58] sm:$0xff]
    %v110 = vld [vmem:[#allocation2 + $0x60] sm:$0xff]
    %v111 = vld [vmem:[#allocation2 + $0x68] sm:$0xff]
    %v112 = vld [vmem:[#allocation2 + $0x70] sm:$0xff]
    %v113 = vld [vmem:[#allocation2 + $0x78] sm:$0xff]
    %v114 = vpack.c.bf16 %v97, %v96
    %v115 = vld [vmem:[%s4] sm:$0x3]
    %v117 = vlaneseq
    %v118 = vshrl.u32 %v117, 7
    %v119 = vsub.s32 0, %v118
    %v120 = vrot.slane %v115, %v119
    %v121 = vlaneseq
    %v122 = vshrl.u32 %v121, 7
    %v123 = vsub.s32 1, %v122
    %v124 = vrot.slane %v115, %v123
    %v143 = vunpack.c.l.b16 %v98
    %v144 = vunpack.c.h.b16 %v98
    %v145 = vunpack.c.l.b16 %v99
    %v146 = vunpack.c.h.b16 %v99
    %v147 = vunpack.c.l.b16 %v100
    %v148 = vunpack.c.h.b16 %v100
    %v149 = vunpack.c.l.b16 %v101
    %v150 = vunpack.c.h.b16 %v101
    %v151 = vunpack.c.l.b16 %v102
    %v152 = vunpack.c.h.b16 %v102
    %v153 = vunpack.c.l.b16 %v103
    %v154 = vunpack.c.h.b16 %v103
    %v155 = vunpack.c.l.b16 %v104
    %v156 = vunpack.c.h.b16 %v104
    %v157 = vunpack.c.l.b16 %v105
    %v158 = vunpack.c.h.b16 %v105
    %v159 = vunpack.c.l.b16 %v106
    %v160 = vunpack.c.h.b16 %v106
    %v161 = vunpack.c.l.b16 %v107
    %v162 = vunpack.c.h.b16 %v107
    %v163 = vunpack.c.l.b16 %v108
    %v164 = vunpack.c.h.b16 %v108
    %v165 = vunpack.c.l.b16 %v109
    %v166 = vunpack.c.h.b16 %v109
    %v167 = vunpack.c.l.b16 %v110
    %v168 = vunpack.c.h.b16 %v110
    %v169 = vunpack.c.l.b16 %v111
    %v170 = vunpack.c.h.b16 %v111
    %v171 = vunpack.c.l.b16 %v112
    %v172 = vunpack.c.h.b16 %v112
    %v173 = vunpack.c.l.b16 %v113
    %v174 = vunpack.c.h.b16 %v113
    %v175 = vpack.c.b16 %v145, %v143
    %v176 = vpack.c.b16 %v146, %v144
    %v177 = vpack.c.b16 %v149, %v147
    %v178 = vpack.c.b16 %v150, %v148
    %v179 = vpack.c.b16 %v153, %v151
    %v180 = vpack.c.b16 %v154, %v152
    %v181 = vpack.c.b16 %v157, %v155
    %v182 = vpack.c.b16 %v158, %v156
    %v183 = vpack.c.b16 %v161, %v159
    %v184 = vpack.c.b16 %v162, %v160
    %v185 = vpack.c.b16 %v165, %v163
    %v186 = vpack.c.b16 %v166, %v164
    %v187 = vpack.c.b16 %v169, %v167
    %v188 = vpack.c.b16 %v170, %v168
    %v189 = vpack.c.b16 %v173, %v171
    %v190 = vpack.c.b16 %v174, %v172
    %207 = vmatprep.subr.bf16.mxu0 %v176
    %208 = vmatpush1.bf16.msra.mxu0 %v175
    %209 = vmatprep.subr.bf16.mxu0 %v178
    %210 = vmatpush1.bf16.msra.mxu0 %v177
    %211 = vmatprep.subr.bf16.mxu0 %v180
    %212 = vmatpush1.bf16.msra.mxu0 %v179
    %213 = vmatprep.subr.bf16.mxu0 %v182
    %214 = vmatpush1.bf16.msra.mxu0 %v181
    %215 = vmatprep.subr.bf16.mxu0 %v184
    %216 = vmatpush1.bf16.msra.mxu0 %v183
    %217 = vmatprep.subr.bf16.mxu0 %v186
    %218 = vmatpush1.bf16.msra.mxu0 %v185
    %219 = vmatprep.subr.bf16.mxu0 %v188
    %220 = vmatpush1.bf16.msra.mxu0 %v187
    %221 = vmatprep.subr.bf16.mxu0 %v190
    %222 = vmatpush1.bf16.msra.mxu0 %v189
    %223 = vmatprep.subr.bf16.mxu0 0
    %224 = vmatpush1.bf16.msra.mxu0 0
    %225 = vmatprep.subr.bf16.mxu0 0
    %226 = vmatpush1.bf16.msra.mxu0 0
    %227 = vmatprep.subr.bf16.mxu0 0
    %228 = vmatpush1.bf16.msra.mxu0 0
    %229 = vmatprep.subr.bf16.mxu0 0
    %230 = vmatpush1.bf16.msra.mxu0 0
    %231 = vmatprep.subr.bf16.mxu0 0
    %232 = vmatpush1.bf16.msra.mxu0 0
    %233 = vmatprep.subr.bf16.mxu0 0
    %234 = vmatpush1.bf16.msra.mxu0 0
    %235 = vmatprep.subr.bf16.mxu0 0
    %236 = vmatpush1.bf16.msra.mxu0 0
    %237 = vmatprep.subr.bf16.mxu0 0
    %238 = vmatpush1.bf16.msra.mxu0 0
    %239 = vmatprep.mubr.bf16.mxu0 0
    %240 = vmatmul.mubr.bf16.gmra.mrb[0].mxu0 %v114
    %v241 = vpop.f32.mrb[0].mxu0
    %v242 = vadd.f32 %v120, %v241
    %v243 = vpop.f32.mrb[0].mxu0
    %v244 = vadd.f32 %v124, %v243
    %v245 = vpop.f32.mrb[0].mxu0
    %v246 = vadd.f32 %v120, %v245
    %v247 = vpop.f32.mrb[0].mxu0
    %v248 = vadd.f32 %v124, %v247
    %249 = vdwg.mxu0
    %v250 = vmul.f32 %v242, 0.5
    %v251 = vmul.f32 %v244, 0.5
    %v252 = vmul.f32 %v246, 0.5
    %v253 = vmul.f32 %v248, 0.5
    %v254 = vmul.f32 %v242, 0.70710677
    %v255 = vmul.f32 %v244, 0.70710677
    %v256 = vmul.f32 %v246, 0.70710677
    %v257 = vmul.f32 %v248, 0.70710677
    %v258 = verf.f32.pop %v254
    %v259 = verf.f32.pop %v255
    %v260 = verf.f32.pop %v256
    %v261 = verf.f32.pop %v257
    %v262 = vadd.f32 %v258, 1.0
    %v263 = vadd.f32 %v259, 1.0
    %v264 = vadd.f32 %v260, 1.0
    %v265 = vadd.f32 %v261, 1.0
    %v266 = vmul.f32 %v250, %v262
    %v267 = vmul.f32 %v251, %v263
    %v268 = vmul.f32 %v252, %v264
    %v269 = vmul.f32 %v253, %v265
    %v270 = vld [vmem:[#allocation4] sm:$0xf]
    %v271 = vld [vmem:[#allocation4 + $0x4] sm:$0xf]
    %v272 = vld [vmem:[#allocation4 + $0x8] sm:$0xf]
    %v273 = vld [vmem:[#allocation4 + $0xc] sm:$0xf]
    %v274 = vld [vmem:[#allocation4 + $0x10] sm:$0xf]
    %v275 = vld [vmem:[#allocation4 + $0x14] sm:$0xf]
    %v276 = vld [vmem:[#allocation4 + $0x18] sm:$0xf]
    %v277 = vld [vmem:[#allocation4 + $0x1c] sm:$0xf]
    %v278 = vld [vmem:[#allocation4 + $0x20] sm:$0xf]
    %v279 = vld [vmem:[#allocation4 + $0x24] sm:$0xf]
    %v280 = vld [vmem:[#allocation4 + $0x28] sm:$0xf]
    %v281 = vld [vmem:[#allocation4 + $0x2c] sm:$0xf]
    %v282 = vld [vmem:[#allocation4 + $0x30] sm:$0xf]
    %v283 = vld [vmem:[#allocation4 + $0x34] sm:$0xf]
    %v284 = vld [vmem:[#allocation4 + $0x38] sm:$0xf]
    %v285 = vld [vmem:[#allocation4 + $0x3c] sm:$0xf]
    %v286 = vld [vmem:[#allocation4 + $0x40] sm:$0xf]
    %v287 = vld [vmem:[#allocation4 + $0x44] sm:$0xf]
    %v288 = vld [vmem:[#allocation4 + $0x48] sm:$0xf]
    %v289 = vld [vmem:[#allocation4 + $0x4c] sm:$0xf]
    %v290 = vld [vmem:[#allocation4 + $0x50] sm:$0xf]
    %v291 = vld [vmem:[#allocation4 + $0x54] sm:$0xf]
    %v292 = vld [vmem:[#allocation4 + $0x58] sm:$0xf]
    %v293 = vld [vmem:[#allocation4 + $0x5c] sm:$0xf]
    %v294 = vld [vmem:[#allocation4 + $0x60] sm:$0xf]
    %v295 = vld [vmem:[#allocation4 + $0x64] sm:$0xf]
    %v296 = vld [vmem:[#allocation4 + $0x68] sm:$0xf]
    %v297 = vld [vmem:[#allocation4 + $0x6c] sm:$0xf]
    %v298 = vld [vmem:[#allocation4 + $0x70] sm:$0xf]
    %v299 = vld [vmem:[#allocation4 + $0x74] sm:$0xf]
    %v300 = vld [vmem:[#allocation4 + $0x78] sm:$0xf]
    %v301 = vld [vmem:[#allocation4 + $0x7c] sm:$0xf]
    %v302 = vpack.c.bf16 %v268, %v266
    %v303 = vpack.c.bf16 %v269, %v267
    %v304 = vld [vmem:[%s6] sm:$0x1]
    %v306 = vlaneseq
    %v307 = vshrl.u32 %v306, 7
    %v308 = vsub.s32 0, %v307
    %v309 = vrot.slane %v304, %v308
    %v343 = vunpack.c.l.b16 %v270
    %v344 = vunpack.c.l.b16 %v271
    %v345 = vunpack.c.l.b16 %v272
    %v346 = vunpack.c.l.b16 %v273
    %v347 = vunpack.c.l.b16 %v274
    %v348 = vunpack.c.l.b16 %v275
    %v349 = vunpack.c.l.b16 %v276
    %v350 = vunpack.c.l.b16 %v277
    %v351 = vunpack.c.l.b16 %v278
    %v352 = vunpack.c.l.b16 %v279
    %v353 = vunpack.c.l.b16 %v280
    %v354 = vunpack.c.l.b16 %v281
    %v355 = vunpack.c.l.b16 %v282
    %v356 = vunpack.c.l.b16 %v283
    %v357 = vunpack.c.l.b16 %v284
    %v358 = vunpack.c.l.b16 %v285
    %v359 = vunpack.c.l.b16 %v286
    %v360 = vunpack.c.l.b16 %v287
    %v361 = vunpack.c.l.b16 %v288
    %v362 = vunpack.c.l.b16 %v289
    %v363 = vunpack.c.l.b16 %v290
    %v364 = vunpack.c.l.b16 %v291
    %v365 = vunpack.c.l.b16 %v292
    %v366 = vunpack.c.l.b16 %v293
    %v367 = vunpack.c.l.b16 %v294
    %v368 = vunpack.c.l.b16 %v295
    %v369 = vunpack.c.l.b16 %v296
    %v370 = vunpack.c.l.b16 %v297
    %v371 = vunpack.c.l.b16 %v298
    %v372 = vunpack.c.l.b16 %v299
    %v373 = vunpack.c.l.b16 %v300
    %v374 = vunpack.c.l.b16 %v301
    %v375 = vpack.c.b16 %v344, %v343
    %v376 = vpack.c.b16 %v346, %v345
    %v377 = vpack.c.b16 %v348, %v347
    %v378 = vpack.c.b16 %v350, %v349
    %v379 = vpack.c.b16 %v352, %v351
    %v380 = vpack.c.b16 %v354, %v353
    %v381 = vpack.c.b16 %v356, %v355
    %v382 = vpack.c.b16 %v358, %v357
    %v383 = vpack.c.b16 %v360, %v359
    %v384 = vpack.c.b16 %v362, %v361
    %v385 = vpack.c.b16 %v364, %v363
    %v386 = vpack.c.b16 %v366, %v365
    %v387 = vpack.c.b16 %v368, %v367
    %v388 = vpack.c.b16 %v370, %v369
    %v389 = vpack.c.b16 %v372, %v371
    %v390 = vpack.c.b16 %v374, %v373
    %407 = vmatprep.subr.bf16.mxu0 0
    %408 = vmatpush1.bf16.msra.mxu0 %v375
    %409 = vmatprep.subr.bf16.mxu0 0
    %410 = vmatpush1.bf16.msra.mxu0 %v376
    %411 = vmatprep.subr.bf16.mxu0 0
    %412 = vmatpush1.bf16.msra.mxu0 %v377
    %413 = vmatprep.subr.bf16.mxu0 0
    %414 = vmatpush1.bf16.msra.mxu0 %v378
    %415 = vmatprep.subr.bf16.mxu0 0
    %416 = vmatpush1.bf16.msra.mxu0 %v379
    %417 = vmatprep.subr.bf16.mxu0 0
    %418 = vmatpush1.bf16.msra.mxu0 %v380
    %419 = vmatprep.subr.bf16.mxu0 0
    %420 = vmatpush1.bf16.msra.mxu0 %v381
    %421 = vmatprep.subr.bf16.mxu0 0
    %422 = vmatpush1.bf16.msra.mxu0 %v382
    %423 = vmatprep.subr.bf16.mxu0 0
    %424 = vmatpush1.bf16.msra.mxu0 %v383
    %425 = vmatprep.subr.bf16.mxu0 0
    %426 = vmatpush1.bf16.msra.mxu0 %v384
    %427 = vmatprep.subr.bf16.mxu0 0
    %428 = vmatpush1.bf16.msra.mxu0 %v385
    %429 = vmatprep.subr.bf16.mxu0 0
    %430 = vmatpush1.bf16.msra.mxu0 %v386
    %431 = vmatprep.subr.bf16.mxu0 0
    %432 = vmatpush1.bf16.msra.mxu0 %v387
    %433 = vmatprep.subr.bf16.mxu0 0
    %434 = vmatpush1.bf16.msra.mxu0 %v388
    %435 = vmatprep.subr.bf16.mxu0 0
    %436 = vmatpush1.bf16.msra.mxu0 %v389
    %437 = vmatprep.subr.bf16.mxu0 0
    %438 = vmatpush1.bf16.msra.mxu0 %v390
    %439 = vmatprep.mubr.bf16.mxu0 %v303
    %440 = vmatmul.mubr.bf16.gmra.mrb[0].mxu0 %v302
    %v441 = vpop.f32.mrb[0].mxu0
    %v442 = vadd.f32 %v309, %v441
    %v443 = vpop.f32.mrb[0].mxu0
    %v444 = vpop.f32.mrb[0].mxu0
    %v445 = vadd.f32 %v309, %v444
    %v446 = vpop.f32.mrb[0].mxu0
    %447 = vdwg.mxu0
    %v448 = vmul.f32 %v442, 0.5
    %v449 = vmul.f32 %v445, 0.5
    %v450 = vadd.f32 %v448, %v55
    %v451 = vadd.f32 %v449, %v56
    %452 = vst [vmem:[%s7] sm:$0xff] %v450
    %453 = vst [vmem:[%s7 + $0x8] sm:$0xff] %v451
    // Predicated region
    $region38: #{conformer_block.6} parent=1 // pred_check
      _
    $region39: #{conformer_block.6} parent=1 // pred_check_branch
      %455 = sbr.rel (0) target = $region41
    $region40: #{conformer_block.6} parent=1 // pred_region
      _
    $region41: #{conformer_block.6} parent=1 // pred_fallthru
      _
    // Predicated region
    $region42: #{conformer_block.6} parent=1 // pred_check
      _
    $region43: #{conformer_block.6} parent=1 // pred_check_branch
      %457 = sbr.rel (0) target = $region45
    $region44: #{conformer_block.6} parent=1 // pred_region
      _
    $region45: #{conformer_block.6} parent=1 // pred_fallthru
      _
    %458 = vsyncpa [#allocation3], 1
    %459 = vsyncpa [#allocation5], 1

// kernel: conformer_block.9
$region0: #{conformer_block.9}
  #allocation0 [shape = 'u32[]', space=smem, size = 0x4, offset = 0x4, fixed_abs, tag = 'smem constant byte address 0x4 - core index']
  #allocation1 [shape = 'u32[144,128]{1,0:T(1,128)}', space=vmem, size = 0x12000, scoped, tag = 'internal scratch']
  %s0 = inlined_call_operand.vmem [shape: f32[16,128], index: 0, kind: input, shape index: {}]
  %s1 = inlined_call_operand.vmem [shape: f32[1,128], index: 1, kind: input, shape index: {}]
  %s2 = inlined_call_operand.vmem [shape: f32[1,128], index: 2, kind: input, shape index: {}]
  %s3 = inlined_call_operand.vmem [shape: bf16[128,256], index: 3, kind: input, shape index: {}]
  %s4 = inlined_call_operand.vmem [shape: f32[1,256], index: 4, kind: input, shape index: {}]
  %s5 = inlined_call_operand.vmem [shape: f32[1,256], index: 5, kind: input, shape index: {}]
  %s6 = inlined_call_operand.vmem [shape: f32[1,256], index: 6, kind: input, shape index: {}]
  %s7 = inlined_call_operand.vmem [shape: f32[1,1,256], index: 7, kind: output, shape index: {0}]
  %s8 = inlined_call_operand.vmem [shape: f32[1,1,256], index: 8, kind: output, shape index: {1}]
  %9 = xla_tuple %s7, %s8
  %s10 = sld [smem:[#allocation0]]
  $region50: #{conformer_block.9} parent=0
    _
  %s12 = ssub.s32 1, %s10
  %s13 = scalar_select 0, %s12, %s10
  // Predicated region
  $region2: #{conformer_block.9} parent=0 // pred_check
    _
  $region3: #{conformer_block.9} parent=0 // pred_check_branch
    %15 = sbr.rel (0) target = $region5
  $region4: #{conformer_block.9} parent=0 // pred_region
    %s16 = sadd.s32 0, 0
    %s17 = smul.u32 2, %s16
    %p18 = scmp.lt.s32.totalorder %s17, 1
    %s19 = scalar_select %p18, %s17, 1
    %s20 = smul.addr %s19, 8
    %s21 = scalar_lea.vmem %s0, %s20
    %s22 = sadd.s32 0, 0
    %s23 = smul.u32 2, %s22
  $region5: #{conformer_block.9} parent=0 // pred_fallthru
    _
  // Predicated region
  $region6: #{conformer_block.9} parent=0 // pred_check
    _
  $region7: #{conformer_block.9} parent=0 // pred_check_branch
    %25 = sbr.rel (0) target = $region9
  $region8: #{conformer_block.9} parent=0 // pred_region
    _
  $region9: #{conformer_block.9} parent=0 // pred_fallthru
    _
  // Predicated region
  $region10: #{conformer_block.9} parent=0 // pred_check
    _
  $region11: #{conformer_block.9} parent=0 // pred_check_branch
    %27 = sbr.rel (0) target = $region13
  $region12: #{conformer_block.9} parent=0 // pred_region
    _
  $region13: #{conformer_block.9} parent=0 // pred_fallthru
    _
  // Predicated region
  $region14: #{conformer_block.9} parent=0 // pred_check
    _
  $region15: #{conformer_block.9} parent=0 // pred_check_branch
    %29 = sbr.rel (0) target = $region17
  $region16: #{conformer_block.9} parent=0 // pred_region
    _
  $region17: #{conformer_block.9} parent=0 // pred_fallthru
    _
  // Predicated region
  $region18: #{conformer_block.9} parent=0 // pred_check
    _
  $region19: #{conformer_block.9} parent=0 // pred_check_branch
    %31 = sbr.rel (0) target = $region21
  $region20: #{conformer_block.9} parent=0 // pred_region
    _
  $region21: #{conformer_block.9} parent=0 // pred_fallthru
    _
  // Predicated region
  $region22: #{conformer_block.9} parent=0 // pred_check
    _
  $region23: #{conformer_block.9} parent=0 // pred_check_branch
    %33 = sbr.rel (0) target = $region25
  $region24: #{conformer_block.9} parent=0 // pred_region
    _
  $region25: #{conformer_block.9} parent=0 // pred_fallthru
    _
  // Predicated region
  $region26: #{conformer_block.9} parent=0 // pred_check
    _
  $region27: #{conformer_block.9} parent=0 // pred_check_branch
    %35 = sbr.rel (0) target = $region29
  $region28: #{conformer_block.9} parent=0 // pred_region
    _
  $region29: #{conformer_block.9} parent=0 // pred_fallthru
    _
  %s36 = sadd.s32 0, 0
  %s37 = smul.u32 2, %s36
  %p38 = scmp.lt.s32.totalorder %s37, 1
  %s39 = scalar_select %p38, %s37, 1
  %s40 = smul.addr %s39, 8
  %s41 = scalar_lea.vmem %s0, %s40
  %s42 = sadd.s32 0, 0
  %s43 = smul.u32 2, %s42
  %p44 = scmp.lt.s32.totalorder %s43, 1
  %s45 = scalar_select %p44, %s43, 1
  %s46 = smul.addr %s45, 8
  %s47 = scalar_lea.vmem %s0, %s46
  %s48 = sadd.s32 0, 0
  %s49 = smul.u32 2, %s48
  %p51 = scmp.eq.s32.totalorder 0, 0
  // Predicated region
  $region30: #{conformer_block.9} parent=0 // pred_check
    %p52 = pneg %p51
  $region31: #{conformer_block.9} parent=0 // pred_check_branch
    %54 = sbr.rel (%p52) target = $region33
  $region32: #{conformer_block.9} parent=0 // pred_region
    %v55 = vlaneseq
    %vm56 = vcmp.ge.s32.totalorder %v55, 0
    %vm57 = vcmp.lt.s32.totalorder %v55, 256
    %vm58 = vmand %vm56, %vm57
    %59 = vst.msk [vmem:[%s7] sm:$0x3] %vm58, 0.0
    %60 = vst.msk [vmem:[%s8] sm:$0x3] %vm58, 0.0
  $region33: #{conformer_block.9} parent=0 // pred_fallthru
    _
  %v61 = vld [vmem:[%s47] sm:$0xff]
  %v62 = vld [vmem:[%s47 + $0x8] sm:$0xff]
  %v63 = vld [vmem:[%s1] sm:$0x1]
  %v64 = vld [vmem:[%s2] sm:$0x1]
  %v65 = vld [vmem:[%s3] sm:$0xff]
  %v66 = vld [vmem:[%s3 + $0x8] sm:$0xff]
  %v67 = vld [vmem:[%s3 + $0x10] sm:$0xff]
  %v68 = vld [vmem:[%s3 + $0x18] sm:$0xff]
  %v69 = vld [vmem:[%s3 + $0x20] sm:$0xff]
  %v70 = vld [vmem:[%s3 + $0x28] sm:$0xff]
  %v71 = vld [vmem:[%s3 + $0x30] sm:$0xff]
  %v72 = vld [vmem:[%s3 + $0x38] sm:$0xff]
  %v73 = vld [vmem:[%s3 + $0x40] sm:$0xff]
  %v74 = vld [vmem:[%s3 + $0x48] sm:$0xff]
  %v75 = vld [vmem:[%s3 + $0x50] sm:$0xff]
  %v76 = vld [vmem:[%s3 + $0x58] sm:$0xff]
  %v77 = vld [vmem:[%s3 + $0x60] sm:$0xff]
  %v78 = vld [vmem:[%s3 + $0x68] sm:$0xff]
  %v79 = vld [vmem:[%s3 + $0x70] sm:$0xff]
  %v80 = vld [vmem:[%s3 + $0x78] sm:$0xff]
  %v81 = vld [vmem:[%s4] sm:$0x3]
  %v82 = vld [vmem:[%s5] sm:$0x3]
  %v83 = vld [vmem:[%s6] sm:$0x3]
  %84 = vadd.xlane.f32.xlu0 %v61
  %v85 = vpop.xlane.xlu0 %84
  %86 = vadd.xlane.f32.xlu0 %v62
  %v87 = vpop.xlane.xlu0 %86
  %v88 = vrcp.pop 128.0
  %v89 = vmul.f32 %v85, %v88
  %v90 = vmul.f32 %v87, %v88
  %v91 = vsub.f32 %v61, %v89
  %v92 = vsub.f32 %v62, %v90
  %v93 = vmul.f32 %v91, %v91
  %v94 = vmul.f32 %v92, %v92
  %95 = vadd.xlane.f32.xlu0 %v93
  %v96 = vpop.xlane.xlu0 %95
  %97 = vadd.xlane.f32.xlu0 %v94
  %v98 = vpop.xlane.xlu0 %97
  %v99 = vmul.f32 %v96, %v88
  %v100 = vmul.f32 %v98, %v88
  %v101 = vadd.f32 %v99, 1e-05
  %v102 = vadd.f32 %v100, 1e-05
  %v103 = vrsqrt.pop %v101
  %v104 = vrsqrt.pop %v102
  %v105 = vmul.f32 %v91, %v103
  %v106 = vmul.f32 %v92, %v104
  %v108 = vlaneseq
  %v109 = vshrl.u32 %v108, 7
  %v110 = vsub.s32 0, %v109
  %v111 = vrot.slane %v63, %v110
  %v113 = vmul.f32 %v105, %v111
  %v114 = vmul.f32 %v106, %v111
  %v116 = vlaneseq
  %v117 = vshrl.u32 %v116, 7
  %v118 = vsub.s32 0, %v117
  %v119 = vrot.slane %v64, %v118
  %v121 = vadd.f32 %v113, %v119
  %v122 = vadd.f32 %v114, %v119
  %v123 = vpack.c.bf16 %v122, %v121
  %v125 = vlaneseq
  %v126 = vshrl.u32 %v125, 7
  %v127 = vsub.s32 0, %v126
  %v128 = vrot.slane %v81, %v127
  %v129 = vlaneseq
  %v130 = vshrl.u32 %v129, 7
  %v131 = vsub.s32 1, %v130
  %v132 = vrot.slane %v81, %v131
  %v151 = vunpack.c.l.b16 %v65
  %v152 = vunpack.c.h.b16 %v65
  %v153 = vunpack.c.l.b16 %v66
  %v154 = vunpack.c.h.b16 %v66
  %v155 = vunpack.c.l.b16 %v67
  %v156 = vunpack.c.h.b16 %v67
  %v157 = vunpack.c.l.b16 %v68
  %v158 = vunpack.c.h.b16 %v68
  %v159 = vunpack.c.l.b16 %v69
  %v160 = vunpack.c.h.b16 %v69
  %v161 = vunpack.c.l.b16 %v70
  %v162 = vunpack.c.h.b16 %v70
  %v163 = vunpack.c.l.b16 %v71
  %v164 = vunpack.c.h.b16 %v71
  %v165 = vunpack.c.l.b16 %v72
  %v166 = vunpack.c.h.b16 %v72
  %v167 = vunpack.c.l.b16 %v73
  %v168 = vunpack.c.h.b16 %v73
  %v169 = vunpack.c.l.b16 %v74
  %v170 = vunpack.c.h.b16 %v74
  %v171 = vunpack.c.l.b16 %v75
  %v172 = vunpack.c.h.b16 %v75
  %v173 = vunpack.c.l.b16 %v76
  %v174 = vunpack.c.h.b16 %v76
  %v175 = vunpack.c.l.b16 %v77
  %v176 = vunpack.c.h.b16 %v77
  %v177 = vunpack.c.l.b16 %v78
  %v178 = vunpack.c.h.b16 %v78
  %v179 = vunpack.c.l.b16 %v79
  %v180 = vunpack.c.h.b16 %v79
  %v181 = vunpack.c.l.b16 %v80
  %v182 = vunpack.c.h.b16 %v80
  %v183 = vpack.c.b16 %v153, %v151
  %v184 = vpack.c.b16 %v154, %v152
  %v185 = vpack.c.b16 %v157, %v155
  %v186 = vpack.c.b16 %v158, %v156
  %v187 = vpack.c.b16 %v161, %v159
  %v188 = vpack.c.b16 %v162, %v160
  %v189 = vpack.c.b16 %v165, %v163
  %v190 = vpack.c.b16 %v166, %v164
  %v191 = vpack.c.b16 %v169, %v167
  %v192 = vpack.c.b16 %v170, %v168
  %v193 = vpack.c.b16 %v173, %v171
  %v194 = vpack.c.b16 %v174, %v172
  %v195 = vpack.c.b16 %v177, %v175
  %v196 = vpack.c.b16 %v178, %v176
  %v197 = vpack.c.b16 %v181, %v179
  %v198 = vpack.c.b16 %v182, %v180
  %215 = vmatprep.subr.bf16.mxu0 %v184
  %216 = vmatpush1.bf16.msra.mxu0 %v183
  %217 = vmatprep.subr.bf16.mxu0 %v186
  %218 = vmatpush1.bf16.msra.mxu0 %v185
  %219 = vmatprep.subr.bf16.mxu0 %v188
  %220 = vmatpush1.bf16.msra.mxu0 %v187
  %221 = vmatprep.subr.bf16.mxu0 %v190
  %222 = vmatpush1.bf16.msra.mxu0 %v189
  %223 = vmatprep.subr.bf16.mxu0 %v192
  %224 = vmatpush1.bf16.msra.mxu0 %v191
  %225 = vmatprep.subr.bf16.mxu0 %v194
  %226 = vmatpush1.bf16.msra.mxu0 %v193
  %227 = vmatprep.subr.bf16.mxu0 %v196
  %228 = vmatpush1.bf16.msra.mxu0 %v195
  %229 = vmatprep.subr.bf16.mxu0 %v198
  %230 = vmatpush1.bf16.msra.mxu0 %v197
  %231 = vmatprep.subr.bf16.mxu0 0
  %232 = vmatpush1.bf16.msra.mxu0 0
  %233 = vmatprep.subr.bf16.mxu0 0
  %234 = vmatpush1.bf16.msra.mxu0 0
  %235 = vmatprep.subr.bf16.mxu0 0
  %236 = vmatpush1.bf16.msra.mxu0 0
  %237 = vmatprep.subr.bf16.mxu0 0
  %238 = vmatpush1.bf16.msra.mxu0 0
  %239 = vmatprep.subr.bf16.mxu0 0
  %240 = vmatpush1.bf16.msra.mxu0 0
  %241 = vmatprep.subr.bf16.mxu0 0
  %242 = vmatpush1.bf16.msra.mxu0 0
  %243 = vmatprep.subr.bf16.mxu0 0
  %244 = vmatpush1.bf16.msra.mxu0 0
  %245 = vmatprep.subr.bf16.mxu0 0
  %246 = vmatpush1.bf16.msra.mxu0 0
  %247 = vmatprep.mubr.bf16.mxu0 0
  %248 = vmatmul.mubr.bf16.gmra.mrb[0].mxu0 %v123
  %v249 = vpop.f32.mrb[0].mxu0
  %v250 = vadd.f32 %v128, %v249
  %v251 = vpop.f32.mrb[0].mxu0
  %v252 = vadd.f32 %v132, %v251
  %v253 = vpop.f32.mrb[0].mxu0
  %v254 = vadd.f32 %v128, %v253
  %v255 = vpop.f32.mrb[0].mxu0
  %v256 = vadd.f32 %v132, %v255
  %257 = vdwg.mxu0
  %v258 = vmul.f32 %v250, 0.5
  %v259 = vmul.f32 %v252, 0.5
  %v260 = vmul.f32 %v254, 0.5
  %v261 = vmul.f32 %v256, 0.5
  %v262 = vmul.f32 %v250, 0.70710677
  %v263 = vmul.f32 %v252, 0.70710677
  %v264 = vmul.f32 %v254, 0.70710677
  %v265 = vmul.f32 %v256, 0.70710677
  %v266 = verf.f32.pop %v262
  %v267 = verf.f32.pop %v263
  %v268 = verf.f32.pop %v264
  %v269 = verf.f32.pop %v265
  %v270 = vadd.f32 %v266, 1.0
  %v271 = vadd.f32 %v267, 1.0
  %v272 = vadd.f32 %v268, 1.0
  %v273 = vadd.f32 %v269, 1.0
  %v274 = vmul.f32 %v258, %v270
  %v275 = vmul.f32 %v259, %v271
  %v276 = vmul.f32 %v260, %v272
  %v277 = vmul.f32 %v261, %v273
  %v279 = vlaneseq
  %v280 = vshrl.u32 %v279, 7
  %v281 = vsub.s32 0, %v280
  %v282 = vrot.slane %v82, %v281
  %v283 = vlaneseq
  %v284 = vshrl.u32 %v283, 7
  %v285 = vsub.s32 1, %v284
  %v286 = vrot.slane %v82, %v285
  %v289 = vmul.f32 %v274, %v282
  %v290 = vmul.f32 %v275, %v286
  %v291 = vmul.f32 %v276, %v282
  %v292 = vmul.f32 %v277, %v286
  %v294 = vlaneseq
  %v295 = vshrl.u32 %v294, 7
  %v296 = vsub.s32 0, %v295
  %v297 = vrot.slane %v83, %v296
  %v298 = vlaneseq
  %v299 = vshrl.u32 %v298, 7
  %v300 = vsub.s32 1, %v299
  %v301 = vrot.slane %v83, %v300
  %v304 = vadd.f32 %v289, %v297
  %v305 = vadd.f32 %v290, %v301
  %v306 = vadd.f32 %v291, %v297
  %v307 = vadd.f32 %v292, %v301
  %v308 = vld [vmem:[%s7] sm:$0x3]
  %v309 = vadd.f32 %v304, %v306
  %v310 = vrot.slane %v309, 4
  %v311 = vadd.f32 %v309, %v310
  %v312 = vrot.slane %v311, 2
  %v313 = vadd.f32 %v311, %v312
  %v314 = vrot.slane %v313, 1
  %v315 = vadd.f32 %v313, %v314
  %v316 = vadd.f32 %v305, %v307
  %v317 = vrot.slane %v316, 4
  %v318 = vadd.f32 %v316, %v317
  %v319 = vrot.slane %v318, 2
  %v320 = vadd.f32 %v318, %v319
  %v321 = vrot.slane %v320, 1
  %v322 = vadd.f32 %v320, %v321
  %v325 = vcombine.low %v315, %v322
  %v327 = vunpack.c.l.s4 1966171168
  %v328 = vunpack.c.0.s8 %v327
  %v329 = vlaneseq
  %v330 = vshrl.u32 %v329, 7
  %v331 = vsub.s32 %v328, %v330
  %v332 = vrot.slane %v325, %v331
  %v334 = vunpack.c.l.s4 1966171168
  %v335 = vunpack.c.0.s8 %v334
  %v336 = vlaneseq
  %v337 = vshrl.u32 %v336, 7
  %v338 = vsub.s32 %v335, %v337
  %v339 = vrot.slane %v332, %v338
  %v341 = vadd.f32 %v308, %v339
  %v342 = vlaneseq
  %vm343 = vcmp.ge.s32.totalorder %v342, 0
  %vm344 = vcmp.lt.s32.totalorder %v342, 256
  %vm345 = vmand %vm343, %vm344
  %346 = vst.msk [vmem:[%s7] sm:$0x3] %vm345, %v341
  %v347 = vld [vmem:[%s8] sm:$0x3]
  %v348 = vmul.f32 %v304, %v304
  %v349 = vmul.f32 %v305, %v305
  %v350 = vmul.f32 %v306, %v306
  %v351 = vmul.f32 %v307, %v307
  %v352 = vadd.f32 %v348, %v350
  %v353 = vrot.slane %v352, 4
  %v354 = vadd.f32 %v352, %v353
  %v355 = vrot.slane %v354, 2
  %v356 = vadd.f32 %v354, %v355
  %v357 = vrot.slane %v356, 1
  %v358 = vadd.f32 %v356, %v357
  %v359 = vadd.f32 %v349, %v351
  %v360 = vrot.slane %v359, 4
  %v361 = vadd.f32 %v359, %v360
  %v362 = vrot.slane %v361, 2
  %v363 = vadd.f32 %v361, %v362
  %v364 = vrot.slane %v363, 1
  %v365 = vadd.f32 %v363, %v364
  %v368 = vcombine.low %v358, %v365
  %v370 = vunpack.c.l.s4 1966171168
  %v371 = vunpack.c.0.s8 %v370
  %v372 = vlaneseq
  %v373 = vshrl.u32 %v372, 7
  %v374 = vsub.s32 %v371, %v373
  %v375 = vrot.slane %v368, %v374
  %v377 = vunpack.c.l.s4 1966171168
  %v378 = vunpack.c.0.s8 %v377
  %v379 = vlaneseq
  %v380 = vshrl.u32 %v379, 7
  %v381 = vsub.s32 %v378, %v380
  %v382 = vrot.slane %v375, %v381
  %v384 = vadd.f32 %v347, %v382
  %385 = vst.msk [vmem:[%s8] sm:$0x3] %vm345, %v384
  // Predicated region
  $region34: #{conformer_block.9} parent=0 // pred_check
    _
  $region35: #{conformer_block.9} parent=0 // pred_check_branch
    %387 = sbr.rel (0) target = $region37
  $region36: #{conformer_block.9} parent=0 // pred_region
    _
  $region37: #{conformer_block.9} parent=0 // pred_fallthru
    _
  // Predicated region
  $region38: #{conformer_block.9} parent=0 // pred_check
    _
  $region39: #{conformer_block.9} parent=0 // pred_check_branch
    %389 = sbr.rel (0) target = $region41
  $region40: #{conformer_block.9} parent=0 // pred_region
    _
  $region41: #{conformer_block.9} parent=0 // pred_fallthru
    _
  // Predicated region
  $region42: #{conformer_block.9} parent=0 // pred_check
    _
  $region43: #{conformer_block.9} parent=0 // pred_check_branch
    %391 = sbr.rel (0) target = $region45
  $region44: #{conformer_block.9} parent=0 // pred_region
    _
  $region45: #{conformer_block.9} parent=0 // pred_fallthru
    _
  // Predicated region
  $region46: #{conformer_block.9} parent=0 // pred_check
    _
  $region47: #{conformer_block.9} parent=0 // pred_check_branch
    %393 = sbr.rel (0) target = $region49
  $region48: #{conformer_block.9} parent=0 // pred_region
    _
  $region49: #{conformer_block.9} parent=0 // pred_fallthru
    _

// kernel: conformer_block.8
$region0: #{conformer_block.8}
  #allocation0 [shape = 'u32[]', space=smem, size = 0x4, offset = 0x4, fixed_abs, tag = 'smem constant byte address 0x4 - core index']
  #allocation1 [shape = 'u32[144,128]{1,0:T(1,128)}', space=vmem, size = 0x12000, scoped, tag = 'internal scratch']
  #allocation2 [shape = 'f32[4,8,1]{2,1,0:T(8,128)}', space=vmem, size = 0x4000, scoped, tag = 'scratch operand']
  #allocation3 [shape = 'f32[4,8,1]{2,1,0:T(8,128)}', space=vmem, size = 0x4000, scoped, tag = 'scratch operand']
  #allocation4 [shape = 'f32[4,8,32]{2,1,0:T(8,128)}', space=vmem, size = 0x4000, scoped, tag = 'scratch operand']
  #allocation5 [shape = 'f32[8,128]{1,0:T(8,128)}', space=vmem, size = 0x1000, scoped, tag = 'scratch operand']
  %s0 = inlined_call_operand.vmem [shape: f32[2,8,128], index: 0, kind: input, shape index: {}, may-alias: {0,6}]
  %s1 = inlined_call_operand.vmem [shape: bf16[2,8,384], index: 1, kind: input, shape index: {}, may-alias: {1,2,3}]
  %s2 = inlined_call_operand.vmem [shape: bf16[2,8,384], index: 2, kind: input, shape index: {}, may-alias: {1,2,3}]
  %s3 = inlined_call_operand.vmem [shape: bf16[2,8,384], index: 3, kind: input, shape index: {}, may-alias: {1,2,3}]
  %s4 = inlined_call_operand.vmem [shape: bf16[128,128], index: 4, kind: input, shape index: {}]
  %s5 = inlined_call_operand.vmem [shape: f32[1,128], index: 5, kind: input, shape index: {}]
  %s6 = inlined_call_operand.vmem [shape: f32[2,8,128], index: 6, kind: output, shape index: {}, may-alias: {0,6}]
  %s7 = sld [smem:[#allocation0]]
  $region65: #{conformer_block.8} parent=0
    _
  %s9 = ssub.s32 1, %s7
  %s10 = scalar_select 0, %s9, %s7
  loop: start=0, step=1, limit=4
  $region2: #{conformer_block.8} parent=0 // loop_pre_header
    _
  $region3: #{conformer_block.8} parent=0 // loop_header
    %s12 = sphi 0, %s16
    %p13 = scmp.ge.s32.totalorder %s12, 4
    %s19 = sphi 0, %s38
    %s20 = sphi 0, %s34
    %s21 = sphi 0, %s30
    %s22 = sphi 0, %s19
    %s23 = sphi 0, %s20
    %s24 = sphi 0, %s21
    %s25 = sphi 0, %s22
    %s26 = sphi 0, %s23
    %s27 = sphi 0, %s24
    %s43 = sphi 0, %s45
    %s46 = sphi 0, %s43
    %s47 = sphi 0, %s46
    %s63 = sphi 0, %s47
    %s71 = sphi 0, %s73
    %s74 = sphi 0, %s71
    %s75 = sphi 0, %s74
    %s91 = sphi 0, %s75
    %s99 = sphi 0, %s101
    %s102 = sphi 0, %s99
    %s103 = sphi 0, %s102
    %s119 = sphi 0, %s103
    %s127 = sphi 0, %s129
    %s130 = sphi 0, %s127
    %s131 = sphi 0, %s130
    %s147 = sphi 0, %s131
    %s151 = sphi 0, %s151
    %s153 = sphi 0, %s151
    %s154 = sphi 0, %s153
    %s168 = sphi 0, %s154
    %s172 = sphi 0, %s172
    %s174 = sphi 0, %s172
    %s175 = sphi 0, %s174
    %s189 = sphi 0, %s175
    %s197 = sphi 0, %s199
    %s200 = sphi 0, %s197
    %s201 = sphi 0, %s200
    %s217 = sphi 0, %s201
  $region4: #{conformer_block.8} parent=0 // loop_header_branch
    %15 = sbr.rel (%p13) target = $region8
  $region5: #{conformer_block.8} parent=0 // loop_body
    %s17 = ssub.s32 %s12, 1
    %s18 = ssub.s32 %s12, 2
    %s28 = sadd.s32 1, %s21
    %p29 = scmp.ge.s32.totalorder %s28, 1
    %s30 = scalar_select %p29, 0, %s28
    %s31 = sadd.s32 1, %s20
    %s32 = scalar_select %p29, %s31, %s20
    %p33 = scmp.ge.s32.totalorder %s32, 1
    %s34 = scalar_select %p33, 0, %s32
    %s35 = sadd.s32 1, %s19
    %s36 = scalar_select %p33, %s35, %s19
    %p37 = scmp.ge.s32.totalorder %s36, 2
    %s38 = scalar_select %p37, 0, %s36
    %s39 = ssub.s32 %s19, %s38
    %s40 = ssub.s32 %s20, %s34
    %s41 = sor.u32 %s39, %s40
    %p42 = scmp.eq.s32.totalorder %s41, 0
    %s44 = sadd.s32 %s43, 1
    %s45 = scalar_select %p42, %s43, %s44
    %p48 = pneg %p42
    %p49 = scmp.eq.s32.totalorder %s12, 1
    %p50 = por %p48, %p49
    %p51 = scmp.ne.s32.totalorder %s43, %s46
    %p52 = scmp.eq.s32.totalorder %s12, 0
    %p53 = por %p51, %p52
    %p54 = scmp.ne.s32.totalorder %s43, %s46
    %p55 = scmp.eq.s32.totalorder %s17, 1
    %p56 = por %p54, %p55
    %p57 = scmp.ne.s32.totalorder %s46, %s47
    %p58 = scmp.eq.s32.totalorder %s17, 0
    %p59 = por %p57, %p58
    %p60 = scmp.ne.s32.totalorder %s46, %s47
    %p61 = scmp.eq.s32.totalorder %s18, 1
    %p62 = por %p60, %p61
    %p64 = scmp.ne.s32.totalorder %s47, %s63
    %p65 = scmp.eq.s32.totalorder %s18, 0
    %p66 = por %p64, %p65
    %s67 = ssub.s32 %s19, %s38
    %s68 = ssub.s32 %s20, %s34
    %s69 = sor.u32 %s67, %s68
    %p70 = scmp.eq.s32.totalorder %s69, 0
    %s72 = sadd.s32 %s71, 1
    %s73 = scalar_select %p70, %s71, %s72
    %p76 = pneg %p70
    %p77 = scmp.eq.s32.totalorder %s12, 1
    %p78 = por %p76, %p77
    %p79 = scmp.ne.s32.totalorder %s71, %s74
    %p80 = scmp.eq.s32.totalorder %s12, 0
    %p81 = por %p79, %p80
    %p82 = scmp.ne.s32.totalorder %s71, %s74
    %p83 = scmp.eq.s32.totalorder %s17, 1
    %p84 = por %p82, %p83
    %p85 = scmp.ne.s32.totalorder %s74, %s75
    %p86 = scmp.eq.s32.totalorder %s17, 0
    %p87 = por %p85, %p86
    %p88 = scmp.ne.s32.totalorder %s74, %s75
    %p89 = scmp.eq.s32.totalorder %s18, 1
    %p90 = por %p88, %p89
    %p92 = scmp.ne.s32.totalorder %s75, %s91
    %p93 = scmp.eq.s32.totalorder %s18, 0
    %p94 = por %p92, %p93
    %s95 = ssub.s32 %s19, %s38
    %s96 = ssub.s32 %s21, %s30
    %s97 = sor.u32 %s95, %s96
    %p98 = scmp.eq.s32.totalorder %s97, 0
    %s100 = sadd.s32 %s99, 1
    %s101 = scalar_select %p98, %s99, %s100
    %p104 = pneg %p98
    %p105 = scmp.eq.s32.totalorder %s12, 1
    %p106 = por %p104, %p105
    %p107 = scmp.ne.s32.totalorder %s99, %s102
    %p108 = scmp.eq.s32.totalorder %s12, 0
    %p109 = por %p107, %p108
    %p110 = scmp.ne.s32.totalorder %s99, %s102
    %p111 = scmp.eq.s32.totalorder %s17, 1
    %p112 = por %p110, %p111
    %p113 = scmp.ne.s32.totalorder %s102, %s103
    %p114 = scmp.eq.s32.totalorder %s17, 0
    %p115 = por %p113, %p114
    %p116 = scmp.ne.s32.totalorder %s102, %s103
    %p117 = scmp.eq.s32.totalorder %s18, 1
    %p118 = por %p116, %p117
    %p120 = scmp.ne.s32.totalorder %s103, %s119
    %p121 = scmp.eq.s32.totalorder %s18, 0
    %p122 = por %p120, %p121
    %s123 = ssub.s32 %s19, %s38
    %s124 = ssub.s32 %s21, %s30
    %s125 = sor.u32 %s123, %s124
    %p126 = scmp.eq.s32.totalorder %s125, 0
    %s128 = sadd.s32 %s127, 1
    %s129 = scalar_select %p126, %s127, %s128
    %p132 = pneg %p126
    %p133 = scmp.eq.s32.totalorder %s12, 1
    %p134 = por %p132, %p133
    %p135 = scmp.ne.s32.totalorder %s127, %s130
    %p136 = scmp.eq.s32.totalorder %s12, 0
    %p137 = por %p135, %p136
    %p138 = scmp.ne.s32.totalorder %s127, %s130
    %p139 = scmp.eq.s32.totalorder %s17, 1
    %p140 = por %p138, %p139
    %p141 = scmp.ne.s32.totalorder %s130, %s131
    %p142 = scmp.eq.s32.totalorder %s17, 0
    %p143 = por %p141, %p142
    %p144 = scmp.ne.s32.totalorder %s130, %s131
    %p145 = scmp.eq.s32.totalorder %s18, 1
    %p146 = por %p144, %p145
    %p148 = scmp.ne.s32.totalorder %s131, %s147
    %p149 = scmp.eq.s32.totalorder %s18, 0
    %p150 = por %p148, %p149
    %s152 = sadd.s32 %s151, 1
    %p155 = scmp.eq.s32.totalorder %s12, 1
    %p156 = scmp.ne.s32.totalorder %s151, %s153
    %p157 = scmp.eq.s32.totalorder %s12, 0
    %p158 = por %p156, %p157
    %p159 = scmp.ne.s32.totalorder %s151, %s153
    %p160 = scmp.eq.s32.totalorder %s17, 1
    %p161 = por %p159, %p160
    %p162 = scmp.ne.s32.totalorder %s153, %s154
    %p163 = scmp.eq.s32.totalorder %s17, 0
    %p164 = por %p162, %p163
    %p165 = scmp.ne.s32.totalorder %s153, %s154
    %p166 = scmp.eq.s32.totalorder %s18, 1
    %p167 = por %p165, %p166
    %p169 = scmp.ne.s32.totalorder %s154, %s168
    %p170 = scmp.eq.s32.totalorder %s18, 0
    %p171 = por %p169, %p170
    %s173 = sadd.s32 %s172, 1
    %p176 = scmp.eq.s32.totalorder %s12, 1
    %p177 = scmp.ne.s32.totalorder %s172, %s174
    %p178 = scmp.eq.s32.totalorder %s12, 0
    %p179 = por %p177, %p178
    %p180 = scmp.ne.s32.totalorder %s172, %s174
    %p181 = scmp.eq.s32.totalorder %s17, 1
    %p182 = por %p180, %p181
    %p183 = scmp.ne.s32.totalorder %s174, %s175
    %p184 = scmp.eq.s32.totalorder %s17, 0
    %p185 = por %p183, %p184
    %p186 = scmp.ne.s32.totalorder %s174, %s175
    %p187 = scmp.eq.s32.totalorder %s18, 1
    %p188 = por %p186, %p187
    %p190 = scmp.ne.s32.totalorder %s175, %s189
    %p191 = scmp.eq.s32.totalorder %s18, 0
    %p192 = por %p190, %p191
    %s193 = ssub.s32 %s19, %s38
    %s194 = ssub.s32 %s20, %s34
    %s195 = sor.u32 %s193, %s194
    %p196 = scmp.eq.s32.totalorder %s195, 0
    %s198 = sadd.s32 %s197, 1
    %s199 = scalar_select %p196, %s197, %s198
    %p202 = pneg %p196
    %p203 = scmp.eq.s32.totalorder %s12, 1
    %p204 = por %p202, %p203
    %p205 = scmp.ne.s32.totalorder %s197, %s200
    %p206 = scmp.eq.s32.totalorder %s12, 0
    %p207 = por %p205, %p206
    %p208 = scmp.ne.s32.totalorder %s197, %s200
    %p209 = scmp.eq.s32.totalorder %s17, 1
    %p210 = por %p208, %p209
    %p211 = scmp.ne.s32.totalorder %s200, %s201
    %p212 = scmp.eq.s32.totalorder %s17, 0
    %p213 = por %p211, %p212
    %p214 = scmp.ne.s32.totalorder %s200, %s201
    %p215 = scmp.eq.s32.totalorder %s18, 1
    %p216 = por %p214, %p215
    %p218 = scmp.ne.s32.totalorder %s201, %s217
    %p219 = scmp.eq.s32.totalorder %s18, 0
    %p220 = por %p218, %p219
    %p221 = scmp.le.s32.totalorder 1, %s12
    %p222 = scmp.lt.s32.totalorder %s12, 3
    %p223 = pnand %p221, %p222
    %p224 = pneg %p223
    // Predicated region
    $region9: #{conformer_block.8} parent=5 // pred_check
      _
    $region10: #{conformer_block.8} parent=5 // pred_check_branch
      %226 = sbr.rel (%p223) target = $region12
    $region11: #{conformer_block.8} parent=5 // pred_region
      %s227 = ssub.s32 %s12, 1
      // Predicated region
      $region13: #{conformer_block.8} parent=11 // pred_check
        %p228 = pneg %p164
      $region14: #{conformer_block.8} parent=11 // pred_check_branch
        %230 = sbr.rel (%p228) target = $region16
      $region15: #{conformer_block.8} parent=11 // pred_region
        _
      $region16: #{conformer_block.8} parent=11 // pred_fallthru
        _
      // Predicated region
      $region17: #{conformer_block.8} parent=11 // pred_check
        %p231 = pneg %p185
      $region18: #{conformer_block.8} parent=11 // pred_check_branch
        %233 = sbr.rel (%p231) target = $region20
      $region19: #{conformer_block.8} parent=11 // pred_region
        _
      $region20: #{conformer_block.8} parent=11 // pred_fallthru
        _
    $region12: #{conformer_block.8} parent=5 // pred_fallthru
      _
    %p234 = scmp.lt.s32.totalorder %s12, 2
    // Predicated region
    $region21: #{conformer_block.8} parent=5 // pred_check
      %p235 = pneg %p234
    $region22: #{conformer_block.8} parent=5 // pred_check_branch
      %237 = sbr.rel (%p235) target = $region24
    $region23: #{conformer_block.8} parent=5 // pred_region
      // Predicated region
      $region25: #{conformer_block.8} parent=23 // pred_check
        %p238 = pneg %p53
      $region26: #{conformer_block.8} parent=23 // pred_check_branch
        %240 = sbr.rel (%p238) target = $region28
      $region27: #{conformer_block.8} parent=23 // pred_region
        %p241 = scmp.lt.s32.totalorder %s19, 1
        %s242 = scalar_select %p241, %s19, 1
        %p243 = scmp.lt.s32.totalorder %s20, 0
        %s244 = scalar_select %p243, %s20, 0
        %s245 = sadd.s32 %s244, %s242
        %s246 = smul.addr %s245, 8
        %s247 = scalar_lea.vmem %s0, %s246
      $region28: #{conformer_block.8} parent=23 // pred_fallthru
        _
      // Predicated region
      $region29: #{conformer_block.8} parent=23 // pred_check
        %p248 = pneg %p81
      $region30: #{conformer_block.8} parent=23 // pred_check_branch
        %250 = sbr.rel (%p248) target = $region32
      $region31: #{conformer_block.8} parent=23 // pred_region
        %p251 = scmp.lt.s32.totalorder %s19, 1
        %s252 = scalar_select %p251, %s19, 1
        %p253 = scmp.lt.s32.totalorder %s20, 0
        %s254 = scalar_select %p253, %s20, 0
        %s255 = smul.addr %s254, 3
        %s256 = smul.addr %s252, 3
        %s257 = sadd.s32 %s255, %s256
        %s258 = smul.addr %s257, 4
        %s259 = scalar_lea.vmem %s1, %s258
      $region32: #{conformer_block.8} parent=23 // pred_fallthru
        _
      // Predicated region
      $region33: #{conformer_block.8} parent=23 // pred_check
        %p260 = pneg %p109
      $region34: #{conformer_block.8} parent=23 // pred_check_branch
        %262 = sbr.rel (%p260) target = $region36
      $region35: #{conformer_block.8} parent=23 // pred_region
        %p263 = scmp.lt.s32.totalorder %s19, 1
        %s264 = scalar_select %p263, %s19, 1
        %p265 = scmp.lt.s32.totalorder %s21, 0
        %s266 = scalar_select %p265, %s21, 0
        %s267 = smul.addr %s266, 3
        %s268 = sadd.s32 1, %s267
        %s269 = smul.addr %s264, 3
        %s270 = sadd.s32 %s268, %s269
        %s271 = smul.addr %s270, 4
        %s272 = scalar_lea.vmem %s2, %s271
      $region36: #{conformer_block.8} parent=23 // pred_fallthru
        _
      // Predicated region
      $region37: #{conformer_block.8} parent=23 // pred_check
        %p273 = pneg %p137
      $region38: #{conformer_block.8} parent=23 // pred_check_branch
        %275 = sbr.rel (%p273) target = $region40
      $region39: #{conformer_block.8} parent=23 // pred_region
        %p276 = scmp.lt.s32.totalorder %s19, 1
        %s277 = scalar_select %p276, %s19, 1
        %p278 = scmp.lt.s32.totalorder %s21, 0
        %s279 = scalar_select %p278, %s21, 0
        %s280 = smul.addr %s279, 3
        %s281 = sadd.s32 2, %s280
        %s282 = smul.addr %s277, 3
        %s283 = sadd.s32 %s281, %s282
        %s284 = smul.addr %s283, 4
        %s285 = scalar_lea.vmem %s3, %s284
      $region40: #{conformer_block.8} parent=23 // pred_fallthru
        _
    $region24: #{conformer_block.8} parent=5 // pred_fallthru
      _
    %p286 = scmp.le.s32.totalorder 1, %s12
    %p287 = scmp.lt.s32.totalorder %s12, 3
    %p288 = pnand %p286, %p287
    %p289 = pneg %p288
    // Predicated region
    $region41: #{conformer_block.8} parent=5 // pred_check
      _
    $region42: #{conformer_block.8} parent=5 // pred_check_branch
      %291 = sbr.rel (%p288) target = $region44
    $region43: #{conformer_block.8} parent=5 // pred_region
      %s292 = ssub.s32 %s12, 1
      %p293 = scmp.lt.s32.totalorder %s22, 1
      %s294 = scalar_select %p293, %s22, 1
      %p295 = scmp.lt.s32.totalorder %s23, 0
      %s296 = scalar_select %p295, %s23, 0
      %s297 = sadd.s32 %s296, %s294
      %s298 = smul.addr %s297, 8
      %s299 = scalar_lea.vmem %s0, %s298
      %p300 = pneg %p59
      %p301 = pneg %p56
      %p302 = scmp.lt.s32.totalorder %s22, 1
      %s303 = scalar_select %p302, %s22, 1
      %p304 = scmp.lt.s32.totalorder %s23, 0
      %s305 = scalar_select %p304, %s23, 0
      %s306 = smul.addr %s305, 3
      %s307 = smul.addr %s303, 3
      %s308 = sadd.s32 %s306, %s307
      %s309 = smul.addr %s308, 4
      %s310 = scalar_lea.vmem %s1, %s309
      %p311 = pneg %p87
      %p312 = pneg %p84
      %p313 = scmp.lt.s32.totalorder %s22, 1
      %s314 = scalar_select %p313, %s22, 1
      %p315 = scmp.lt.s32.totalorder %s24, 0
      %s316 = scalar_select %p315, %s24, 0
      %s317 = smul.addr %s316, 3
      %s318 = sadd.s32 1, %s317
      %s319 = smul.addr %s314, 3
      %s320 = sadd.s32 %s318, %s319
      %s321 = smul.addr %s320, 4
      %s322 = scalar_lea.vmem %s2, %s321
      %p323 = pneg %p115
      %p324 = pneg %p112
      %p325 = scmp.lt.s32.totalorder %s22, 1
      %s326 = scalar_select %p325, %s22, 1
      %p327 = scmp.lt.s32.totalorder %s24, 0
      %s328 = scalar_select %p327, %s24, 0
      %s329 = smul.addr %s328, 3
      %s330 = sadd.s32 2, %s329
      %s331 = smul.addr %s326, 3
      %s332 = sadd.s32 %s330, %s331
      %s333 = smul.addr %s332, 4
      %s334 = scalar_lea.vmem %s3, %s333
      %p335 = pneg %p143
      %p336 = pneg %p140
      %p337 = pneg %p164
      %p338 = pneg %p161
      %p339 = pneg %p185
      %p340 = pneg %p182
      %p341 = pneg %p213
      %p342 = pneg %p210
      %p343 = scmp.lt.s32.totalorder %s22, 1
      %s344 = scalar_select %p343, %s22, 1
      %p345 = scmp.lt.s32.totalorder %s23, 0
      %s346 = scalar_select %p345, %s23, 0
      %s347 = sadd.s32 %s346, %s344
      %s348 = smul.addr %s347, 8
      %s349 = scalar_lea.vmem %s6, %s348
      %p350 = scmp.lt.s32.totalorder %s22, 1
      %s351 = scalar_select %p350, %s22, 1
      %p352 = scmp.lt.s32.totalorder %s23, 0
      %s353 = scalar_select %p352, %s23, 0
      %s354 = sadd.s32 %s353, %s351
      %s355 = smul.addr %s354, 8
      %s356 = scalar_lea.vmem %s0, %s355
      %p357 = scmp.lt.s32.totalorder %s22, 1
      %s358 = scalar_select %p357, %s22, 1
      %p359 = scmp.lt.s32.totalorder %s23, 0
      %s360 = scalar_select %p359, %s23, 0
      %s361 = smul.addr %s360, 3
      %s362 = smul.addr %s358, 3
      %s363 = sadd.s32 %s361, %s362
      %s364 = smul.addr %s363, 4
      %s365 = scalar_lea.vmem %s1, %s364
      %p366 = scmp.lt.s32.totalorder %s22, 1
      %s367 = scalar_select %p366, %s22, 1
      %p368 = scmp.lt.s32.totalorder %s24, 0
      %s369 = scalar_select %p368, %s24, 0
      %s370 = smul.addr %s369, 3
      %s371 = sadd.s32 1, %s370
      %s372 = smul.addr %s367, 3
      %s373 = sadd.s32 %s371, %s372
      %s374 = smul.addr %s373, 4
      %s375 = scalar_lea.vmem %s2, %s374
      %p376 = scmp.lt.s32.totalorder %s22, 1
      %s377 = scalar_select %p376, %s22, 1
      %p378 = scmp.lt.s32.totalorder %s24, 0
      %s379 = scalar_select %p378, %s24, 0
      %s380 = smul.addr %s379, 3
      %s381 = sadd.s32 2, %s380
      %s382 = smul.addr %s377, 3
      %s383 = sadd.s32 %s381, %s382
      %s384 = smul.addr %s383, 4
      %s385 = scalar_lea.vmem %s3, %s384
      %p386 = scmp.lt.s32.totalorder %s22, 1
      %s387 = scalar_select %p386, %s22, 1
      %p388 = scmp.lt.s32.totalorder %s23, 0
      %s389 = scalar_select %p388, %s23, 0
      %s390 = sadd.s32 %s389, %s387
      %s391 = smul.addr %s390, 8
      %s392 = scalar_lea.vmem %s6, %s391
      %p394 = scmp.eq.s32.totalorder %s24, 0
      // Predicated region
      $region45: #{conformer_block.8} parent=43 // pred_check
        %p395 = pneg %p394
      $region46: #{conformer_block.8} parent=43 // pred_check_branch
        %397 = sbr.rel (%p395) target = $region48
      $region47: #{conformer_block.8} parent=43 // pred_region
        %vm398 = vcmask 7168
        %399 = vst.msk [vmem:[#allocation2] sm:$0xff] %vm398, -inf
        %400 = vst.msk [vmem:[#allocation2 + $0x8] sm:$0xff] %vm398, -inf
        %401 = vst.msk [vmem:[#allocation2 + $0x10] sm:$0xff] %vm398, -inf
        %402 = vst.msk [vmem:[#allocation2 + $0x18] sm:$0xff] %vm398, -inf
        %403 = vst.msk [vmem:[#allocation3] sm:$0xff] %vm398, 0.0
        %404 = vst.msk [vmem:[#allocation3 + $0x8] sm:$0xff] %vm398, 0.0
        %405 = vst.msk [vmem:[#allocation3 + $0x10] sm:$0xff] %vm398, 0.0
        %406 = vst.msk [vmem:[#allocation3 + $0x18] sm:$0xff] %vm398, 0.0
        %vm407 = vcmask 261120
        %408 = vst.msk [vmem:[#allocation4] sm:$0xff] %vm407, 0.0
        %409 = vst.msk [vmem:[#allocation4 + $0x8] sm:$0xff] %vm407, 0.0
        %410 = vst.msk [vmem:[#allocation4 + $0x10] sm:$0xff] %vm407, 0.0
        %411 = vst.msk [vmem:[#allocation4 + $0x18] sm:$0xff] %vm407, 0.0
      $region48: #{conformer_block.8} parent=43 // pred_fallthru
        _
      %v412 = vld [vmem:[%s365] sm:$0xf]
      %v413 = vld [vmem:[%s375] sm:$0xf]
      %v414 = vld [vmem:[%s385] sm:$0xf]
      %vm415 = vcmask 261120
      %v417 = vsel %vm415, %v412, 0
      %v420 = vsel %vm415, %v413, 0
      %422 = vmatprep.subr.bf16.mxu0 0
      %423 = vmatpush1.bf16.xpose.msra.mxu0 %v420
      %424 = vmatprep.subr.bf16.mxu0 0
      %425 = vmatpush1.bf16.xpose.msra.mxu0 0
      %426 = vmatprep.subr.bf16.mxu0 0
      %427 = vmatpush1.bf16.xpose.msra.mxu0 0
      %428 = vmatprep.subr.bf16.mxu0 0
      %429 = vmatpush1.bf16.xpose.msra.mxu0 0
      %430 = vmatprep.subr.bf16.mxu0 0
      %431 = vmatpush1.bf16.xpose.msra.mxu0 0
      %432 = vmatprep.subr.bf16.mxu0 0
      %433 = vmatpush1.bf16.xpose.msra.mxu0 0
      %434 = vmatprep.subr.bf16.mxu0 0
      %435 = vmatpush1.bf16.xpose.msra.mxu0 0
      %436 = vmatprep.subr.bf16.mxu0 0
      %437 = vmatpush1.bf16.xpose.msra.mxu0 0
      %438 = vmatprep.subr.bf16.mxu0 0
      %439 = vmatpush1.bf16.xpose.msra.mxu0 0
      %440 = vmatprep.subr.bf16.mxu0 0
      %441 = vmatpush1.bf16.xpose.msra.mxu0 0
      %442 = vmatprep.subr.bf16.mxu0 0
      %443 = vmatpush1.bf16.xpose.msra.mxu0 0
      %444 = vmatprep.subr.bf16.mxu0 0
      %445 = vmatpush1.bf16.xpose.msra.mxu0 0
      %446 = vmatprep.subr.bf16.mxu0 0
      %447 = vmatpush1.bf16.xpose.msra.mxu0 0
      %448 = vmatprep.subr.bf16.mxu0 0
      %449 = vmatpush1.bf16.xpose.msra.mxu0 0
      %450 = vmatprep.subr.bf16.mxu0 0
      %451 = vmatpush1.bf16.xpose.msra.mxu0 0
      %452 = vmatprep.subr.bf16.mxu0 0
      %453 = vmatpush1.bf16.xpose.msra.mxu0 0
      %454 = vmatprep.mubr.bf16.mxu0 0
      %455 = vmatmul.mubr.bf16.gmra.mrb[0].mxu0 %v417
      %v456 = vpop.f32.mrb[0].mxu0
      %v457 = vadd.f32 0.0, %v456
      %v458 = vpop.f32.mrb[0].mxu0
      %v459 = vpop.f32.mrb[0].mxu0
      %v460 = vpop.f32.mrb[0].mxu0
      %461 = vdwg.mxu0
      %v462 = vmul.f32 %v457, 0.17677669
      %v463 = vld [vmem:[#allocation2] sm:$0xff]
      %vm464 = vcmask 64512
      %v465 = vsel %vm464, %v462, -inf
      %466 = vmax.xlane.f32.xlu0 %v465
      %v467 = vpop.xlane.xlu0 %466
      %v468 = vmax.f32 %v463, %v467
      %v469 = vsub.f32 %v463, %v468
      %v470 = vmul.f32 %v469, 1.442695
      %v471 = vpow.pop %v470
      %473 = vset.pattern.permute.xlu0 0
      %474 = vperm.xlu0 %473, %v468
      %v475 = vpop.permute.xlu0 %474
      %v477 = vsub.f32 %v462, %v475
      %v478 = vmul.f32 %v477, 1.442695
      %v479 = vpow.pop %v478
      %v480 = vld [vmem:[#allocation3] sm:$0xff]
      %v481 = vmul.f32 %v471, %v480
      %v482 = vsel %vm464, %v479, 0.0
      %483 = vadd.xlane.f32.xlu0 %v482
      %v484 = vpop.xlane.xlu0 %483
      %v485 = vadd.f32 %v481, %v484
      %vm486 = vcmask 7168
      %487 = vst.msk [vmem:[#allocation3] sm:$0xff] %vm486, %v485
      %v488 = vld [vmem:[#allocation4] sm:$0xff]
      %490 = vset.pattern.permute.xlu0 0
      %491 = vperm.xlu0 %490, %v471
      %v492 = vpop.permute.xlu0 %491
      %v494 = vmul.f32 %v492, %v488
      %v495 = vpack.c.bf16 %v479, %v479
      %v497 = vsel %vm464, %v495, 0
      %vm499 = vcmask 1043456
      %v501 = vsel %vm499, %v414, 0
      %503 = vmatprep.subr.bf16.mxu0 0
      %504 = vmatpush1.bf16.msra.mxu0 %v501
      %505 = vmatprep.subr.bf16.mxu0 0
      %506 = vmatpush1.bf16.msra.mxu0 0
      %507 = vmatprep.subr.bf16.mxu0 0
      %508 = vmatpush1.bf16.msra.mxu0 0
      %509 = vmatprep.subr.bf16.mxu0 0
      %510 = vmatpush1.bf16.msra.mxu0 0
      %511 = vmatprep.subr.bf16.mxu0 0
      %512 = vmatpush1.bf16.msra.mxu0 0
      %513 = vmatprep.subr.bf16.mxu0 0
      %514 = vmatpush1.bf16.msra.mxu0 0
      %515 = vmatprep.subr.bf16.mxu0 0
      %516 = vmatpush1.bf16.msra.mxu0 0
      %517 = vmatprep.subr.bf16.mxu0 0
      %518 = vmatpush1.bf16.msra.mxu0 0
      %519 = vmatprep.subr.bf16.mxu0 0
      %520 = vmatpush1.bf16.msra.mxu0 0
      %521 = vmatprep.subr.bf16.mxu0 0
      %522 = vmatpush1.bf16.msra.mxu0 0
      %523 = vmatprep.subr.bf16.mxu0 0
      %524 = vmatpush1.bf16.msra.mxu0 0
      %525 = vmatprep.subr.bf16.mxu0 0
      %526 = vmatpush1.bf16.msra.mxu0 0
      %527 = vmatprep.subr.bf16.mxu0 0
      %528 = vmatpush1.bf16.msra.mxu0 0
      %529 = vmatprep.subr.bf16.mxu0 0
      %530 = vmatpush1.bf16.msra.mxu0 0
      %531 = vmatprep.subr.bf16.mxu0 0
      %532 = vmatpush1.bf16.msra.mxu0 0
      %533 = vmatprep.subr.bf16.mxu0 0
      %534 = vmatpush1.bf16.msra.mxu0 0
      %535 = vmatprep.mubr.bf16.mxu0 0
      %536 = vmatmul.mubr.bf16.gmra.mrb[0].mxu0 %v497
      %v537 = vpop.f32.mrb[0].mxu0
      %v538 = vadd.f32 0.0, %v537
      %v539 = vpop.f32.mrb[0].mxu0
      %v540 = vpop.f32.mrb[0].mxu0
      %v541 = vpop.f32.mrb[0].mxu0
      %542 = vdwg.mxu0
      %v543 = vadd.f32 %v494, %v538
      %544 = vst.msk [vmem:[#allocation4] sm:$0xff] %vm415, %v543
      %545 = vst.msk [vmem:[#allocation2] sm:$0xff] %vm486, %v468
      %v546 = vld [vmem:[%s365] sm:$0xf]
      %v547 = vld [vmem:[%s375] sm:$0xf]
      %v548 = vld [vmem:[%s385] sm:$0xf]
      %v550 = vunpack.c.l.b16 %v546
      %v551 = vpack.c.b16 %v550, %v550
      %552 = vrot.lane.b32.xlu0 %v551, 96
      %v553 = vpop.permute.xlu0 %552
      %v555 = vunpack.c.l.b16 %v547
      %v556 = vpack.c.b16 %v555, %v555
      %557 = vrot.lane.b32.xlu0 %v556, 96
      %v558 = vpop.permute.xlu0 %557
      %v560 = vsel %vm415, %v553, 0
      %v563 = vsel %vm415, %v558, 0
      %565 = vmatprep.subr.bf16.mxu0 0
      %566 = vmatpush1.bf16.xpose.msra.mxu0 %v563
      %567 = vmatprep.subr.bf16.mxu0 0
      %568 = vmatpush1.bf16.xpose.msra.mxu0 0
      %569 = vmatprep.subr.bf16.mxu0 0
      %570 = vmatpush1.bf16.xpose.msra.mxu0 0
      %571 = vmatprep.subr.bf16.mxu0 0
      %572 = vmatpush1.bf16.xpose.msra.mxu0 0
      %573 = vmatprep.subr.bf16.mxu0 0
      %574 = vmatpush1.bf16.xpose.msra.mxu0 0
      %575 = vmatprep.subr.bf16.mxu0 0
      %576 = vmatpush1.bf16.xpose.msra.mxu0 0
      %577 = vmatprep.subr.bf16.mxu0 0
      %578 = vmatpush1.bf16.xpose.msra.mxu0 0
      %579 = vmatprep.subr.bf16.mxu0 0
      %580 = vmatpush1.bf16.xpose.msra.mxu0 0
      %581 = vmatprep.subr.bf16.mxu0 0
      %582 = vmatpush1.bf16.xpose.msra.mxu0 0
      %583 = vmatprep.subr.bf16.mxu0 0
      %584 = vmatpush1.bf16.xpose.msra.mxu0 0
      %585 = vmatprep.subr.bf16.mxu0 0
      %586 = vmatpush1.bf16.xpose.msra.mxu0 0
      %587 = vmatprep.subr.bf16.mxu0 0
      %588 = vmatpush1.bf16.xpose.msra.mxu0 0
      %589 = vmatprep.subr.bf16.mxu0 0
      %590 = vmatpush1.bf16.xpose.msra.mxu0 0
      %591 = vmatprep.subr.bf16.mxu0 0
      %592 = vmatpush1.bf16.xpose.msra.mxu0 0
      %593 = vmatprep.subr.bf16.mxu0 0
      %594 = vmatpush1.bf16.xpose.msra.mxu0 0
      %595 = vmatprep.subr.bf16.mxu0 0
      %596 = vmatpush1.bf16.xpose.msra.mxu0 0
      %597 = vmatprep.mubr.bf16.mxu0 0
      %598 = vmatmul.mubr.bf16.gmra.mrb[0].mxu0 %v560
      %v599 = vpop.f32.mrb[0].mxu0
      %v600 = vadd.f32 0.0, %v599
      %v601 = vpop.f32.mrb[0].mxu0
      %v602 = vpop.f32.mrb[0].mxu0
      %v603 = vpop.f32.mrb[0].mxu0
      %604 = vdwg.mxu0
      %v605 = vmul.f32 %v600, 0.17677669
      %s606 = scalar_lea.vmem [#allocation2], 8
      %v607 = vld [vmem:[%s606] sm:$0xff]
      %v608 = vsel %vm464, %v605, -inf
      %609 = vmax.xlane.f32.xlu0 %v608
      %v610 = vpop.xlane.xlu0 %609
      %v611 = vmax.f32 %v607, %v610
      %v612 = vsub.f32 %v607, %v611
      %v613 = vmul.f32 %v612, 1.442695
      %v614 = vpow.pop %v613
      %616 = vset.pattern.permute.xlu0 0
      %617 = vperm.xlu0 %616, %v611
      %v618 = vpop.permute.xlu0 %617
      %v620 = vsub.f32 %v605, %v618
      %v621 = vmul.f32 %v620, 1.442695
      %v622 = vpow.pop %v621
      %s623 = scalar_lea.vmem [#allocation3], 8
      %v624 = vld [vmem:[%s623] sm:$0xff]
      %v625 = vmul.f32 %v614, %v624
      %v626 = vsel %vm464, %v622, 0.0
      %627 = vadd.xlane.f32.xlu0 %v626
      %v628 = vpop.xlane.xlu0 %627
      %v629 = vadd.f32 %v625, %v628
      %630 = vst.msk [vmem:[%s623] sm:$0xff] %vm486, %v629
      %s631 = scalar_lea.vmem [#allocation4], 8
      %v632 = vld [vmem:[%s631] sm:$0xff]
      %634 = vset.pattern.permute.xlu0 0
      %635 = vperm.xlu0 %634, %v614
      %v636 = vpop.permute.xlu0 %635
      %v638 = vmul.f32 %v636, %v632
      %v639 = vpack.c.bf16 %v622, %v622
      %v641 = vunpack.c.l.b16 %v548
      %v642 = vpack.c.b16 %v641, %v641
      %643 = vrot.lane.b32.xlu0 %v642, 96
      %v644 = vpop.permute.xlu0 %643
      %v646 = vsel %vm464, %v639, 0
      %v649 = vsel %vm499, %v644, 0
      %651 = vmatprep.subr.bf16.mxu0 0
      %652 = vmatpush1.bf16.msra.mxu0 %v649
      %653 = vmatprep.subr.bf16.mxu0 0
      %654 = vmatpush1.bf16.msra.mxu0 0
      %655 = vmatprep.subr.bf16.mxu0 0
      %656 = vmatpush1.bf16.msra.mxu0 0
      %657 = vmatprep.subr.bf16.mxu0 0
      %658 = vmatpush1.bf16.msra.mxu0 0
      %659 = vmatprep.subr.bf16.mxu0 0
      %660 = vmatpush1.bf16.msra.mxu0 0
      %661 = vmatprep.subr.bf16.mxu0 0
      %662 = vmatpush1.bf16.msra.mxu0 0
      %663 = vmatprep.subr.bf16.mxu0 0
      %664 = vmatpush1.bf16.msra.mxu0 0
      %665 = vmatprep.subr.bf16.mxu0 0
      %666 = vmatpush1.bf16.msra.mxu0 0
      %667 = vmatprep.subr.bf16.mxu0 0
      %668 = vmatpush1.bf16.msra.mxu0 0
      %669 = vmatprep.subr.bf16.mxu0 0
      %670 = vmatpush1.bf16.msra.mxu0 0
      %671 = vmatprep.subr.bf16.mxu0 0
      %672 = vmatpush1.bf16.msra.mxu0 0
      %673 = vmatprep.subr.bf16.mxu0 0
      %674 = vmatpush1.bf16.msra.mxu0 0
      %675 = vmatprep.subr.bf16.mxu0 0
      %676 = vmatpush1.bf16.msra.mxu0 0
      %677 = vmatprep.subr.bf16.mxu0 0
      %678 = vmatpush1.bf16.msra.mxu0 0
      %679 = vmatprep.subr.bf16.mxu0 0
      %680 = vmatpush1.bf16.msra.mxu0 0
      %681 = vmatprep.subr.bf16.mxu0 0
      %682 = vmatpush1.bf16.msra.mxu0 0
      %683 = vmatprep.mubr.bf16.mxu0 0
      %684 = vmatmul.mubr.bf16.gmra.mrb[0].mxu0 %v646
      %v685 = vpop.f32.mrb[0].mxu0
      %v686 = vadd.f32 0.0, %v685
      %v687 = vpop.f32.mrb[0].mxu0
      %v688 = vpop.f32.mrb[0].mxu0
      %v689 = vpop.f32.mrb[0].mxu0
      %690 = vdwg.mxu0
      %v691 = vadd.f32 %v638, %v686
      %692 = vst.msk [vmem:[%s631] sm:$0xff] %vm415, %v691
      %693 = vst.msk [vmem:[%s606] sm:$0xff] %vm486, %v611
      %v694 = vld [vmem:[%s365] sm:$0xf]
      %v695 = vld [vmem:[%s375] sm:$0xf]
      %v696 = vld [vmem:[%s385] sm:$0xf]
      %v698 = vunpack.c.l.b16 %v694
      %v699 = vpack.c.b16 %v698, %v698
      %700 = vrot.lane.b32.xlu0 %v699, 64
      %v701 = vpop.permute.xlu0 %700
      %v703 = vunpack.c.l.b16 %v695
      %v704 = vpack.c.b16 %v703, %v703
      %705 = vrot.lane.b32.xlu0 %v704, 64
      %v706 = vpop.permute.xlu0 %705
      %v708 = vsel %vm415, %v701, 0
      %v711 = vsel %vm415, %v706, 0
      %713 = vmatprep.subr.bf16.mxu0 0
      %714 = vmatpush1.bf16.xpose.msra.mxu0 %v711
      %715 = vmatprep.subr.bf16.mxu0 0
      %716 = vmatpush1.bf16.xpose.msra.mxu0 0
      %717 = vmatprep.subr.bf16.mxu0 0
      %718 = vmatpush1.bf16.xpose.msra.mxu0 0
      %719 = vmatprep.subr.bf16.mxu0 0
      %720 = vmatpush1.bf16.xpose.msra.mxu0 0
      %721 = vmatprep.subr.bf16.mxu0 0
      %722 = vmatpush1.bf16.xpose.msra.mxu0 0
      %723 = vmatprep.subr.bf16.mxu0 0
      %724 = vmatpush1.bf16.xpose.msra.mxu0 0
      %725 = vmatprep.subr.bf16.mxu0 0
      %726 = vmatpush1.bf16.xpose.msra.mxu0 0
      %727 = vmatprep.subr.bf16.mxu0 0
      %728 = vmatpush1.bf16.xpose.msra.mxu0 0
      %729 = vmatprep.subr.bf16.mxu0 0
      %730 = vmatpush1.bf16.xpose.msra.mxu0 0
      %731 = vmatprep.subr.bf16.mxu0 0
      %732 = vmatpush1.bf16.xpose.msra.mxu0 0
      %733 = vmatprep.subr.bf16.mxu0 0
      %734 = vmatpush1.bf16.xpose.msra.mxu0 0
      %735 = vmatprep.subr.bf16.mxu0 0
      %736 = vmatpush1.bf16.xpose.msra.mxu0 0
      %737 = vmatprep.subr.bf16.mxu0 0
      %738 = vmatpush1.bf16.xpose.msra.mxu0 0
      %739 = vmatprep.subr.bf16.mxu0 0
      %740 = vmatpush1.bf16.xpose.msra.mxu0 0
      %741 = vmatprep.subr.bf16.mxu0 0
      %742 = vmatpush1.bf16.xpose.msra.mxu0 0
      %743 = vmatprep.subr.bf16.mxu0 0
      %744 = vmatpush1.bf16.xpose.msra.mxu0 0
      %745 = vmatprep.mubr.bf16.mxu0 0
      %746 = vmatmul.mubr.bf16.gmra.mrb[0].mxu0 %v708
      %v747 = vpop.f32.mrb[0].mxu0
      %v748 = vadd.f32 0.0, %v747
      %v749 = vpop.f32.mrb[0].mxu0
      %v750 = vpop.f32.mrb[0].mxu0
      %v751 = vpop.f32.mrb[0].mxu0
      %752 = vdwg.mxu0
      %v753 = vmul.f32 %v748, 0.17677669
      %s754 = scalar_lea.vmem [#allocation2], 16
      %v755 = vld [vmem:[%s754] sm:$0xff]
      %v756 = vsel %vm464, %v753, -inf
      %757 = vmax.xlane.f32.xlu0 %v756
      %v758 = vpop.xlane.xlu0 %757
      %v759 = vmax.f32 %v755, %v758
      %v760 = vsub.f32 %v755, %v759
      %v761 = vmul.f32 %v760, 1.442695
      %v762 = vpow.pop %v761
      %764 = vset.pattern.permute.xlu0 0
      %765 = vperm.xlu0 %764, %v759
      %v766 = vpop.permute.xlu0 %765
      %v768 = vsub.f32 %v753, %v766
      %v769 = vmul.f32 %v768, 1.442695
      %v770 = vpow.pop %v769
      %s771 = scalar_lea.vmem [#allocation3], 16
      %v772 = vld [vmem:[%s771] sm:$0xff]
      %v773 = vmul.f32 %v762, %v772
      %v774 = vsel %vm464, %v770, 0.0
      %775 = vadd.xlane.f32.xlu0 %v774
      %v776 = vpop.xlane.xlu0 %775
      %v777 = vadd.f32 %v773, %v776
      %778 = vst.msk [vmem:[%s771] sm:$0xff] %vm486, %v777
      %s779 = scalar_lea.vmem [#allocation4], 16
      %v780 = vld [vmem:[%s779] sm:$0xff]
      %782 = vset.pattern.permute.xlu0 0
      %783 = vperm.xlu0 %782, %v762
      %v784 = vpop.permute.xlu0 %783
      %v786 = vmul.f32 %v784, %v780
      %v787 = vpack.c.bf16 %v770, %v770
      %v789 = vunpack.c.l.b16 %v696
      %v790 = vpack.c.b16 %v789, %v789
      %791 = vrot.lane.b32.xlu0 %v790, 64
      %v792 = vpop.permute.xlu0 %791
      %v794 = vsel %vm464, %v787, 0
      %v797 = vsel %vm499, %v792, 0
      %799 = vmatprep.subr.bf16.mxu0 0
      %800 = vmatpush1.bf16.msra.mxu0 %v797
      %801 = vmatprep.subr.bf16.mxu0 0
      %802 = vmatpush1.bf16.msra.mxu0 0
      %803 = vmatprep.subr.bf16.mxu0 0
      %804 = vmatpush1.bf16.msra.mxu0 0
      %805 = vmatprep.subr.bf16.mxu0 0
      %806 = vmatpush1.bf16.msra.mxu0 0
      %807 = vmatprep.subr.bf16.mxu0 0
      %808 = vmatpush1.bf16.msra.mxu0 0
      %809 = vmatprep.subr.bf16.mxu0 0
      %810 = vmatpush1.bf16.msra.mxu0 0
      %811 = vmatprep.subr.bf16.mxu0 0
      %812 = vmatpush1.bf16.msra.mxu0 0
      %813 = vmatprep.subr.bf16.mxu0 0
      %814 = vmatpush1.bf16.msra.mxu0 0
      %815 = vmatprep.subr.bf16.mxu0 0
      %816 = vmatpush1.bf16.msra.mxu0 0
      %817 = vmatprep.subr.bf16.mxu0 0
      %818 = vmatpush1.bf16.msra.mxu0 0
      %819 = vmatprep.subr.bf16.mxu0 0
      %820 = vmatpush1.bf16.msra.mxu0 0
      %821 = vmatprep.subr.bf16.mxu0 0
      %822 = vmatpush1.bf16.msra.mxu0 0
      %823 = vmatprep.subr.bf16.mxu0 0
      %824 = vmatpush1.bf16.msra.mxu0 0
      %825 = vmatprep.subr.bf16.mxu0 0
      %826 = vmatpush1.bf16.msra.mxu0 0
      %827 = vmatprep.subr.bf16.mxu0 0
      %828 = vmatpush1.bf16.msra.mxu0 0
      %829 = vmatprep.subr.bf16.mxu0 0
      %830 = vmatpush1.bf16.msra.mxu0 0
      %831 = vmatprep.mubr.bf16.mxu0 0
      %832 = vmatmul.mubr.bf16.gmra.mrb[0].mxu0 %v794
      %v833 = vpop.f32.mrb[0].mxu0
      %v834 = vadd.f32 0.0, %v833
      %v835 = vpop.f32.mrb[0].mxu0
      %v836 = vpop.f32.mrb[0].mxu0
      %v837 = vpop.f32.mrb[0].mxu0
      %838 = vdwg.mxu0
      %v839 = vadd.f32 %v786, %v834
      %840 = vst.msk [vmem:[%s779] sm:$0xff] %vm415, %v839
      %841 = vst.msk [vmem:[%s754] sm:$0xff] %vm486, %v759
      %v842 = vld [vmem:[%s365] sm:$0xf]
      %v843 = vld [vmem:[%s375] sm:$0xf]
      %v844 = vld [vmem:[%s385] sm:$0xf]
      %v846 = vunpack.c.l.b16 %v842
      %v847 = vpack.c.b16 %v846, %v846
      %848 = vrot.lane.b32.xlu0 %v847, 32
      %v849 = vpop.permute.xlu0 %848
      %v851 = vunpack.c.l.b16 %v843
      %v852 = vpack.c.b16 %v851, %v851
      %853 = vrot.lane.b32.xlu0 %v852, 32
      %v854 = vpop.permute.xlu0 %853
      %v856 = vsel %vm415, %v849, 0
      %v859 = vsel %vm415, %v854, 0
      %861 = vmatprep.subr.bf16.mxu0 0
      %862 = vmatpush1.bf16.xpose.msra.mxu0 %v859
      %863 = vmatprep.subr.bf16.mxu0 0
      %864 = vmatpush1.bf16.xpose.msra.mxu0 0
      %865 = vmatprep.subr.bf16.mxu0 0
      %866 = vmatpush1.bf16.xpose.msra.mxu0 0
      %867 = vmatprep.subr.bf16.mxu0 0
      %868 = vmatpush1.bf16.xpose.msra.mxu0 0
      %869 = vmatprep.subr.bf16.mxu0 0
      %870 = vmatpush1.bf16.xpose.msra.mxu0 0
      %871 = vmatprep.subr.bf16.mxu0 0
      %872 = vmatpush1.bf16.xpose.msra.mxu0 0
      %873 = vmatprep.subr.bf16.mxu0 0
      %874 = vmatpush1.bf16.xpose.msra.mxu0 0
      %875 = vmatprep.subr.bf16.mxu0 0
      %876 = vmatpush1.bf16.xpose.msra.mxu0 0
      %877 = vmatprep.subr.bf16.mxu0 0
      %878 = vmatpush1.bf16.xpose.msra.mxu0 0
      %879 = vmatprep.subr.bf16.mxu0 0
      %880 = vmatpush1.bf16.xpose.msra.mxu0 0
      %881 = vmatprep.subr.bf16.mxu0 0
      %882 = vmatpush1.bf16.xpose.msra.mxu0 0
      %883 = vmatprep.subr.bf16.mxu0 0
      %884 = vmatpush1.bf16.xpose.msra.mxu0 0
      %885 = vmatprep.subr.bf16.mxu0 0
      %886 = vmatpush1.bf16.xpose.msra.mxu0 0
      %887 = vmatprep.subr.bf16.mxu0 0
      %888 = vmatpush1.bf16.xpose.msra.mxu0 0
      %889 = vmatprep.subr.bf16.mxu0 0
      %890 = vmatpush1.bf16.xpose.msra.mxu0 0
      %891 = vmatprep.subr.bf16.mxu0 0
      %892 = vmatpush1.bf16.xpose.msra.mxu0 0
      %893 = vmatprep.mubr.bf16.mxu0 0
      %894 = vmatmul.mubr.bf16.gmra.mrb[0].mxu0 %v856
      %v895 = vpop.f32.mrb[0].mxu0
      %v896 = vadd.f32 0.0, %v895
      %v897 = vpop.f32.mrb[0].mxu0
      %v898 = vpop.f32.mrb[0].mxu0
      %v899 = vpop.f32.mrb[0].mxu0
      %900 = vdwg.mxu0
      %v901 = vmul.f32 %v896, 0.17677669
      %s902 = scalar_lea.vmem [#allocation2], 24
      %v903 = vld [vmem:[%s902] sm:$0xff]
      %v904 = vsel %vm464, %v901, -inf
      %905 = vmax.xlane.f32.xlu0 %v904
      %v906 = vpop.xlane.xlu0 %905
      %v907 = vmax.f32 %v903, %v906
      %v908 = vsub.f32 %v903, %v907
      %v909 = vmul.f32 %v908, 1.442695
      %v910 = vpow.pop %v909
      %912 = vset.pattern.permute.xlu0 0
      %913 = vperm.xlu0 %912, %v907
      %v914 = vpop.permute.xlu0 %913
      %v916 = vsub.f32 %v901, %v914
      %v917 = vmul.f32 %v916, 1.442695
      %v918 = vpow.pop %v917
      %s919 = scalar_lea.vmem [#allocation3], 24
      %v920 = vld [vmem:[%s919] sm:$0xff]
      %v921 = vmul.f32 %v910, %v920
      %v922 = vsel %vm464, %v918, 0.0
      %923 = vadd.xlane.f32.xlu0 %v922
      %v924 = vpop.xlane.xlu0 %923
      %v925 = vadd.f32 %v921, %v924
      %926 = vst.msk [vmem:[%s919] sm:$0xff] %vm486, %v925
      %s927 = scalar_lea.vmem [#allocation4], 24
      %v928 = vld [vmem:[%s927] sm:$0xff]
      %930 = vset.pattern.permute.xlu0 0
      %931 = vperm.xlu0 %930, %v910
      %v932 = vpop.permute.xlu0 %931
      %v934 = vmul.f32 %v932, %v928
      %v935 = vpack.c.bf16 %v918, %v918
      %v937 = vunpack.c.l.b16 %v844
      %v938 = vpack.c.b16 %v937, %v937
      %939 = vrot.lane.b32.xlu0 %v938, 32
      %v940 = vpop.permute.xlu0 %939
      %v942 = vsel %vm464, %v935, 0
      %v945 = vsel %vm499, %v940, 0
      %947 = vmatprep.subr.bf16.mxu0 0
      %948 = vmatpush1.bf16.msra.mxu0 %v945
      %949 = vmatprep.subr.bf16.mxu0 0
      %950 = vmatpush1.bf16.msra.mxu0 0
      %951 = vmatprep.subr.bf16.mxu0 0
      %952 = vmatpush1.bf16.msra.mxu0 0
      %953 = vmatprep.subr.bf16.mxu0 0
      %954 = vmatpush1.bf16.msra.mxu0 0
      %955 = vmatprep.subr.bf16.mxu0 0
      %956 = vmatpush1.bf16.msra.mxu0 0
      %957 = vmatprep.subr.bf16.mxu0 0
      %958 = vmatpush1.bf16.msra.mxu0 0
      %959 = vmatprep.subr.bf16.mxu0 0
      %960 = vmatpush1.bf16.msra.mxu0 0
      %961 = vmatprep.subr.bf16.mxu0 0
      %962 = vmatpush1.bf16.msra.mxu0 0
      %963 = vmatprep.subr.bf16.mxu0 0
      %964 = vmatpush1.bf16.msra.mxu0 0
      %965 = vmatprep.subr.bf16.mxu0 0
      %966 = vmatpush1.bf16.msra.mxu0 0
      %967 = vmatprep.subr.bf16.mxu0 0
      %968 = vmatpush1.bf16.msra.mxu0 0
      %969 = vmatprep.subr.bf16.mxu0 0
      %970 = vmatpush1.bf16.msra.mxu0 0
      %971 = vmatprep.subr.bf16.mxu0 0
      %972 = vmatpush1.bf16.msra.mxu0 0
      %973 = vmatprep.subr.bf16.mxu0 0
      %974 = vmatpush1.bf16.msra.mxu0 0
      %975 = vmatprep.subr.bf16.mxu0 0
      %976 = vmatpush1.bf16.msra.mxu0 0
      %977 = vmatprep.subr.bf16.mxu0 0
      %978 = vmatpush1.bf16.msra.mxu0 0
      %979 = vmatprep.mubr.bf16.mxu0 0
      %980 = vmatmul.mubr.bf16.gmra.mrb[0].mxu0 %v942
      %v981 = vpop.f32.mrb[0].mxu0
      %v982 = vadd.f32 0.0, %v981
      %v983 = vpop.f32.mrb[0].mxu0
      %v984 = vpop.f32.mrb[0].mxu0
      %v985 = vpop.f32.mrb[0].mxu0
      %986 = vdwg.mxu0
      %v987 = vadd.f32 %v934, %v982
      %988 = vst.msk [vmem:[%s927] sm:$0xff] %vm415, %v987
      %989 = vst.msk [vmem:[%s902] sm:$0xff] %vm486, %v907
      // Predicated region
      $region49: #{conformer_block.8} parent=43 // pred_check
        %p990 = pneg %p394
      $region50: #{conformer_block.8} parent=43 // pred_check_branch
        %992 = sbr.rel (%p990) target = $region52
      $region51: #{conformer_block.8} parent=43 // pred_region
        %v993 = vld [vmem:[#allocation3] sm:$0xff]
        %v994 = vrcp.pop %v993
        %v995 = vld [vmem:[#allocation4] sm:$0xff]
        %997 = vset.pattern.permute.xlu0 0
        %998 = vperm.xlu0 %997, %v994
        %v999 = vpop.permute.xlu0 %998
        %v1001 = vmul.f32 %v995, %v999
        %1002 = vst.msk [vmem:[#allocation5] sm:$0xff] %vm415, %v1001
        %v1003 = vld [vmem:[%s623] sm:$0xff]
        %v1004 = vrcp.pop %v1003
        %v1005 = vld [vmem:[%s631] sm:$0xff]
        %1007 = vset.pattern.permute.xlu0 0
        %1008 = vperm.xlu0 %1007, %v1004
        %v1009 = vpop.permute.xlu0 %1008
        %v1011 = vmul.f32 %v1005, %v1009
        %1013 = vrot.lane.b32.xlu0 %v1011, 32
        %v1014 = vpop.permute.xlu0 %1013
        %vm1016 = vcmask 523520
        %1017 = vst.msk [vmem:[#allocation5] sm:$0xff] %vm1016, %v1014
        %v1018 = vld [vmem:[%s771] sm:$0xff]
        %v1019 = vrcp.pop %v1018
        %v1020 = vld [vmem:[%s779] sm:$0xff]
        %1022 = vset.pattern.permute.xlu0 0
        %1023 = vperm.xlu0 %1022, %v1019
        %v1024 = vpop.permute.xlu0 %1023
        %v1026 = vmul.f32 %v1020, %v1024
        %1028 = vrot.lane.b32.xlu0 %v1026, 64
        %v1029 = vpop.permute.xlu0 %1028
        %vm1031 = vcmask 785920
        %1032 = vst.msk [vmem:[#allocation5] sm:$0xff] %vm1031, %v1029
        %v1033 = vld [vmem:[%s919] sm:$0xff]
        %v1034 = vrcp.pop %v1033
        %v1035 = vld [vmem:[%s927] sm:$0xff]
        %1037 = vset.pattern.permute.xlu0 0
        %1038 = vperm.xlu0 %1037, %v1034
        %v1039 = vpop.permute.xlu0 %1038
        %v1041 = vmul.f32 %v1035, %v1039
        %1043 = vrot.lane.b32.xlu0 %v1041, 96
        %v1044 = vpop.permute.xlu0 %1043
        %vm1046 = vcmask 1048320
        %1047 = vst.msk [vmem:[#allocation5] sm:$0xff] %vm1046, %v1044
        %v1048 = vld [vmem:[%s356] sm:$0xff]
        %v1049 = vld [vmem:[%s5] sm:$0x1]
        %v1051 = vlaneseq
        %v1052 = vshrl.u32 %v1051, 7
        %v1053 = vsub.s32 0, %v1052
        %v1054 = vrot.slane %v1049, %v1053
        %v1056 = vadd.f32 %v1048, %v1054
        %v1057 = vld [vmem:[#allocation5] sm:$0xff]
        %v1058 = vld [vmem:[%s4] sm:$0xf]
        %v1059 = vld [vmem:[%s4 + $0x4] sm:$0xf]
        %v1060 = vld [vmem:[%s4 + $0x8] sm:$0xf]
        %v1061 = vld [vmem:[%s4 + $0xc] sm:$0xf]
        %v1062 = vld [vmem:[%s4 + $0x10] sm:$0xf]
        %v1063 = vld [vmem:[%s4 + $0x14] sm:$0xf]
        %v1064 = vld [vmem:[%s4 + $0x18] sm:$0xf]
        %v1065 = vld [vmem:[%s4 + $0x1c] sm:$0xf]
        %v1066 = vld [vmem:[%s4 + $0x20] sm:$0xf]
        %v1067 = vld [vmem:[%s4 + $0x24] sm:$0xf]
        %v1068 = vld [vmem:[%s4 + $0x28] sm:$0xf]
        %v1069 = vld [vmem:[%s4 + $0x2c] sm:$0xf]
        %v1070 = vld [vmem:[%s4 + $0x30] sm:$0xf]
        %v1071 = vld [vmem:[%s4 + $0x34] sm:$0xf]
        %v1072 = vld [vmem:[%s4 + $0x38] sm:$0xf]
        %v1073 = vld [vmem:[%s4 + $0x3c] sm:$0xf]
        %v1074 = vpack.c.bf16 %v1057, %v1057
        %v1091 = vunpack.c.l.b16 %v1058
        %v1092 = vunpack.c.l.b16 %v1059
        %v1093 = vunpack.c.l.b16 %v1060
        %v1094 = vunpack.c.l.b16 %v1061
        %v1095 = vunpack.c.l.b16 %v1062
        %v1096 = vunpack.c.l.b16 %v1063
        %v1097 = vunpack.c.l.b16 %v1064
        %v1098 = vunpack.c.l.b16 %v1065
        %v1099 = vunpack.c.l.b16 %v1066
        %v1100 = vunpack.c.l.b16 %v1067
        %v1101 = vunpack.c.l.b16 %v1068
        %v1102 = vunpack.c.l.b16 %v1069
        %v1103 = vunpack.c.l.b16 %v1070
        %v1104 = vunpack.c.l.b16 %v1071
        %v1105 = vunpack.c.l.b16 %v1072
        %v1106 = vunpack.c.l.b16 %v1073
        %v1107 = vpack.c.b16 %v1092, %v1091
        %v1108 = vpack.c.b16 %v1094, %v1093
        %v1109 = vpack.c.b16 %v1096, %v1095
        %v1110 = vpack.c.b16 %v1098, %v1097
        %v1111 = vpack.c.b16 %v1100, %v1099
        %v1112 = vpack.c.b16 %v1102, %v1101
        %v1113 = vpack.c.b16 %v1104, %v1103
        %v1114 = vpack.c.b16 %v1106, %v1105
        %1123 = vmatprep.subr.bf16.mxu0 0
        %1124 = vmatpush1.bf16.msra.mxu0 %v1107
        %1125 = vmatprep.subr.bf16.mxu0 0
        %1126 = vmatpush1.bf16.msra.mxu0 %v1108
        %1127 = vmatprep.subr.bf16.mxu0 0
        %1128 = vmatpush1.bf16.msra.mxu0 %v1109
        %1129 = vmatprep.subr.bf16.mxu0 0
        %1130 = vmatpush1.bf16.msra.mxu0 %v1110
        %1131 = vmatprep.subr.bf16.mxu0 0
        %1132 = vmatpush1.bf16.msra.mxu0 %v1111
        %1133 = vmatprep.subr.bf16.mxu0 0
        %1134 = vmatpush1.bf16.msra.mxu0 %v1112
        %1135 = vmatprep.subr.bf16.mxu0 0
        %1136 = vmatpush1.bf16.msra.mxu0 %v1113
        %1137 = vmatprep.subr.bf16.mxu0 0
        %1138 = vmatpush1.bf16.msra.mxu0 %v1114
        %1139 = vmatprep.subr.bf16.mxu0 0
        %1140 = vmatpush1.bf16.msra.mxu0 0
        %1141 = vmatprep.subr.bf16.mxu0 0
        %1142 = vmatpush1.bf16.msra.mxu0 0
        %1143 = vmatprep.subr.bf16.mxu0 0
        %1144 = vmatpush1.bf16.msra.mxu0 0
        %1145 = vmatprep.subr.bf16.mxu0 0
        %1146 = vmatpush1.bf16.msra.mxu0 0
        %1147 = vmatprep.subr.bf16.mxu0 0
        %1148 = vmatpush1.bf16.msra.mxu0 0
        %1149 = vmatprep.subr.bf16.mxu0 0
        %1150 = vmatpush1.bf16.msra.mxu0 0
        %1151 = vmatprep.subr.bf16.mxu0 0
        %1152 = vmatpush1.bf16.msra.mxu0 0
        %1153 = vmatprep.subr.bf16.mxu0 0
        %1154 = vmatpush1.bf16.msra.mxu0 0
        %1155 = vmatprep.mubr.bf16.mxu0 0
        %1156 = vmatmul.mubr.bf16.gmra.mrb[0].mxu0 %v1074
        %v1157 = vpop.f32.mrb[0].mxu0
        %v1158 = vadd.f32 0.0, %v1157
        %v1159 = vpop.f32.mrb[0].mxu0
        %v1160 = vpop.f32.mrb[0].mxu0
        %v1161 = vpop.f32.mrb[0].mxu0
        %1162 = vdwg.mxu0
        %v1163 = vadd.f32 %v1056, %v1158
        %1164 = vst [vmem:[%s392] sm:$0xff] %v1163
      $region52: #{conformer_block.8} parent=43 // pred_fallthru
        _
      %p1165 = scmp.lt.s32.totalorder %s22, 1
      %s1166 = scalar_select %p1165, %s22, 1
      %p1167 = scmp.lt.s32.totalorder %s23, 0
      %s1168 = scalar_select %p1167, %s23, 0
      %s1169 = sadd.s32 %s1168, %s1166
      %s1170 = smul.addr %s1169, 8
      %s1171 = scalar_lea.vmem %s6, %s1170
      // Predicated region
      $region53: #{conformer_block.8} parent=43 // pred_check
        %p1172 = pneg %p210
      $region54: #{conformer_block.8} parent=43 // pred_check_branch
        %1174 = sbr.rel (%p1172) target = $region56
      $region55: #{conformer_block.8} parent=43 // pred_region
        _
      $region56: #{conformer_block.8} parent=43 // pred_fallthru
        _
    $region44: #{conformer_block.8} parent=5 // pred_fallthru
      _
    %p1175 = scmp.le.s32.totalorder 2, %s12
    // Predicated region
    $region57: #{conformer_block.8} parent=5 // pred_check
      %p1176 = pneg %p1175
    $region58: #{conformer_block.8} parent=5 // pred_check_branch
      %1178 = sbr.rel (%p1176) target = $region60
    $region59: #{conformer_block.8} parent=5 // pred_region
      %s1179 = ssub.s32 %s12, 2
      // Predicated region
      $region61: #{conformer_block.8} parent=59 // pred_check
        %p1180 = pneg %p216
      $region62: #{conformer_block.8} parent=59 // pred_check_branch
        %1182 = sbr.rel (%p1180) target = $region64
      $region63: #{conformer_block.8} parent=59 // pred_region
        %p1183 = scmp.lt.s32.totalorder %s25, 1
        %s1184 = scalar_select %p1183, %s25, 1
        %p1185 = scmp.lt.s32.totalorder %s26, 0
        %s1186 = scalar_select %p1185, %s26, 0
        %s1187 = sadd.s32 %s1186, %s1184
        %s1188 = smul.addr %s1187, 8
        %s1189 = scalar_lea.vmem %s6, %s1188
      $region64: #{conformer_block.8} parent=59 // pred_fallthru
        _
    $region60: #{conformer_block.8} parent=5 // pred_fallthru
      _
  $region6: #{conformer_block.8} parent=0 // loop_footer
    %s16 = sadd.s32 1, %s12
  $region7: #{conformer_block.8} parent=0 // loop_footer_branch
    %11 = sbr.rel target = $region3
  $region8: #{conformer_block.8} parent=0 // loop_exit
    _

// kernel: conformer_block.11
$region0: #{conformer_block.11}
  #allocation0 [shape = 'u32[]', space=smem, size = 0x4, offset = 0x4, fixed_abs, tag = 'smem constant byte address 0x4 - core index']
  #allocation1 [shape = 'u32[144,128]{1,0:T(1,128)}', space=vmem, size = 0x12000, scoped, tag = 'internal scratch']
  %s0 = inlined_call_operand.vmem [shape: f32[16,128], index: 0, kind: input, shape index: {}, may-alias: {0,9}]
  %s1 = inlined_call_operand.vmem [shape: f32[1,128], index: 1, kind: input, shape index: {}]
  %s2 = inlined_call_operand.vmem [shape: f32[1,128], index: 2, kind: input, shape index: {}]
  %s3 = inlined_call_operand.vmem [shape: bf16[128,256], index: 3, kind: input, shape index: {}]
  %s4 = inlined_call_operand.vmem [shape: f32[1,256], index: 4, kind: input, shape index: {}]
  %s5 = inlined_call_operand.vmem [shape: bf16[256,128], index: 5, kind: input, shape index: {}]
  %s6 = inlined_call_operand.vmem [shape: f32[1,128], index: 6, kind: input, shape index: {}]
  %s7 = inlined_call_operand.vmem [shape: f32[1,128], index: 7, kind: input, shape index: {}]
  %s8 = inlined_call_operand.vmem [shape: f32[1,128], index: 8, kind: input, shape index: {}]
  %s9 = inlined_call_operand.vmem [shape: f32[16,128], index: 9, kind: output, shape index: {}, may-alias: {0,9}]
  %s10 = sld [smem:[#allocation0]]
  $region46: #{conformer_block.11} parent=0
    _
  %s12 = ssub.s32 1, %s10
  %s13 = scalar_select 0, %s12, %s10
  // Predicated region
  $region2: #{conformer_block.11} parent=0 // pred_check
    _
  $region3: #{conformer_block.11} parent=0 // pred_check_branch
    %15 = sbr.rel (0) target = $region5
  $region4: #{conformer_block.11} parent=0 // pred_region
    _
  $region5: #{conformer_block.11} parent=0 // pred_fallthru
    _
  // Predicated region
  $region6: #{conformer_block.11} parent=0 // pred_check
    _
  $region7: #{conformer_block.11} parent=0 // pred_check_branch
    %17 = sbr.rel (0) target = $region9
  $region8: #{conformer_block.11} parent=0 // pred_region
    _
  $region9: #{conformer_block.11} parent=0 // pred_fallthru
    _
  // Predicated region
  $region10: #{conformer_block.11} parent=0 // pred_check
    _
  $region11: #{conformer_block.11} parent=0 // pred_check_branch
    %19 = sbr.rel (0) target = $region13
  $region12: #{conformer_block.11} parent=0 // pred_region
    _
  $region13: #{conformer_block.11} parent=0 // pred_fallthru
    _
  // Predicated region
  $region14: #{conformer_block.11} parent=0 // pred_check
    _
  $region15: #{conformer_block.11} parent=0 // pred_check_branch
    %21 = sbr.rel (0) target = $region17
  $region16: #{conformer_block.11} parent=0 // pred_region
    _
  $region17: #{conformer_block.11} parent=0 // pred_fallthru
    _
  // Predicated region
  $region18: #{conformer_block.11} parent=0 // pred_check
    _
  $region19: #{conformer_block.11} parent=0 // pred_check_branch
    %23 = sbr.rel (0) target = $region21
  $region20: #{conformer_block.11} parent=0 // pred_region
    _
  $region21: #{conformer_block.11} parent=0 // pred_fallthru
    _
  // Predicated region
  $region22: #{conformer_block.11} parent=0 // pred_check
    _
  $region23: #{conformer_block.11} parent=0 // pred_check_branch
    %25 = sbr.rel (0) target = $region25
  $region24: #{conformer_block.11} parent=0 // pred_region
    _
  $region25: #{conformer_block.11} parent=0 // pred_fallthru
    _
  // Predicated region
  $region26: #{conformer_block.11} parent=0 // pred_check
    _
  $region27: #{conformer_block.11} parent=0 // pred_check_branch
    %27 = sbr.rel (0) target = $region29
  $region28: #{conformer_block.11} parent=0 // pred_region
    _
  $region29: #{conformer_block.11} parent=0 // pred_fallthru
    _
  // Predicated region
  $region30: #{conformer_block.11} parent=0 // pred_check
    _
  $region31: #{conformer_block.11} parent=0 // pred_check_branch
    %29 = sbr.rel (0) target = $region33
  $region32: #{conformer_block.11} parent=0 // pred_region
    _
  $region33: #{conformer_block.11} parent=0 // pred_fallthru
    _
  // Predicated region
  $region34: #{conformer_block.11} parent=0 // pred_check
    _
  $region35: #{conformer_block.11} parent=0 // pred_check_branch
    %31 = sbr.rel (0) target = $region37
  $region36: #{conformer_block.11} parent=0 // pred_region
    _
  $region37: #{conformer_block.11} parent=0 // pred_fallthru
    _
  %v33 = vld [vmem:[%s0] sm:$0xff]
  %v34 = vld [vmem:[%s0 + $0x8] sm:$0xff]
  %v35 = vld [vmem:[%s1] sm:$0x1]
  %v36 = vld [vmem:[%s2] sm:$0x1]
  %37 = vadd.xlane.f32.xlu0 %v33
  %v38 = vpop.xlane.xlu0 %37
  %39 = vadd.xlane.f32.xlu0 %v34
  %v40 = vpop.xlane.xlu0 %39
  %v41 = vrcp.pop 128.0
  %v42 = vmul.f32 %v38, %v41
  %v43 = vmul.f32 %v40, %v41
  %v44 = vsub.f32 %v33, %v42
  %v45 = vsub.f32 %v34, %v43
  %v46 = vmul.f32 %v44, %v44
  %v47 = vmul.f32 %v45, %v45
  %48 = vadd.xlane.f32.xlu0 %v46
  %v49 = vpop.xlane.xlu0 %48
  %50 = vadd.xlane.f32.xlu0 %v47
  %v51 = vpop.xlane.xlu0 %50
  %v52 = vmul.f32 %v49, %v41
  %v53 = vmul.f32 %v51, %v41
  %v54 = vadd.f32 %v52, 1e-05
  %v55 = vadd.f32 %v53, 1e-05
  %v56 = vrsqrt.pop %v54
  %v57 = vrsqrt.pop %v55
  %v58 = vmul.f32 %v44, %v56
  %v59 = vmul.f32 %v45, %v57
  %v61 = vlaneseq
  %v62 = vshrl.u32 %v61, 7
  %v63 = vsub.s32 0, %v62
  %v64 = vrot.slane %v35, %v63
  %v66 = vmul.f32 %v58, %v64
  %v67 = vmul.f32 %v59, %v64
  %v69 = vlaneseq
  %v70 = vshrl.u32 %v69, 7
  %v71 = vsub.s32 0, %v70
  %v72 = vrot.slane %v36, %v71
  %v74 = vadd.f32 %v66, %v72
  %v75 = vadd.f32 %v67, %v72
  %v76 = vld [vmem:[%s3] sm:$0xff]
  %v77 = vld [vmem:[%s3 + $0x8] sm:$0xff]
  %v78 = vld [vmem:[%s3 + $0x10] sm:$0xff]
  %v79 = vld [vmem:[%s3 + $0x18] sm:$0xff]
  %v80 = vld [vmem:[%s3 + $0x20] sm:$0xff]
  %v81 = vld [vmem:[%s3 + $0x28] sm:$0xff]
  %v82 = vld [vmem:[%s3 + $0x30] sm:$0xff]
  %v83 = vld [vmem:[%s3 + $0x38] sm:$0xff]
  %v84 = vld [vmem:[%s3 + $0x40] sm:$0xff]
  %v85 = vld [vmem:[%s3 + $0x48] sm:$0xff]
  %v86 = vld [vmem:[%s3 + $0x50] sm:$0xff]
  %v87 = vld [vmem:[%s3 + $0x58] sm:$0xff]
  %v88 = vld [vmem:[%s3 + $0x60] sm:$0xff]
  %v89 = vld [vmem:[%s3 + $0x68] sm:$0xff]
  %v90 = vld [vmem:[%s3 + $0x70] sm:$0xff]
  %v91 = vld [vmem:[%s3 + $0x78] sm:$0xff]
  %v92 = vpack.c.bf16 %v75, %v74
  %v93 = vld [vmem:[%s4] sm:$0x3]
  %v95 = vlaneseq
  %v96 = vshrl.u32 %v95, 7
  %v97 = vsub.s32 0, %v96
  %v98 = vrot.slane %v93, %v97
  %v99 = vlaneseq
  %v100 = vshrl.u32 %v99, 7
  %v101 = vsub.s32 1, %v100
  %v102 = vrot.slane %v93, %v101
  %v121 = vunpack.c.l.b16 %v76
  %v122 = vunpack.c.h.b16 %v76
  %v123 = vunpack.c.l.b16 %v77
  %v124 = vunpack.c.h.b16 %v77
  %v125 = vunpack.c.l.b16 %v78
  %v126 = vunpack.c.h.b16 %v78
  %v127 = vunpack.c.l.b16 %v79
  %v128 = vunpack.c.h.b16 %v79
  %v129 = vunpack.c.l.b16 %v80
  %v130 = vunpack.c.h.b16 %v80
  %v131 = vunpack.c.l.b16 %v81
  %v132 = vunpack.c.h.b16 %v81
  %v133 = vunpack.c.l.b16 %v82
  %v134 = vunpack.c.h.b16 %v82
  %v135 = vunpack.c.l.b16 %v83
  %v136 = vunpack.c.h.b16 %v83
  %v137 = vunpack.c.l.b16 %v84
  %v138 = vunpack.c.h.b16 %v84
  %v139 = vunpack.c.l.b16 %v85
  %v140 = vunpack.c.h.b16 %v85
  %v141 = vunpack.c.l.b16 %v86
  %v142 = vunpack.c.h.b16 %v86
  %v143 = vunpack.c.l.b16 %v87
  %v144 = vunpack.c.h.b16 %v87
  %v145 = vunpack.c.l.b16 %v88
  %v146 = vunpack.c.h.b16 %v88
  %v147 = vunpack.c.l.b16 %v89
  %v148 = vunpack.c.h.b16 %v89
  %v149 = vunpack.c.l.b16 %v90
  %v150 = vunpack.c.h.b16 %v90
  %v151 = vunpack.c.l.b16 %v91
  %v152 = vunpack.c.h.b16 %v91
  %v153 = vpack.c.b16 %v123, %v121
  %v154 = vpack.c.b16 %v124, %v122
  %v155 = vpack.c.b16 %v127, %v125
  %v156 = vpack.c.b16 %v128, %v126
  %v157 = vpack.c.b16 %v131, %v129
  %v158 = vpack.c.b16 %v132, %v130
  %v159 = vpack.c.b16 %v135, %v133
  %v160 = vpack.c.b16 %v136, %v134
  %v161 = vpack.c.b16 %v139, %v137
  %v162 = vpack.c.b16 %v140, %v138
  %v163 = vpack.c.b16 %v143, %v141
  %v164 = vpack.c.b16 %v144, %v142
  %v165 = vpack.c.b16 %v147, %v145
  %v166 = vpack.c.b16 %v148, %v146
  %v167 = vpack.c.b16 %v151, %v149
  %v168 = vpack.c.b16 %v152, %v150
  %185 = vmatprep.subr.bf16.mxu0 %v154
  %186 = vmatpush1.bf16.msra.mxu0 %v153
  %187 = vmatprep.subr.bf16.mxu0 %v156
  %188 = vmatpush1.bf16.msra.mxu0 %v155
  %189 = vmatprep.subr.bf16.mxu0 %v158
  %190 = vmatpush1.bf16.msra.mxu0 %v157
  %191 = vmatprep.subr.bf16.mxu0 %v160
  %192 = vmatpush1.bf16.msra.mxu0 %v159
  %193 = vmatprep.subr.bf16.mxu0 %v162
  %194 = vmatpush1.bf16.msra.mxu0 %v161
  %195 = vmatprep.subr.bf16.mxu0 %v164
  %196 = vmatpush1.bf16.msra.mxu0 %v163
  %197 = vmatprep.subr.bf16.mxu0 %v166
  %198 = vmatpush1.bf16.msra.mxu0 %v165
  %199 = vmatprep.subr.bf16.mxu0 %v168
  %200 = vmatpush1.bf16.msra.mxu0 %v167
  %201 = vmatprep.subr.bf16.mxu0 0
  %202 = vmatpush1.bf16.msra.mxu0 0
  %203 = vmatprep.subr.bf16.mxu0 0
  %204 = vmatpush1.bf16.msra.mxu0 0
  %205 = vmatprep.subr.bf16.mxu0 0
  %206 = vmatpush1.bf16.msra.mxu0 0
  %207 = vmatprep.subr.bf16.mxu0 0
  %208 = vmatpush1.bf16.msra.mxu0 0
  %209 = vmatprep.subr.bf16.mxu0 0
  %210 = vmatpush1.bf16.msra.mxu0 0
  %211 = vmatprep.subr.bf16.mxu0 0
  %212 = vmatpush1.bf16.msra.mxu0 0
  %213 = vmatprep.subr.bf16.mxu0 0
  %214 = vmatpush1.bf16.msra.mxu0 0
  %215 = vmatprep.subr.bf16.mxu0 0
  %216 = vmatpush1.bf16.msra.mxu0 0
  %217 = vmatprep.mubr.bf16.mxu0 0
  %218 = vmatmul.mubr.bf16.gmra.mrb[0].mxu0 %v92
  %v219 = vpop.f32.mrb[0].mxu0
  %v220 = vadd.f32 %v98, %v219
  %v221 = vpop.f32.mrb[0].mxu0
  %v222 = vadd.f32 %v102, %v221
  %v223 = vpop.f32.mrb[0].mxu0
  %v224 = vadd.f32 %v98, %v223
  %v225 = vpop.f32.mrb[0].mxu0
  %v226 = vadd.f32 %v102, %v225
  %227 = vdwg.mxu0
  %v228 = vmul.f32 %v220, 0.5
  %v229 = vmul.f32 %v222, 0.5
  %v230 = vmul.f32 %v224, 0.5
  %v231 = vmul.f32 %v226, 0.5
  %v232 = vmul.f32 %v220, 0.70710677
  %v233 = vmul.f32 %v222, 0.70710677
  %v234 = vmul.f32 %v224, 0.70710677
  %v235 = vmul.f32 %v226, 0.70710677
  %v236 = verf.f32.pop %v232
  %v237 = verf.f32.pop %v233
  %v238 = verf.f32.pop %v234
  %v239 = verf.f32.pop %v235
  %v240 = vadd.f32 %v236, 1.0
  %v241 = vadd.f32 %v237, 1.0
  %v242 = vadd.f32 %v238, 1.0
  %v243 = vadd.f32 %v239, 1.0
  %v244 = vmul.f32 %v228, %v240
  %v245 = vmul.f32 %v229, %v241
  %v246 = vmul.f32 %v230, %v242
  %v247 = vmul.f32 %v231, %v243
  %v248 = vld [vmem:[%s5] sm:$0xf]
  %v249 = vld [vmem:[%s5 + $0x4] sm:$0xf]
  %v250 = vld [vmem:[%s5 + $0x8] sm:$0xf]
  %v251 = vld [vmem:[%s5 + $0xc] sm:$0xf]
  %v252 = vld [vmem:[%s5 + $0x10] sm:$0xf]
  %v253 = vld [vmem:[%s5 + $0x14] sm:$0xf]
  %v254 = vld [vmem:[%s5 + $0x18] sm:$0xf]
  %v255 = vld [vmem:[%s5 + $0x1c] sm:$0xf]
  %v256 = vld [vmem:[%s5 + $0x20] sm:$0xf]
  %v257 = vld [vmem:[%s5 + $0x24] sm:$0xf]
  %v258 = vld [vmem:[%s5 + $0x28] sm:$0xf]
  %v259 = vld [vmem:[%s5 + $0x2c] sm:$0xf]
  %v260 = vld [vmem:[%s5 + $0x30] sm:$0xf]
  %v261 = vld [vmem:[%s5 + $0x34] sm:$0xf]
  %v262 = vld [vmem:[%s5 + $0x38] sm:$0xf]
  %v263 = vld [vmem:[%s5 + $0x3c] sm:$0xf]
  %v264 = vld [vmem:[%s5 + $0x40] sm:$0xf]
  %v265 = vld [vmem:[%s5 + $0x44] sm:$0xf]
  %v266 = vld [vmem:[%s5 + $0x48] sm:$0xf]
  %v267 = vld [vmem:[%s5 + $0x4c] sm:$0xf]
  %v268 = vld [vmem:[%s5 + $0x50] sm:$0xf]
  %v269 = vld [vmem:[%s5 + $0x54] sm:$0xf]
  %v270 = vld [vmem:[%s5 + $0x58] sm:$0xf]
  %v271 = vld [vmem:[%s5 + $0x5c] sm:$0xf]
  %v272 = vld [vmem:[%s5 + $0x60] sm:$0xf]
  %v273 = vld [vmem:[%s5 + $0x64] sm:$0xf]
  %v274 = vld [vmem:[%s5 + $0x68] sm:$0xf]
  %v275 = vld [vmem:[%s5 + $0x6c] sm:$0xf]
  %v276 = vld [vmem:[%s5 + $0x70] sm:$0xf]
  %v277 = vld [vmem:[%s5 + $0x74] sm:$0xf]
  %v278 = vld [vmem:[%s5 + $0x78] sm:$0xf]
  %v279 = vld [vmem:[%s5 + $0x7c] sm:$0xf]
  %v280 = vpack.c.bf16 %v246, %v244
  %v281 = vpack.c.bf16 %v247, %v245
  %v282 = vld [vmem:[%s6] sm:$0x1]
  %v284 = vlaneseq
  %v285 = vshrl.u32 %v284, 7
  %v286 = vsub.s32 0, %v285
  %v287 = vrot.slane %v282, %v286
  %v321 = vunpack.c.l.b16 %v248
  %v322 = vunpack.c.l.b16 %v249
  %v323 = vunpack.c.l.b16 %v250
  %v324 = vunpack.c.l.b16 %v251
  %v325 = vunpack.c.l.b16 %v252
  %v326 = vunpack.c.l.b16 %v253
  %v327 = vunpack.c.l.b16 %v254
  %v328 = vunpack.c.l.b16 %v255
  %v329 = vunpack.c.l.b16 %v256
  %v330 = vunpack.c.l.b16 %v257
  %v331 = vunpack.c.l.b16 %v258
  %v332 = vunpack.c.l.b16 %v259
  %v333 = vunpack.c.l.b16 %v260
  %v334 = vunpack.c.l.b16 %v261
  %v335 = vunpack.c.l.b16 %v262
  %v336 = vunpack.c.l.b16 %v263
  %v337 = vunpack.c.l.b16 %v264
  %v338 = vunpack.c.l.b16 %v265
  %v339 = vunpack.c.l.b16 %v266
  %v340 = vunpack.c.l.b16 %v267
  %v341 = vunpack.c.l.b16 %v268
  %v342 = vunpack.c.l.b16 %v269
  %v343 = vunpack.c.l.b16 %v270
  %v344 = vunpack.c.l.b16 %v271
  %v345 = vunpack.c.l.b16 %v272
  %v346 = vunpack.c.l.b16 %v273
  %v347 = vunpack.c.l.b16 %v274
  %v348 = vunpack.c.l.b16 %v275
  %v349 = vunpack.c.l.b16 %v276
  %v350 = vunpack.c.l.b16 %v277
  %v351 = vunpack.c.l.b16 %v278
  %v352 = vunpack.c.l.b16 %v279
  %v353 = vpack.c.b16 %v322, %v321
  %v354 = vpack.c.b16 %v324, %v323
  %v355 = vpack.c.b16 %v326, %v325
  %v356 = vpack.c.b16 %v328, %v327
  %v357 = vpack.c.b16 %v330, %v329
  %v358 = vpack.c.b16 %v332, %v331
  %v359 = vpack.c.b16 %v334, %v333
  %v360 = vpack.c.b16 %v336, %v335
  %v361 = vpack.c.b16 %v338, %v337
  %v362 = vpack.c.b16 %v340, %v339
  %v363 = vpack.c.b16 %v342, %v341
  %v364 = vpack.c.b16 %v344, %v343
  %v365 = vpack.c.b16 %v346, %v345
  %v366 = vpack.c.b16 %v348, %v347
  %v367 = vpack.c.b16 %v350, %v349
  %v368 = vpack.c.b16 %v352, %v351
  %385 = vmatprep.subr.bf16.mxu0 0
  %386 = vmatpush1.bf16.msra.mxu0 %v353
  %387 = vmatprep.subr.bf16.mxu0 0
  %388 = vmatpush1.bf16.msra.mxu0 %v354
  %389 = vmatprep.subr.bf16.mxu0 0
  %390 = vmatpush1.bf16.msra.mxu0 %v355
  %391 = vmatprep.subr.bf16.mxu0 0
  %392 = vmatpush1.bf16.msra.mxu0 %v356
  %393 = vmatprep.subr.bf16.mxu0 0
  %394 = vmatpush1.bf16.msra.mxu0 %v357
  %395 = vmatprep.subr.bf16.mxu0 0
  %396 = vmatpush1.bf16.msra.mxu0 %v358
  %397 = vmatprep.subr.bf16.mxu0 0
  %398 = vmatpush1.bf16.msra.mxu0 %v359
  %399 = vmatprep.subr.bf16.mxu0 0
  %400 = vmatpush1.bf16.msra.mxu0 %v360
  %401 = vmatprep.subr.bf16.mxu0 0
  %402 = vmatpush1.bf16.msra.mxu0 %v361
  %403 = vmatprep.subr.bf16.mxu0 0
  %404 = vmatpush1.bf16.msra.mxu0 %v362
  %405 = vmatprep.subr.bf16.mxu0 0
  %406 = vmatpush1.bf16.msra.mxu0 %v363
  %407 = vmatprep.subr.bf16.mxu0 0
  %408 = vmatpush1.bf16.msra.mxu0 %v364
  %409 = vmatprep.subr.bf16.mxu0 0
  %410 = vmatpush1.bf16.msra.mxu0 %v365
  %411 = vmatprep.subr.bf16.mxu0 0
  %412 = vmatpush1.bf16.msra.mxu0 %v366
  %413 = vmatprep.subr.bf16.mxu0 0
  %414 = vmatpush1.bf16.msra.mxu0 %v367
  %415 = vmatprep.subr.bf16.mxu0 0
  %416 = vmatpush1.bf16.msra.mxu0 %v368
  %417 = vmatprep.mubr.bf16.mxu0 %v281
  %418 = vmatmul.mubr.bf16.gmra.mrb[0].mxu0 %v280
  %v419 = vpop.f32.mrb[0].mxu0
  %v420 = vadd.f32 %v287, %v419
  %v421 = vpop.f32.mrb[0].mxu0
  %v422 = vpop.f32.mrb[0].mxu0
  %v423 = vadd.f32 %v287, %v422
  %v424 = vpop.f32.mrb[0].mxu0
  %425 = vdwg.mxu0
  %v426 = vmul.f32 %v420, 0.5
  %v427 = vmul.f32 %v423, 0.5
  %v428 = vadd.f32 %v426, %v33
  %v429 = vadd.f32 %v427, %v34
  %v430 = vld [vmem:[%s7] sm:$0x1]
  %v431 = vld [vmem:[%s8] sm:$0x1]
  %432 = vadd.xlane.f32.xlu0 %v428
  %v433 = vpop.xlane.xlu0 %432
  %434 = vadd.xlane.f32.xlu0 %v429
  %v435 = vpop.xlane.xlu0 %434
  %v436 = vmul.f32 %v433, %v41
  %v437 = vmul.f32 %v435, %v41
  %v438 = vsub.f32 %v428, %v436
  %v439 = vsub.f32 %v429, %v437
  %v440 = vmul.f32 %v438, %v438
  %v441 = vmul.f32 %v439, %v439
  %442 = vadd.xlane.f32.xlu0 %v440
  %v443 = vpop.xlane.xlu0 %442
  %444 = vadd.xlane.f32.xlu0 %v441
  %v445 = vpop.xlane.xlu0 %444
  %v446 = vmul.f32 %v443, %v41
  %v447 = vmul.f32 %v445, %v41
  %v448 = vadd.f32 %v446, 1e-05
  %v449 = vadd.f32 %v447, 1e-05
  %v450 = vrsqrt.pop %v448
  %v451 = vrsqrt.pop %v449
  %v452 = vmul.f32 %v438, %v450
  %v453 = vmul.f32 %v439, %v451
  %v455 = vlaneseq
  %v456 = vshrl.u32 %v455, 7
  %v457 = vsub.s32 0, %v456
  %v458 = vrot.slane %v430, %v457
  %v460 = vmul.f32 %v452, %v458
  %v461 = vmul.f32 %v453, %v458
  %v463 = vlaneseq
  %v464 = vshrl.u32 %v463, 7
  %v465 = vsub.s32 0, %v464
  %v466 = vrot.slane %v431, %v465
  %v468 = vadd.f32 %v460, %v466
  %v469 = vadd.f32 %v461, %v466
  %470 = vst [vmem:[%s9] sm:$0xff] %v468
  %471 = vst [vmem:[%s9 + $0x8] sm:$0xff] %v469
  // Predicated region
  $region38: #{conformer_block.11} parent=0 // pred_check
    _
  $region39: #{conformer_block.11} parent=0 // pred_check_branch
    %473 = sbr.rel (0) target = $region41
  $region40: #{conformer_block.11} parent=0 // pred_region
    _
  $region41: #{conformer_block.11} parent=0 // pred_fallthru
    _
  // Predicated region
  $region42: #{conformer_block.11} parent=0 // pred_check
    _
  $region43: #{conformer_block.11} parent=0 // pred_check_branch
    %475 = sbr.rel (0) target = $region45
  $region44: #{conformer_block.11} parent=0 // pred_region
    _
  $region45: #{conformer_block.11} parent=0 // pred_fallthru
    _

// kernel: conformer_block.10
$region0: #{conformer_block.10}
  #allocation0 [shape = 'u32[]', space=smem, size = 0x4, offset = 0x4, fixed_abs, tag = 'smem constant byte address 0x4 - core index']
  #allocation1 [shape = 'u32[144,128]{1,0:T(1,128)}', space=vmem, size = 0x12000, scoped, tag = 'internal scratch']
  %s0 = inlined_call_operand.vmem [shape: f32[16,128], index: 0, kind: input, shape index: {}, may-alias: {0,13}]
  %s1 = inlined_call_operand.vmem [shape: f32[1,128], index: 1, kind: input, shape index: {}]
  %s2 = inlined_call_operand.vmem [shape: f32[1,128], index: 2, kind: input, shape index: {}]
  %s3 = inlined_call_operand.vmem [shape: bf16[128,256], index: 3, kind: input, shape index: {}]
  %s4 = inlined_call_operand.vmem [shape: f32[1,256], index: 4, kind: input, shape index: {}]
  %s5 = inlined_call_operand.vmem [shape: f32[1,256], index: 5, kind: input, shape index: {}]
  %s6 = inlined_call_operand.vmem [shape: f32[1,256], index: 6, kind: input, shape index: {}]
  %s7 = inlined_call_operand.vmem [shape: f32[1,256], index: 7, kind: input, shape index: {}]
  %s8 = inlined_call_operand.vmem [shape: f32[1,256], index: 8, kind: input, shape index: {}]
  %s9 = inlined_call_operand.vmem [shape: f32[1,256], index: 9, kind: input, shape index: {}]
  %s10 = inlined_call_operand.vmem [shape: f32[1,256], index: 10, kind: input, shape index: {}]
  %s11 = inlined_call_operand.vmem [shape: bf16[256,128], index: 11, kind: input, shape index: {}]
  %s12 = inlined_call_operand.vmem [shape: f32[1,128], index: 12, kind: input, shape index: {}]
  %s13 = inlined_call_operand.vmem [shape: f32[16,128], index: 13, kind: output, shape index: {}, may-alias: {0,13}]
  %s14 = sld [smem:[#allocation0]]
  $region62: #{conformer_block.10} parent=0
    _
  %s16 = ssub.s32 1, %s14
  %s17 = scalar_select 0, %s16, %s14
  // Predicated region
  $region2: #{conformer_block.10} parent=0 // pred_check
    _
  $region3: #{conformer_block.10} parent=0 // pred_check_branch
    %19 = sbr.rel (0) target = $region5
  $region4: #{conformer_block.10} parent=0 // pred_region
    _
  $region5: #{conformer_block.10} parent=0 // pred_fallthru
    _
  // Predicated region
  $region6: #{conformer_block.10} parent=0 // pred_check
    _
  $region7: #{conformer_block.10} parent=0 // pred_check_branch
    %21 = sbr.rel (0) target = $region9
  $region8: #{conformer_block.10} parent=0 // pred_region
    _
  $region9: #{conformer_block.10} parent=0 // pred_fallthru
    _
  // Predicated region
  $region10: #{conformer_block.10} parent=0 // pred_check
    _
  $region11: #{conformer_block.10} parent=0 // pred_check_branch
    %23 = sbr.rel (0) target = $region13
  $region12: #{conformer_block.10} parent=0 // pred_region
    _
  $region13: #{conformer_block.10} parent=0 // pred_fallthru
    _
  // Predicated region
  $region14: #{conformer_block.10} parent=0 // pred_check
    _
  $region15: #{conformer_block.10} parent=0 // pred_check_branch
    %25 = sbr.rel (0) target = $region17
  $region16: #{conformer_block.10} parent=0 // pred_region
    _
  $region17: #{conformer_block.10} parent=0 // pred_fallthru
    _
  // Predicated region
  $region18: #{conformer_block.10} parent=0 // pred_check
    _
  $region19: #{conformer_block.10} parent=0 // pred_check_branch
    %27 = sbr.rel (0) target = $region21
  $region20: #{conformer_block.10} parent=0 // pred_region
    _
  $region21: #{conformer_block.10} parent=0 // pred_fallthru
    _
  // Predicated region
  $region22: #{conformer_block.10} parent=0 // pred_check
    _
  $region23: #{conformer_block.10} parent=0 // pred_check_branch
    %29 = sbr.rel (0) target = $region25
  $region24: #{conformer_block.10} parent=0 // pred_region
    _
  $region25: #{conformer_block.10} parent=0 // pred_fallthru
    _
  // Predicated region
  $region26: #{conformer_block.10} parent=0 // pred_check
    _
  $region27: #{conformer_block.10} parent=0 // pred_check_branch
    %31 = sbr.rel (0) target = $region29
  $region28: #{conformer_block.10} parent=0 // pred_region
    _
  $region29: #{conformer_block.10} parent=0 // pred_fallthru
    _
  // Predicated region
  $region30: #{conformer_block.10} parent=0 // pred_check
    _
  $region31: #{conformer_block.10} parent=0 // pred_check_branch
    %33 = sbr.rel (0) target = $region33
  $region32: #{conformer_block.10} parent=0 // pred_region
    _
  $region33: #{conformer_block.10} parent=0 // pred_fallthru
    _
  // Predicated region
  $region34: #{conformer_block.10} parent=0 // pred_check
    _
  $region35: #{conformer_block.10} parent=0 // pred_check_branch
    %35 = sbr.rel (0) target = $region37
  $region36: #{conformer_block.10} parent=0 // pred_region
    _
  $region37: #{conformer_block.10} parent=0 // pred_fallthru
    _
  // Predicated region
  $region38: #{conformer_block.10} parent=0 // pred_check
    _
  $region39: #{conformer_block.10} parent=0 // pred_check_branch
    %37 = sbr.rel (0) target = $region41
  $region40: #{conformer_block.10} parent=0 // pred_region
    _
  $region41: #{conformer_block.10} parent=0 // pred_fallthru
    _
  // Predicated region
  $region42: #{conformer_block.10} parent=0 // pred_check
    _
  $region43: #{conformer_block.10} parent=0 // pred_check_branch
    %39 = sbr.rel (0) target = $region45
  $region44: #{conformer_block.10} parent=0 // pred_region
    _
  $region45: #{conformer_block.10} parent=0 // pred_fallthru
    _
  // Predicated region
  $region46: #{conformer_block.10} parent=0 // pred_check
    _
  $region47: #{conformer_block.10} parent=0 // pred_check_branch
    %41 = sbr.rel (0) target = $region49
  $region48: #{conformer_block.10} parent=0 // pred_region
    _
  $region49: #{conformer_block.10} parent=0 // pred_fallthru
    _
  // Predicated region
  $region50: #{conformer_block.10} parent=0 // pred_check
    _
  $region51: #{conformer_block.10} parent=0 // pred_check_branch
    %43 = sbr.rel (0) target = $region53
  $region52: #{conformer_block.10} parent=0 // pred_region
    _
  $region53: #{conformer_block.10} parent=0 // pred_fallthru
    _
  %v45 = vld [vmem:[%s0] sm:$0xff]
  %v46 = vld [vmem:[%s0 + $0x8] sm:$0xff]
  %v47 = vld [vmem:[%s1] sm:$0x1]
  %v48 = vld [vmem:[%s2] sm:$0x1]
  %v49 = vld [vmem:[%s3] sm:$0xff]
  %v50 = vld [vmem:[%s3 + $0x8] sm:$0xff]
  %v51 = vld [vmem:[%s3 + $0x10] sm:$0xff]
  %v52 = vld [vmem:[%s3 + $0x18] sm:$0xff]
  %v53 = vld [vmem:[%s3 + $0x20] sm:$0xff]
  %v54 = vld [vmem:[%s3 + $0x28] sm:$0xff]
  %v55 = vld [vmem:[%s3 + $0x30] sm:$0xff]
  %v56 = vld [vmem:[%s3 + $0x38] sm:$0xff]
  %v57 = vld [vmem:[%s3 + $0x40] sm:$0xff]
  %v58 = vld [vmem:[%s3 + $0x48] sm:$0xff]
  %v59 = vld [vmem:[%s3 + $0x50] sm:$0xff]
  %v60 = vld [vmem:[%s3 + $0x58] sm:$0xff]
  %v61 = vld [vmem:[%s3 + $0x60] sm:$0xff]
  %v62 = vld [vmem:[%s3 + $0x68] sm:$0xff]
  %v63 = vld [vmem:[%s3 + $0x70] sm:$0xff]
  %v64 = vld [vmem:[%s3 + $0x78] sm:$0xff]
  %v65 = vld [vmem:[%s4] sm:$0x3]
  %v66 = vld [vmem:[%s5] sm:$0x3]
  %v67 = vld [vmem:[%s6] sm:$0x3]
  %68 = vadd.xlane.f32.xlu0 %v45
  %v69 = vpop.xlane.xlu0 %68
  %70 = vadd.xlane.f32.xlu0 %v46
  %v71 = vpop.xlane.xlu0 %70
  %v72 = vrcp.pop 128.0
  %v73 = vmul.f32 %v69, %v72
  %v74 = vmul.f32 %v71, %v72
  %v75 = vsub.f32 %v45, %v73
  %v76 = vsub.f32 %v46, %v74
  %v77 = vmul.f32 %v75, %v75
  %v78 = vmul.f32 %v76, %v76
  %79 = vadd.xlane.f32.xlu0 %v77
  %v80 = vpop.xlane.xlu0 %79
  %81 = vadd.xlane.f32.xlu0 %v78
  %v82 = vpop.xlane.xlu0 %81
  %v83 = vmul.f32 %v80, %v72
  %v84 = vmul.f32 %v82, %v72
  %v85 = vadd.f32 %v83, 1e-05
  %v86 = vadd.f32 %v84, 1e-05
  %v87 = vrsqrt.pop %v85
  %v88 = vrsqrt.pop %v86
  %v89 = vmul.f32 %v75, %v87
  %v90 = vmul.f32 %v76, %v88
  %v92 = vlaneseq
  %v93 = vshrl.u32 %v92, 7
  %v94 = vsub.s32 0, %v93
  %v95 = vrot.slane %v47, %v94
  %v97 = vmul.f32 %v89, %v95
  %v98 = vmul.f32 %v90, %v95
  %v100 = vlaneseq
  %v101 = vshrl.u32 %v100, 7
  %v102 = vsub.s32 0, %v101
  %v103 = vrot.slane %v48, %v102
  %v105 = vadd.f32 %v97, %v103
  %v106 = vadd.f32 %v98, %v103
  %v107 = vpack.c.bf16 %v106, %v105
  %v109 = vlaneseq
  %v110 = vshrl.u32 %v109, 7
  %v111 = vsub.s32 0, %v110
  %v112 = vrot.slane %v65, %v111
  %v113 = vlaneseq
  %v114 = vshrl.u32 %v113, 7
  %v115 = vsub.s32 1, %v114
  %v116 = vrot.slane %v65, %v115
  %v135 = vunpack.c.l.b16 %v49
  %v136 = vunpack.c.h.b16 %v49
  %v137 = vunpack.c.l.b16 %v50
  %v138 = vunpack.c.h.b16 %v50
  %v139 = vunpack.c.l.b16 %v51
  %v140 = vunpack.c.h.b16 %v51
  %v141 = vunpack.c.l.b16 %v52
  %v142 = vunpack.c.h.b16 %v52
  %v143 = vunpack.c.l.b16 %v53
  %v144 = vunpack.c.h.b16 %v53
  %v145 = vunpack.c.l.b16 %v54
  %v146 = vunpack.c.h.b16 %v54
  %v147 = vunpack.c.l.b16 %v55
  %v148 = vunpack.c.h.b16 %v55
  %v149 = vunpack.c.l.b16 %v56
  %v150 = vunpack.c.h.b16 %v56
  %v151 = vunpack.c.l.b16 %v57
  %v152 = vunpack.c.h.b16 %v57
  %v153 = vunpack.c.l.b16 %v58
  %v154 = vunpack.c.h.b16 %v58
  %v155 = vunpack.c.l.b16 %v59
  %v156 = vunpack.c.h.b16 %v59
  %v157 = vunpack.c.l.b16 %v60
  %v158 = vunpack.c.h.b16 %v60
  %v159 = vunpack.c.l.b16 %v61
  %v160 = vunpack.c.h.b16 %v61
  %v161 = vunpack.c.l.b16 %v62
  %v162 = vunpack.c.h.b16 %v62
  %v163 = vunpack.c.l.b16 %v63
  %v164 = vunpack.c.h.b16 %v63
  %v165 = vunpack.c.l.b16 %v64
  %v166 = vunpack.c.h.b16 %v64
  %v167 = vpack.c.b16 %v137, %v135
  %v168 = vpack.c.b16 %v138, %v136
  %v169 = vpack.c.b16 %v141, %v139
  %v170 = vpack.c.b16 %v142, %v140
  %v171 = vpack.c.b16 %v145, %v143
  %v172 = vpack.c.b16 %v146, %v144
  %v173 = vpack.c.b16 %v149, %v147
  %v174 = vpack.c.b16 %v150, %v148
  %v175 = vpack.c.b16 %v153, %v151
  %v176 = vpack.c.b16 %v154, %v152
  %v177 = vpack.c.b16 %v157, %v155
  %v178 = vpack.c.b16 %v158, %v156
  %v179 = vpack.c.b16 %v161, %v159
  %v180 = vpack.c.b16 %v162, %v160
  %v181 = vpack.c.b16 %v165, %v163
  %v182 = vpack.c.b16 %v166, %v164
  %199 = vmatprep.subr.bf16.mxu0 %v168
  %200 = vmatpush1.bf16.msra.mxu0 %v167
  %201 = vmatprep.subr.bf16.mxu0 %v170
  %202 = vmatpush1.bf16.msra.mxu0 %v169
  %203 = vmatprep.subr.bf16.mxu0 %v172
  %204 = vmatpush1.bf16.msra.mxu0 %v171
  %205 = vmatprep.subr.bf16.mxu0 %v174
  %206 = vmatpush1.bf16.msra.mxu0 %v173
  %207 = vmatprep.subr.bf16.mxu0 %v176
  %208 = vmatpush1.bf16.msra.mxu0 %v175
  %209 = vmatprep.subr.bf16.mxu0 %v178
  %210 = vmatpush1.bf16.msra.mxu0 %v177
  %211 = vmatprep.subr.bf16.mxu0 %v180
  %212 = vmatpush1.bf16.msra.mxu0 %v179
  %213 = vmatprep.subr.bf16.mxu0 %v182
  %214 = vmatpush1.bf16.msra.mxu0 %v181
  %215 = vmatprep.subr.bf16.mxu0 0
  %216 = vmatpush1.bf16.msra.mxu0 0
  %217 = vmatprep.subr.bf16.mxu0 0
  %218 = vmatpush1.bf16.msra.mxu0 0
  %219 = vmatprep.subr.bf16.mxu0 0
  %220 = vmatpush1.bf16.msra.mxu0 0
  %221 = vmatprep.subr.bf16.mxu0 0
  %222 = vmatpush1.bf16.msra.mxu0 0
  %223 = vmatprep.subr.bf16.mxu0 0
  %224 = vmatpush1.bf16.msra.mxu0 0
  %225 = vmatprep.subr.bf16.mxu0 0
  %226 = vmatpush1.bf16.msra.mxu0 0
  %227 = vmatprep.subr.bf16.mxu0 0
  %228 = vmatpush1.bf16.msra.mxu0 0
  %229 = vmatprep.subr.bf16.mxu0 0
  %230 = vmatpush1.bf16.msra.mxu0 0
  %231 = vmatprep.mubr.bf16.mxu0 0
  %232 = vmatmul.mubr.bf16.gmra.mrb[0].mxu0 %v107
  %v233 = vpop.f32.mrb[0].mxu0
  %v234 = vadd.f32 %v112, %v233
  %v235 = vpop.f32.mrb[0].mxu0
  %v236 = vadd.f32 %v116, %v235
  %v237 = vpop.f32.mrb[0].mxu0
  %v238 = vadd.f32 %v112, %v237
  %v239 = vpop.f32.mrb[0].mxu0
  %v240 = vadd.f32 %v116, %v239
  %241 = vdwg.mxu0
  %v242 = vmul.f32 %v234, 0.5
  %v243 = vmul.f32 %v236, 0.5
  %v244 = vmul.f32 %v238, 0.5
  %v245 = vmul.f32 %v240, 0.5
  %v246 = vmul.f32 %v234, 0.70710677
  %v247 = vmul.f32 %v236, 0.70710677
  %v248 = vmul.f32 %v238, 0.70710677
  %v249 = vmul.f32 %v240, 0.70710677
  %v250 = verf.f32.pop %v246
  %v251 = verf.f32.pop %v247
  %v252 = verf.f32.pop %v248
  %v253 = verf.f32.pop %v249
  %v254 = vadd.f32 %v250, 1.0
  %v255 = vadd.f32 %v251, 1.0
  %v256 = vadd.f32 %v252, 1.0
  %v257 = vadd.f32 %v253, 1.0
  %v258 = vmul.f32 %v242, %v254
  %v259 = vmul.f32 %v243, %v255
  %v260 = vmul.f32 %v244, %v256
  %v261 = vmul.f32 %v245, %v257
  %v263 = vlaneseq
  %v264 = vshrl.u32 %v263, 7
  %v265 = vsub.s32 0, %v264
  %v266 = vrot.slane %v66, %v265
  %v267 = vlaneseq
  %v268 = vshrl.u32 %v267, 7
  %v269 = vsub.s32 1, %v268
  %v270 = vrot.slane %v66, %v269
  %v273 = vmul.f32 %v258, %v266
  %v274 = vmul.f32 %v259, %v270
  %v275 = vmul.f32 %v260, %v266
  %v276 = vmul.f32 %v261, %v270
  %v278 = vlaneseq
  %v279 = vshrl.u32 %v278, 7
  %v280 = vsub.s32 0, %v279
  %v281 = vrot.slane %v67, %v280
  %v282 = vlaneseq
  %v283 = vshrl.u32 %v282, 7
  %v284 = vsub.s32 1, %v283
  %v285 = vrot.slane %v67, %v284
  %v288 = vadd.f32 %v273, %v281
  %v289 = vadd.f32 %v274, %v285
  %v290 = vadd.f32 %v275, %v281
  %v291 = vadd.f32 %v276, %v285
  %v292 = vld [vmem:[%s7] sm:$0x3]
  %v293 = vmul.f32 %v292, 0.0625
  %v294 = vld [vmem:[%s8] sm:$0x3]
  %v295 = vmul.f32 %v294, 0.0625
  %v296 = vmul.f32 %v293, %v293
  %v297 = vsub.f32 %v295, %v296
  %v298 = vmax.f32 %v297, 0.0
  %v300 = vlaneseq
  %v301 = vshrl.u32 %v300, 7
  %v302 = vsub.s32 0, %v301
  %v303 = vrot.slane %v293, %v302
  %v304 = vlaneseq
  %v305 = vshrl.u32 %v304, 7
  %v306 = vsub.s32 1, %v305
  %v307 = vrot.slane %v293, %v306
  %v310 = vsub.f32 %v288, %v303
  %v311 = vsub.f32 %v289, %v307
  %v312 = vsub.f32 %v290, %v303
  %v313 = vsub.f32 %v291, %v307
  %v314 = vadd.f32 %v298, 1e-05
  %v315 = vrsqrt.pop %v314
  %v317 = vlaneseq
  %v318 = vshrl.u32 %v317, 7
  %v319 = vsub.s32 0, %v318
  %v320 = vrot.slane %v315, %v319
  %v321 = vlaneseq
  %v322 = vshrl.u32 %v321, 7
  %v323 = vsub.s32 1, %v322
  %v324 = vrot.slane %v315, %v323
  %v327 = vmul.f32 %v310, %v320
  %v328 = vmul.f32 %v311, %v324
  %v329 = vmul.f32 %v312, %v320
  %v330 = vmul.f32 %v313, %v324
  %v331 = vld [vmem:[%s9] sm:$0x3]
  %v333 = vlaneseq
  %v334 = vshrl.u32 %v333, 7
  %v335 = vsub.s32 0, %v334
  %v336 = vrot.slane %v331, %v335
  %v337 = vlaneseq
  %v338 = vshrl.u32 %v337, 7
  %v339 = vsub.s32 1, %v338
  %v340 = vrot.slane %v331, %v339
  %v343 = vmul.f32 %v327, %v336
  %v344 = vmul.f32 %v328, %v340
  %v345 = vmul.f32 %v329, %v336
  %v346 = vmul.f32 %v330, %v340
  %v347 = vld [vmem:[%s10] sm:$0x3]
  %v349 = vlaneseq
  %v350 = vshrl.u32 %v349, 7
  %v351 = vsub.s32 0, %v350
  %v352 = vrot.slane %v347, %v351
  %v353 = vlaneseq
  %v354 = vshrl.u32 %v353, 7
  %v355 = vsub.s32 1, %v354
  %v356 = vrot.slane %v347, %v355
  %v359 = vadd.f32 %v343, %v352
  %v360 = vadd.f32 %v344, %v356
  %v361 = vadd.f32 %v345, %v352
  %v362 = vadd.f32 %v346, %v356
  %v363 = vmul.f32 %v359, 0.5
  %v364 = vmul.f32 %v360, 0.5
  %v365 = vmul.f32 %v361, 0.5
  %v366 = vmul.f32 %v362, 0.5
  %v367 = vmul.f32 %v359, 0.70710677
  %v368 = vmul.f32 %v360, 0.70710677
  %v369 = vmul.f32 %v361, 0.70710677
  %v370 = vmul.f32 %v362, 0.70710677
  %v371 = verf.f32.pop %v367
  %v372 = verf.f32.pop %v368
  %v373 = verf.f32.pop %v369
  %v374 = verf.f32.pop %v370
  %v375 = vadd.f32 %v371, 1.0
  %v376 = vadd.f32 %v372, 1.0
  %v377 = vadd.f32 %v373, 1.0
  %v378 = vadd.f32 %v374, 1.0
  %v379 = vmul.f32 %v363, %v375
  %v380 = vmul.f32 %v364, %v376
  %v381 = vmul.f32 %v365, %v377
  %v382 = vmul.f32 %v366, %v378
  %v383 = vld [vmem:[%s11] sm:$0xf]
  %v384 = vld [vmem:[%s11 + $0x4] sm:$0xf]
  %v385 = vld [vmem:[%s11 + $0x8] sm:$0xf]
  %v386 = vld [vmem:[%s11 + $0xc] sm:$0xf]
  %v387 = vld [vmem:[%s11 + $0x10] sm:$0xf]
  %v388 = vld [vmem:[%s11 + $0x14] sm:$0xf]
  %v389 = vld [vmem:[%s11 + $0x18] sm:$0xf]
  %v390 = vld [vmem:[%s11 + $0x1c] sm:$0xf]
  %v391 = vld [vmem:[%s11 + $0x20] sm:$0xf]
  %v392 = vld [vmem:[%s11 + $0x24] sm:$0xf]
  %v393 = vld [vmem:[%s11 + $0x28] sm:$0xf]
  %v394 = vld [vmem:[%s11 + $0x2c] sm:$0xf]
  %v395 = vld [vmem:[%s11 + $0x30] sm:$0xf]
  %v396 = vld [vmem:[%s11 + $0x34] sm:$0xf]
  %v397 = vld [vmem:[%s11 + $0x38] sm:$0xf]
  %v398 = vld [vmem:[%s11 + $0x3c] sm:$0xf]
  %v399 = vld [vmem:[%s11 + $0x40] sm:$0xf]
  %v400 = vld [vmem:[%s11 + $0x44] sm:$0xf]
  %v401 = vld [vmem:[%s11 + $0x48] sm:$0xf]
  %v402 = vld [vmem:[%s11 + $0x4c] sm:$0xf]
  %v403 = vld [vmem:[%s11 + $0x50] sm:$0xf]
  %v404 = vld [vmem:[%s11 + $0x54] sm:$0xf]
  %v405 = vld [vmem:[%s11 + $0x58] sm:$0xf]
  %v406 = vld [vmem:[%s11 + $0x5c] sm:$0xf]
  %v407 = vld [vmem:[%s11 + $0x60] sm:$0xf]
  %v408 = vld [vmem:[%s11 + $0x64] sm:$0xf]
  %v409 = vld [vmem:[%s11 + $0x68] sm:$0xf]
  %v410 = vld [vmem:[%s11 + $0x6c] sm:$0xf]
  %v411 = vld [vmem:[%s11 + $0x70] sm:$0xf]
  %v412 = vld [vmem:[%s11 + $0x74] sm:$0xf]
  %v413 = vld [vmem:[%s11 + $0x78] sm:$0xf]
  %v414 = vld [vmem:[%s11 + $0x7c] sm:$0xf]
  %v415 = vpack.c.bf16 %v381, %v379
  %v416 = vpack.c.bf16 %v382, %v380
  %v417 = vld [vmem:[%s12] sm:$0x1]
  %v419 = vlaneseq
  %v420 = vshrl.u32 %v419, 7
  %v421 = vsub.s32 0, %v420
  %v422 = vrot.slane %v417, %v421
  %v456 = vunpack.c.l.b16 %v383
  %v457 = vunpack.c.l.b16 %v384
  %v458 = vunpack.c.l.b16 %v385
  %v459 = vunpack.c.l.b16 %v386
  %v460 = vunpack.c.l.b16 %v387
  %v461 = vunpack.c.l.b16 %v388
  %v462 = vunpack.c.l.b16 %v389
  %v463 = vunpack.c.l.b16 %v390
  %v464 = vunpack.c.l.b16 %v391
  %v465 = vunpack.c.l.b16 %v392
  %v466 = vunpack.c.l.b16 %v393
  %v467 = vunpack.c.l.b16 %v394
  %v468 = vunpack.c.l.b16 %v395
  %v469 = vunpack.c.l.b16 %v396
  %v470 = vunpack.c.l.b16 %v397
  %v471 = vunpack.c.l.b16 %v398
  %v472 = vunpack.c.l.b16 %v399
  %v473 = vunpack.c.l.b16 %v400
  %v474 = vunpack.c.l.b16 %v401
  %v475 = vunpack.c.l.b16 %v402
  %v476 = vunpack.c.l.b16 %v403
  %v477 = vunpack.c.l.b16 %v404
  %v478 = vunpack.c.l.b16 %v405
  %v479 = vunpack.c.l.b16 %v406
  %v480 = vunpack.c.l.b16 %v407
  %v481 = vunpack.c.l.b16 %v408
  %v482 = vunpack.c.l.b16 %v409
  %v483 = vunpack.c.l.b16 %v410
  %v484 = vunpack.c.l.b16 %v411
  %v485 = vunpack.c.l.b16 %v412
  %v486 = vunpack.c.l.b16 %v413
  %v487 = vunpack.c.l.b16 %v414
  %v488 = vpack.c.b16 %v457, %v456
  %v489 = vpack.c.b16 %v459, %v458
  %v490 = vpack.c.b16 %v461, %v460
  %v491 = vpack.c.b16 %v463, %v462
  %v492 = vpack.c.b16 %v465, %v464
  %v493 = vpack.c.b16 %v467, %v466
  %v494 = vpack.c.b16 %v469, %v468
  %v495 = vpack.c.b16 %v471, %v470
  %v496 = vpack.c.b16 %v473, %v472
  %v497 = vpack.c.b16 %v475, %v474
  %v498 = vpack.c.b16 %v477, %v476
  %v499 = vpack.c.b16 %v479, %v478
  %v500 = vpack.c.b16 %v481, %v480
  %v501 = vpack.c.b16 %v483, %v482
  %v502 = vpack.c.b16 %v485, %v484
  %v503 = vpack.c.b16 %v487, %v486
  %520 = vmatprep.subr.bf16.mxu0 0
  %521 = vmatpush1.bf16.msra.mxu0 %v488
  %522 = vmatprep.subr.bf16.mxu0 0
  %523 = vmatpush1.bf16.msra.mxu0 %v489
  %524 = vmatprep.subr.bf16.mxu0 0
  %525 = vmatpush1.bf16.msra.mxu0 %v490
  %526 = vmatprep.subr.bf16.mxu0 0
  %527 = vmatpush1.bf16.msra.mxu0 %v491
  %528 = vmatprep.subr.bf16.mxu0 0
  %529 = vmatpush1.bf16.msra.mxu0 %v492
  %530 = vmatprep.subr.bf16.mxu0 0
  %531 = vmatpush1.bf16.msra.mxu0 %v493
  %532 = vmatprep.subr.bf16.mxu0 0
  %533 = vmatpush1.bf16.msra.mxu0 %v494
  %534 = vmatprep.subr.bf16.mxu0 0
  %535 = vmatpush1.bf16.msra.mxu0 %v495
  %536 = vmatprep.subr.bf16.mxu0 0
  %537 = vmatpush1.bf16.msra.mxu0 %v496
  %538 = vmatprep.subr.bf16.mxu0 0
  %539 = vmatpush1.bf16.msra.mxu0 %v497
  %540 = vmatprep.subr.bf16.mxu0 0
  %541 = vmatpush1.bf16.msra.mxu0 %v498
  %542 = vmatprep.subr.bf16.mxu0 0
  %543 = vmatpush1.bf16.msra.mxu0 %v499
  %544 = vmatprep.subr.bf16.mxu0 0
  %545 = vmatpush1.bf16.msra.mxu0 %v500
  %546 = vmatprep.subr.bf16.mxu0 0
  %547 = vmatpush1.bf16.msra.mxu0 %v501
  %548 = vmatprep.subr.bf16.mxu0 0
  %549 = vmatpush1.bf16.msra.mxu0 %v502
  %550 = vmatprep.subr.bf16.mxu0 0
  %551 = vmatpush1.bf16.msra.mxu0 %v503
  %552 = vmatprep.mubr.bf16.mxu0 %v416
  %553 = vmatmul.mubr.bf16.gmra.mrb[0].mxu0 %v415
  %v554 = vpop.f32.mrb[0].mxu0
  %v555 = vadd.f32 %v422, %v554
  %v556 = vpop.f32.mrb[0].mxu0
  %v557 = vpop.f32.mrb[0].mxu0
  %v558 = vadd.f32 %v422, %v557
  %v559 = vpop.f32.mrb[0].mxu0
  %560 = vdwg.mxu0
  %v561 = vadd.f32 %v555, %v45
  %v562 = vadd.f32 %v558, %v46
  %563 = vst [vmem:[%s13] sm:$0xff] %v561
  %564 = vst [vmem:[%s13 + $0x8] sm:$0xff] %v562
  // Predicated region
  $region54: #{conformer_block.10} parent=0 // pred_check
    _
  $region55: #{conformer_block.10} parent=0 // pred_check_branch
    %566 = sbr.rel (0) target = $region57
  $region56: #{conformer_block.10} parent=0 // pred_region
    _
  $region57: #{conformer_block.10} parent=0 // pred_fallthru
    _
  // Predicated region
  $region58: #{conformer_block.10} parent=0 // pred_check
    _
  $region59: #{conformer_block.10} parent=0 // pred_check_branch
    %568 = sbr.rel (0) target = $region61
  $region60: #{conformer_block.10} parent=0 // pred_region
    _
  $region61: #{conformer_block.10} parent=0 // pred_fallthru
    _

</llo_original>
